<compile_context>
chip_gen: v6e
topology: v6e:2x2x1
jax: 0.10.0
libtpu: 0.0.40
codegen_flags: <defaults>
</compile_context>

<pallas_src>
import math
import functools

import jax
import jax.numpy as jnp
from jax import lax
from jax.experimental import pallas as pl
from jax.experimental.pallas import tpu as pltpu  # noqa: F401  (kept for TPU-specific tuning hooks)

LN_EPS = 1e-5  # torch.nn.LayerNorm default


# ----------------------------- in-kernel helpers -----------------------------

def _layernorm(x, gamma, beta):
    mean = jnp.mean(x, axis=-1, keepdims=True)
    var = jnp.mean((x - mean) ** 2, axis=-1, keepdims=True)
    return (x - mean) * lax.rsqrt(var + LN_EPS) * gamma + beta


def _gelu_tanh(x):
    # tanh-form GELU (transcendental goes to the EUP slot); |diff| vs exact erf ~1e-3.
    c = 0.7978845608028654  # sqrt(2/pi)
    return 0.5 * x * (1.0 + jnp.tanh(c * (x + 0.044715 * x * x * x)))


# ----------------------------- fused encoder kernel --------------------------

def _encoder_kernel(B, N, msc_depth, tf_depth, cross_depth, heads, dim_head,
                    x_ref, wqkv_ref, wo_ref, w1_ref, w2_ref, cwv_ref, cwo_ref,
                    small_ref, out_ref):
    """Single-step kernel: runs BOTH branches (sm, lg) of the full encoder.

    Row layout is token-major: row = token*B + batch, so CLS rows are rows [0, B).
    Big weights are bf16 with leading dims (branch, layer, ...); all small params live
    in one zero-padded f32 slab per branch and are consumed with static row offsets.
    """
    R = B * N
    D = x_ref.shape[-1]
    HD = heads * dim_head
    mlp = w1_ref.shape[-1]
    cvw = cwv_ref.shape[-1]
    inv_scale = 1.0 / math.sqrt(dim_head)
    bf16 = jnp.bfloat16

    # Same-batch (block) attention mask under the token-major layout.
    ri = lax.broadcasted_iota(jnp.int32, (R, R), 0) % B
    ci = lax.broadcasted_iota(jnp.int32, (R, R), 1) % B
    same_batch = ri == ci

    for br in range(2):                       # sm / lg branch (different weights)
        x = x_ref[br].astype(jnp.float32)     # (R, D)
        cursor = [0]

        def srow(width):                      # next small-param row, sliced to width
            r = cursor[0]
            cursor[0] += 1
            return small_ref[br, r:r + 1, :width]

        tl = 0  # flat transformer-layer index
        cl = 0  # flat cross-layer index
        for _ in range(msc_depth):
            # ---------- per-branch Transformer(128, tf_depth, heads, dim_head) ----------
            for _ in range(tf_depth):
                ln1_g = srow(D)
                ln1_b = srow(D)
                bqkv = srow(3 * HD)
                bo = srow(D)
                ln2_g = srow(D)
                ln2_b = srow(D)
                b1 = srow(mlp)
                b2 = srow(D)

                # PreNorm + multi-head self-attention (fused QKV, single wide Wo matmul).
                y = _layernorm(x, ln1_g, ln1_b)
                qkv = jnp.dot(y.astype(bf16), wqkv_ref[br, tl],
                              preferred_element_type=jnp.float32) + bqkv
                heads_out = []
                for h in range(heads):
                    lo = h * dim_head
                    q = qkv[:, lo:lo + dim_head].astype(bf16)
                    k = qkv[:, HD + lo:HD + lo + dim_head].astype(bf16)
                    v = qkv[:, 2 * HD + lo:2 * HD + lo + dim_head].astype(bf16)
                    s = lax.dot_general(q, k, (((1,), (1,)), ((), ())),
                                        preferred_element_type=jnp.float32) * inv_scale
                    s = jnp.where(same_batch, s, -1e30)
                    s = s - jnp.max(s, axis=-1, keepdims=True)
                    e = jnp.exp(s)
                    p = e * pl.reciprocal(jnp.sum(e, axis=-1, keepdims=True), approx=True)
                    heads_out.append(jnp.dot(p.astype(bf16), v,
                                             preferred_element_type=jnp.float32))
                ho = jnp.concatenate(heads_out, axis=-1)          # (R, heads*dim_head)
                att = jnp.dot(ho.astype(bf16), wo_ref[br, tl],    # one K=HD MXU pass
                              preferred_element_type=jnp.float32) + bo
                # Attention-internal residual (+y) + PreNorm outer residual (+x).
                x = y + att + x

                # PreNorm + FeedForward + residual.
                y2 = _layernorm(x, ln2_g, ln2_b)
                h1 = _gelu_tanh(jnp.dot(y2.astype(bf16), w1_ref[br, tl],
                                        preferred_element_type=jnp.float32) + b1)
                x = jnp.dot(h1.astype(bf16), w2_ref[br, tl],
                            preferred_element_type=jnp.float32) + b2 + x
                tl += 1

            # ---------- CrossTransformer: updates only the B CLS rows ----------
            # ProjectInOut drops the context arg -> self-attention over 1 CLS token;
            # softmax over one key == 1, so the block is 2*cls + (cls@Wv + bv)@Wo + bo.
            for _ in range(cross_depth):
                cbv = srow(cvw)
                cbo = srow(D)
                cls_rows = x[:B, :]                                # CLS rows (token 0)
                v = jnp.dot(cls_rows.astype(bf16), cwv_ref[br, cl],
                            preferred_element_type=jnp.float32) + cbv
                o = jnp.dot(v.astype(bf16), cwo_ref[br, cl],
                            preferred_element_type=jnp.float32) + cbo
                x = jnp.concatenate([cls_rows + o + cls_rows, x[B:, :]], axis=0)
                cl += 1

        out_ref[br] = x.astype(out_ref.dtype)


# ----------------------------- wrapper ----------------------------------------

def _pack_branch(params, small_w):
    """Collect big weights per type (stacked over layers) + one padded small-param slab."""
    wqkv, wo, w1, w2, cwv, cwo, rows = [], [], [], [], [], [], []

    def pad_row(v):
        v = v.reshape(1, -1).astype(jnp.float32)
        return jnp.pad(v, ((0, 0), (0, small_w - v.shape[1])))

    for layer in params:
        for t in layer['tf']:
            a = t['attn']
            wqkv.append(a['wqkv'])
            wo.append(a['wo'])
            w1.append(t['w1'])
            w2.append(t['w2'])
            rows += [pad_row(t['ln1_g']), pad_row(t['ln1_b']),
                     pad_row(a['bqkv']), pad_row(a['bo']),
                     pad_row(t['ln2_g']), pad_row(t['ln2_b']),
                     pad_row(t['b1']), pad_row(t['b2'])]
        for c in layer['cross']:
            cwv.append(c['wv'])
            cwo.append(c['wo'])
            rows += [pad_row(c['bv']), pad_row(c['bo'])]
    return (jnp.stack(wqkv), jnp.stack(wo), jnp.stack(w1), jnp.stack(w2),
            jnp.stack(cwv), jnp.stack(cwo), jnp.concatenate(rows, axis=0))


def multiscale_encoder_forward(sm_tokens, lg_tokens, sm_params, lg_params, cfg):
    B, N, D = sm_tokens.shape
    assert lg_tokens.shape == (B, N, D)
    assert N == 2, "reference cat((cls, patch), dim=-1) requires exactly 1 patch token"
    assert D == cfg['dim_head'] == 128, "reference reshape requires dim == dim_head == 128"
    R = B * N

    # Width of the padded small-param slab (max bias/LN width, rounded to a lane tile).
    widths = []
    for layer in sm_params:
        for t in layer['tf']:
            widths += [t['ln1_g'].shape[-1], t['attn']['bqkv'].shape[-1],
                       t['attn']['bo'].shape[-1], t['b1'].shape[-1], t['b2'].shape[-1]]
        for c in layer['cross']:
            widths += [c['bv'].shape[-1], c['bo'].shape[-1]]
    small_w = ((max(widths) + 127) // 128) * 128

    sm_pack = _pack_branch(sm_params, small_w)
    lg_pack = _pack_branch(lg_params, small_w)
    # TODO(synk): if sm/lg hyper-parameters ever differ, fall back to one pallas_call per branch.
    assert all(a.shape == b.shape for a, b in zip(sm_pack, lg_pack)), \
        "fused 2-branch kernel requires identical sm/lg hyper-parameters"

    def stack2(a, b, dtype):
        return jnp.stack([a, b], axis=0).astype(dtype)

    wqkv_all = stack2(sm_pack[0], lg_pack[0], jnp.bfloat16)   # (2, Ltf, D, 3*H*dh)
    wo_all = stack2(sm_pack[1], lg_pack[1], jnp.bfloat16)     # (2, Ltf, H*dh, D)
    w1_all = stack2(sm_pack[2], lg_pack[2], jnp.bfloat16)     # (2, Ltf, D, mlp)
    w2_all = stack2(sm_pack[3], lg_pack[3], jnp.bfloat16)     # (2, Ltf, mlp, D)
    cwv_all = stack2(sm_pack[4], lg_pack[4], jnp.bfloat16)    # (2, Lc, D, H*dh)
    cwo_all = stack2(sm_pack[5], lg_pack[5], jnp.bfloat16)    # (2, Lc, H*dh, D)
    small_all = stack2(sm_pack[6], lg_pack[6], jnp.float32)   # (2, rows, small_w)

    expected_rows = cfg['depth'] * (cfg['tf_depth'] * 8 + cfg['cross_depth'] * 2)
    assert small_all.shape[1] == expected_rows

    # Token-major row layout (row = token*B + batch) so CLS rows are the first B rows.
    x = jnp.stack([sm_tokens, lg_tokens], axis=0)             # (2, B, N, D)
    x = x.transpose(0, 2, 1, 3).reshape(2, N * B, D)          # (2, R, D)

    kernel = functools.partial(_encoder_kernel, B, N, cfg['depth'], cfg['tf_depth'],
                               cfg['cross_depth'], cfg['heads'], cfg['dim_head'])

    # No grid: one kernel step, all operands as full VMEM blocks (~1 MiB at this config).
    out = pl.pallas_call(
        kernel,
        out_shape=jax.ShapeDtypeStruct((2, R, D), sm_tokens.dtype),
    )(x, wqkv_all, wo_all, w1_all, w2_all, cwv_all, cwo_all, small_all)

    out = out.reshape(2, N, B, D).transpose(0, 2, 1, 3)       # back to (2, B, N, D)
    # cat((cls, patch), dim=-1) with one patch token == row-major reshape to (B, 1, N*D).
    sm_out = out[0].reshape(B, 1, N * D)
    lg_out = out[1].reshape(B, 1, N * D)
    return sm_out, lg_out


# ----------------------------- parameter init ---------------------------------

def init_linear(key, din, dout):
    kw, kb = jax.random.split(key)
    bound = 1.0 / math.sqrt(din)            # torch.nn.Linear default init
    w = jax.random.uniform(kw, (din, dout), jnp.float32, -bound, bound)
    b = jax.random.uniform(kb, (1, dout), jnp.float32, -bound, bound)
    return w, b


def init_attention(key, dim, heads, dim_head):
    assert dim == dim_head, "reference reshape requires dim == dim_head"
    k1, k2, k3, k4 = jax.random.split(key, 4)
    wq, bq = init_linear(k1, dim, dim * heads)
    wk, bk = init_linear(k2, dim, dim * heads)
    wv, bv = init_linear(k3, dim, dim * heads)
    wo, bo = init_linear(k4, dim_head * heads, dim)
    return dict(wqkv=jnp.concatenate([wq, wk, wv], axis=1),
                bqkv=jnp.concatenate([bq, bk, bv], axis=1),
                wo=wo, bo=bo)


def init_branch(key, *, dim, msc_depth, tf_depth, heads, dim_head, mlp_dim,
                cross_depth, cross_heads, cross_dim_head):
    layers = []
    for l in range(msc_depth):
        kl = jax.random.fold_in(key, l)
        tf = []
        for t in range(tf_depth):
            kt = jax.random.fold_in(kl, 100 + t)
            k1, k2, k3 = jax.random.split(kt, 3)
            w1, b1 = init_linear(k2, dim, mlp_dim)
            w2, b2 = init_linear(k3, mlp_dim, dim)
            tf.append(dict(
                ln1_g=jnp.ones((1, dim), jnp.float32), ln1_b=jnp.zeros((1, dim), jnp.float32),
                ln2_g=jnp.ones((1, dim), jnp.float32), ln2_b=jnp.zeros((1, dim), jnp.float32),
                attn=init_attention(k1, dim, heads, dim_head),
                w1=w1, b1=b1, w2=w2, b2=b2))
        cross = []
        for c in range(cross_depth):
            kc = jax.random.fold_in(kl, 200 + c)
            kv_, ko_ = jax.random.split(kc)
            wv, bv = init_linear(kv_, dim, dim * cross_heads)               # Attention.wv
            wo, bo = init_linear(ko_, cross_dim_head * cross_heads, dim)    # out_linear
            cross.append(dict(wv=wv, bv=bv, wo=wo, bo=bo))
        layers.append(dict(tf=tf, cross=cross))
    return layers


# ----------------------------- main --------------------------------------------

if __name__ == "__main__":
    # Shapes forced by the reference implementation (see faithfulness notes above).
    B, N, DIM = 2, 2, 128            # N = 1 CLS + 1 patch token
    sm_dim = lg_dim = 128
    depth = 1                        # MultiScaleEncoder depth (reference only type-checks 1)
    sm_enc = dict(depth=1, heads=2, dim_head=128, mlp_dim=256)
    lg_enc = dict(depth=1, heads=2, dim_head=128, mlp_dim=256)
    cross_attn_heads, cross_attn_depth, cross_attn_dim_head = 2, 1, 128

    key = jax.random.PRNGKey(0)
    k_sm, k_lg, kp_sm, kp_lg = jax.random.split(key, 4)
    sm_tokens = jax.random.normal(k_sm, (B, N, DIM), jnp.float32)
    lg_tokens = jax.random.normal(k_lg, (B, N, DIM), jnp.float32)

    sm_params = init_branch(kp_sm, dim=128, msc_depth=depth, tf_depth=sm_enc['depth'],
                            heads=sm_enc['heads'], dim_head=sm_enc['dim_head'],
                            mlp_dim=sm_enc['mlp_dim'], cross_depth=cross_attn_depth,
                            cross_heads=cross_attn_heads, cross_dim_head=cross_attn_dim_head)
    lg_params = init_branch(kp_lg, dim=128, msc_depth=depth, tf_depth=lg_enc['depth'],
                            heads=lg_enc['heads'], dim_head=lg_enc['dim_head'],
                            mlp_dim=lg_enc['mlp_dim'], cross_depth=cross_attn_depth,
                            cross_heads=cross_attn_heads, cross_dim_head=cross_attn_dim_head)

    assert sm_enc == lg_enc, "fused 2-branch kernel requires identical sm/lg encoder params"
    cfg = dict(heads=sm_enc['heads'], dim_head=sm_enc['dim_head'],
               depth=depth, tf_depth=sm_enc['depth'], cross_depth=cross_attn_depth)

    sm_out, lg_out = multiscale_encoder_forward(sm_tokens, lg_tokens, sm_params, lg_params, cfg)
    jax.block_until_ready((sm_out, lg_out))

    assert sm_out.shape == (B, 1, 2 * sm_dim), sm_out.shape
    assert lg_out.shape == (B, 1, 2 * lg_dim), lg_out.shape
    assert bool(jnp.all(jnp.isfinite(sm_out))) and bool(jnp.all(jnp.isfinite(lg_out)))
    print("KERNEL_OK")
</pallas_src>

<mosaic_0001>
module attributes {stable_mosaic.version = 11 : i64} {
  func.func @_encoder_kernel(%arg0: memref<2x4x128xf32, #tpu.memory_space<vmem>>, %arg1: memref<2x1x128x768xbf16, #tpu.memory_space<vmem>>, %arg2: memref<2x1x256x128xbf16, #tpu.memory_space<vmem>>, %arg3: memref<2x1x128x256xbf16, #tpu.memory_space<vmem>>, %arg4: memref<2x1x256x128xbf16, #tpu.memory_space<vmem>>, %arg5: memref<2x1x128x256xbf16, #tpu.memory_space<vmem>>, %arg6: memref<2x1x256x128xbf16, #tpu.memory_space<vmem>>, %arg7: memref<2x10x768xf32, #tpu.memory_space<vmem>>, %arg8: memref<2x4x128xf32, #tpu.memory_space<vmem>>) attributes {dimension_semantics = [], scalar_prefetch = 0 : i64, scratch_operands = 0 : i64, tpu.core_type = #tpu.core_type<tc>} {
    %0 = tpu.iota {dimensions = array<i32: 0>} : vector<4x4xi32>
    %c2_i32 = arith.constant 2 : i32
    %c0_i32 = arith.constant 0 : i32
    %1 = arith.cmpi eq, %c2_i32, %c0_i32 : i32
    %c1_i32 = arith.constant 1 : i32
    %2 = arith.select %1, %c1_i32, %c2_i32 : i32
    %3 = vector.broadcast %2 : i32 to vector<4x4xi32>
    %4 = arith.remsi %0, %3 : vector<4x4xi32>
    %c0_i32_0 = arith.constant 0 : i32
    %5 = vector.broadcast %c0_i32_0 : i32 to vector<4x4xi32>
    %6 = arith.cmpi ne, %4, %5 : vector<4x4xi32>
    %c0_i32_1 = arith.constant 0 : i32
    %7 = vector.broadcast %c0_i32_1 : i32 to vector<4x4xi32>
    %8 = arith.cmpi slt, %4, %7 : vector<4x4xi32>
    %c0_i32_2 = arith.constant 0 : i32
    %9 = arith.cmpi slt, %2, %c0_i32_2 : i32
    %10 = vector.broadcast %9 : i1 to vector<4x4xi1>
    %11 = vector.broadcast %10 : vector<4x4xi1> to vector<4x4xi1>
    %12 = arith.xori %8, %11 : vector<4x4xi1>
    %13 = arith.andi %12, %6 : vector<4x4xi1>
    %14 = vector.broadcast %2 : i32 to vector<4x4xi32>
    %15 = arith.addi %4, %14 : vector<4x4xi32>
    %16 = arith.select %13, %15, %4 : vector<4x4xi1>, vector<4x4xi32>
    %17 = tpu.iota {dimensions = array<i32: 1>} : vector<4x4xi32>
    %c2_i32_3 = arith.constant 2 : i32
    %c0_i32_4 = arith.constant 0 : i32
    %18 = arith.cmpi eq, %c2_i32_3, %c0_i32_4 : i32
    %c1_i32_5 = arith.constant 1 : i32
    %19 = arith.select %18, %c1_i32_5, %c2_i32_3 : i32
    %20 = vector.broadcast %19 : i32 to vector<4x4xi32>
    %21 = arith.remsi %17, %20 : vector<4x4xi32>
    %c0_i32_6 = arith.constant 0 : i32
    %22 = vector.broadcast %c0_i32_6 : i32 to vector<4x4xi32>
    %23 = arith.cmpi ne, %21, %22 : vector<4x4xi32>
    %c0_i32_7 = arith.constant 0 : i32
    %24 = vector.broadcast %c0_i32_7 : i32 to vector<4x4xi32>
    %25 = arith.cmpi slt, %21, %24 : vector<4x4xi32>
    %c0_i32_8 = arith.constant 0 : i32
    %26 = arith.cmpi slt, %19, %c0_i32_8 : i32
    %27 = vector.broadcast %26 : i1 to vector<4x4xi1>
    %28 = vector.broadcast %27 : vector<4x4xi1> to vector<4x4xi1>
    %29 = arith.xori %25, %28 : vector<4x4xi1>
    %30 = arith.andi %29, %23 : vector<4x4xi1>
    %31 = vector.broadcast %19 : i32 to vector<4x4xi32>
    %32 = arith.addi %21, %31 : vector<4x4xi32>
    %33 = arith.select %30, %32, %21 : vector<4x4xi1>, vector<4x4xi32>
    %34 = arith.cmpi eq, %16, %33 : vector<4x4xi32>
    %c0 = arith.constant 0 : index
    %c0_9 = arith.constant 0 : index
    %c0_10 = arith.constant 0 : index
    %35 = vector.load %arg0[%c0, %c0_9, %c0_10] : memref<2x4x128xf32, #tpu.memory_space<vmem>>, vector<1x4x128xf32>
    %36 = vector.shape_cast %35 : vector<1x4x128xf32> to vector<4x128xf32>
    %c0_11 = arith.constant 0 : index
    %c0_12 = arith.constant 0 : index
    %c0_13 = arith.constant 0 : index
    %37 = vector.load %arg7[%c0_11, %c0_12, %c0_13] : memref<2x10x768xf32, #tpu.memory_space<vmem>>, vector<1x1x128xf32>
    %38 = vector.shape_cast %37 : vector<1x1x128xf32> to vector<1x128xf32>
    %c0_14 = arith.constant 0 : index
    %c1 = arith.constant 1 : index
    %c0_15 = arith.constant 0 : index
    %39 = vector.load %arg7[%c0_14, %c1, %c0_15] : memref<2x10x768xf32, #tpu.memory_space<vmem>>, vector<1x1x128xf32>
    %40 = vector.shape_cast %39 : vector<1x1x128xf32> to vector<1x128xf32>
    %c0_16 = arith.constant 0 : index
    %c2 = arith.constant 2 : index
    %c0_17 = arith.constant 0 : index
    %41 = vector.load %arg7[%c0_16, %c2, %c0_17] : memref<2x10x768xf32, #tpu.memory_space<vmem>>, vector<1x1x768xf32>
    %42 = vector.shape_cast %41 : vector<1x1x768xf32> to vector<1x768xf32>
    %c0_18 = arith.constant 0 : index
    %c3 = arith.constant 3 : index
    %c0_19 = arith.constant 0 : index
    %43 = vector.load %arg7[%c0_18, %c3, %c0_19] : memref<2x10x768xf32, #tpu.memory_space<vmem>>, vector<1x1x128xf32>
    %44 = vector.shape_cast %43 : vector<1x1x128xf32> to vector<1x128xf32>
    %c0_20 = arith.constant 0 : index
    %c4 = arith.constant 4 : index
    %c0_21 = arith.constant 0 : index
    %45 = vector.load %arg7[%c0_20, %c4, %c0_21] : memref<2x10x768xf32, #tpu.memory_space<vmem>>, vector<1x1x128xf32>
    %46 = vector.shape_cast %45 : vector<1x1x128xf32> to vector<1x128xf32>
    %c0_22 = arith.constant 0 : index
    %c5 = arith.constant 5 : index
    %c0_23 = arith.constant 0 : index
    %47 = vector.load %arg7[%c0_22, %c5, %c0_23] : memref<2x10x768xf32, #tpu.memory_space<vmem>>, vector<1x1x128xf32>
    %48 = vector.shape_cast %47 : vector<1x1x128xf32> to vector<1x128xf32>
    %c0_24 = arith.constant 0 : index
    %c6 = arith.constant 6 : index
    %c0_25 = arith.constant 0 : index
    %49 = vector.load %arg7[%c0_24, %c6, %c0_25] : memref<2x10x768xf32, #tpu.memory_space<vmem>>, vector<1x1x256xf32>
    %50 = vector.shape_cast %49 : vector<1x1x256xf32> to vector<1x256xf32>
    %c0_26 = arith.constant 0 : index
    %c7 = arith.constant 7 : index
    %c0_27 = arith.constant 0 : index
    %51 = vector.load %arg7[%c0_26, %c7, %c0_27] : memref<2x10x768xf32, #tpu.memory_space<vmem>>, vector<1x1x128xf32>
    %52 = vector.shape_cast %51 : vector<1x1x128xf32> to vector<1x128xf32>
    %cst = arith.constant dense<0.000000e+00> : vector<4xf32>
    %53 = vector.multi_reduction <add>, %36, %cst [1] : vector<4x128xf32> to vector<4xf32>
    %54 = vector.shape_cast %53 : vector<4xf32> to vector<4x1xf32>
    %cst_28 = arith.constant 1.280000e+02 : f32
    %55 = vector.broadcast %cst_28 : f32 to vector<4x1xf32>
    %56 = arith.divf %54, %55 : vector<4x1xf32>
    %57 = vector.broadcast %56 : vector<4x1xf32> to vector<4x128xf32>
    %58 = arith.subf %36, %57 : vector<4x128xf32>
    %59 = arith.mulf %58, %58 : vector<4x128xf32>
    %cst_29 = arith.constant dense<0.000000e+00> : vector<4xf32>
    %60 = vector.multi_reduction <add>, %59, %cst_29 [1] : vector<4x128xf32> to vector<4xf32>
    %61 = vector.shape_cast %60 : vector<4xf32> to vector<4x1xf32>
    %cst_30 = arith.constant 1.280000e+02 : f32
    %62 = vector.broadcast %cst_30 : f32 to vector<4x1xf32>
    %63 = arith.divf %61, %62 : vector<4x1xf32>
    %64 = vector.broadcast %56 : vector<4x1xf32> to vector<4x128xf32>
    %65 = arith.subf %36, %64 : vector<4x128xf32>
    %cst_31 = arith.constant 9.99999974E-6 : f32
    %66 = vector.broadcast %cst_31 : f32 to vector<4x1xf32>
    %67 = arith.addf %63, %66 : vector<4x1xf32>
    %68 = math.rsqrt %67 : vector<4x1xf32>
    %69 = vector.broadcast %68 : vector<4x1xf32> to vector<4x128xf32>
    %70 = arith.mulf %65, %69 : vector<4x128xf32>
    %71 = vector.broadcast %38 : vector<1x128xf32> to vector<4x128xf32>
    %72 = arith.mulf %70, %71 : vector<4x128xf32>
    %73 = vector.broadcast %40 : vector<1x128xf32> to vector<4x128xf32>
    %74 = arith.addf %72, %73 : vector<4x128xf32>
    %75 = arith.truncf %74 : vector<4x128xf32> to vector<4x128xbf16>
    %c0_32 = arith.constant 0 : index
    %c0_33 = arith.constant 0 : index
    %c0_34 = arith.constant 0 : index
    %c0_35 = arith.constant 0 : index
    %76 = vector.load %arg1[%c0_32, %c0_33, %c0_34, %c0_35] : memref<2x1x128x768xbf16, #tpu.memory_space<vmem>>, vector<1x1x128x768xbf16>
    %77 = vector.shape_cast %76 : vector<1x1x128x768xbf16> to vector<128x768xbf16>
    %cst_36 = arith.constant dense<0.000000e+00> : vector<4x768xf32>
    %78 = tpu.matmul %75, %77, %cst_36 {dimension_numbers = #tpu.dot_dimension_numbers<[1], [0], [0], [1], [0, 0, 1, 1], [], []>} : vector<4x128xbf16>, vector<128x768xbf16>, vector<4x768xf32> -> vector<4x768xf32>
    %79 = vector.broadcast %42 : vector<1x768xf32> to vector<4x768xf32>
    %80 = arith.addf %78, %79 : vector<4x768xf32>
    %81 = vector.extract_strided_slice %80 {offsets = [0, 0], sizes = [4, 128], strides = [1, 1]} : vector<4x768xf32> to vector<4x128xf32>
    %82 = arith.truncf %81 : vector<4x128xf32> to vector<4x128xbf16>
    %83 = vector.extract_strided_slice %80 {offsets = [0, 256], sizes = [4, 128], strides = [1, 1]} : vector<4x768xf32> to vector<4x128xf32>
    %84 = arith.truncf %83 : vector<4x128xf32> to vector<4x128xbf16>
    %85 = vector.extract_strided_slice %80 {offsets = [0, 512], sizes = [4, 128], strides = [1, 1]} : vector<4x768xf32> to vector<4x128xf32>
    %86 = arith.truncf %85 : vector<4x128xf32> to vector<4x128xbf16>
    %cst_37 = arith.constant dense<0.000000e+00> : vector<4x4xf32>
    %87 = tpu.matmul %82, %84, %cst_37 {dimension_numbers = #tpu.dot_dimension_numbers<[1], [1], [0], [0], [0, 0, 1, 0], [], []>} : vector<4x128xbf16>, vector<4x128xbf16>, vector<4x4xf32> -> vector<4x4xf32>
    %cst_38 = arith.constant 0.0883883461 : f32
    %88 = vector.broadcast %cst_38 : f32 to vector<4x4xf32>
    %89 = arith.mulf %87, %88 : vector<4x4xf32>
    %cst_39 = arith.constant -1.000000e+30 : f32
    %90 = vector.broadcast %cst_39 : f32 to vector<4x4xf32>
    %91 = arith.select %34, %89, %90 : vector<4x4xi1>, vector<4x4xf32>
    %cst_40 = arith.constant dense<0xFF800000> : vector<4xf32>
    %92 = vector.multi_reduction <maximumf>, %91, %cst_40 [1] : vector<4x4xf32> to vector<4xf32>
    %93 = vector.shape_cast %92 : vector<4xf32> to vector<4x1xf32>
    %94 = vector.broadcast %93 : vector<4x1xf32> to vector<4x4xf32>
    %95 = arith.subf %91, %94 : vector<4x4xf32>
    %96 = math.exp %95 : vector<4x4xf32>
    %cst_41 = arith.constant dense<0.000000e+00> : vector<4xf32>
    %97 = vector.multi_reduction <add>, %96, %cst_41 [1] : vector<4x4xf32> to vector<4xf32>
    %98 = vector.shape_cast %97 : vector<4xf32> to vector<4x1xf32>
    %99 = tpu.reciprocal %98 {approx = true} : vector<4x1xf32> -> vector<4x1xf32>
    %100 = vector.broadcast %99 : vector<4x1xf32> to vector<4x4xf32>
    %101 = arith.mulf %96, %100 : vector<4x4xf32>
    %102 = arith.truncf %101 : vector<4x4xf32> to vector<4x4xbf16>
    %cst_42 = arith.constant dense<0.000000e+00> : vector<4x128xf32>
    %103 = tpu.matmul %102, %86, %cst_42 {dimension_numbers = #tpu.dot_dimension_numbers<[1], [0], [0], [1], [0, 0, 1, 1], [], []>} : vector<4x4xbf16>, vector<4x128xbf16>, vector<4x128xf32> -> vector<4x128xf32>
    %104 = vector.extract_strided_slice %80 {offsets = [0, 128], sizes = [4, 128], strides = [1, 1]} : vector<4x768xf32> to vector<4x128xf32>
    %105 = arith.truncf %104 : vector<4x128xf32> to vector<4x128xbf16>
    %106 = vector.extract_strided_slice %80 {offsets = [0, 384], sizes = [4, 128], strides = [1, 1]} : vector<4x768xf32> to vector<4x128xf32>
    %107 = arith.truncf %106 : vector<4x128xf32> to vector<4x128xbf16>
    %108 = vector.extract_strided_slice %80 {offsets = [0, 640], sizes = [4, 128], strides = [1, 1]} : vector<4x768xf32> to vector<4x128xf32>
    %109 = arith.truncf %108 : vector<4x128xf32> to vector<4x128xbf16>
    %cst_43 = arith.constant dense<0.000000e+00> : vector<4x4xf32>
    %110 = tpu.matmul %105, %107, %cst_43 {dimension_numbers = #tpu.dot_dimension_numbers<[1], [1], [0], [0], [0, 0, 1, 0], [], []>} : vector<4x128xbf16>, vector<4x128xbf16>, vector<4x4xf32> -> vector<4x4xf32>
    %cst_44 = arith.constant 0.0883883461 : f32
    %111 = vector.broadcast %cst_44 : f32 to vector<4x4xf32>
    %112 = arith.mulf %110, %111 : vector<4x4xf32>
    %cst_45 = arith.constant -1.000000e+30 : f32
    %113 = vector.broadcast %cst_45 : f32 to vector<4x4xf32>
    %114 = arith.select %34, %112, %113 : vector<4x4xi1>, vector<4x4xf32>
    %cst_46 = arith.constant dense<0xFF800000> : vector<4xf32>
    %115 = vector.multi_reduction <maximumf>, %114, %cst_46 [1] : vector<4x4xf32> to vector<4xf32>
    %116 = vector.shape_cast %115 : vector<4xf32> to vector<4x1xf32>
    %117 = vector.broadcast %116 : vector<4x1xf32> to vector<4x4xf32>
    %118 = arith.subf %114, %117 : vector<4x4xf32>
    %119 = math.exp %118 : vector<4x4xf32>
    %cst_47 = arith.constant dense<0.000000e+00> : vector<4xf32>
    %120 = vector.multi_reduction <add>, %119, %cst_47 [1] : vector<4x4xf32> to vector<4xf32>
    %121 = vector.shape_cast %120 : vector<4xf32> to vector<4x1xf32>
    %122 = tpu.reciprocal %121 {approx = true} : vector<4x1xf32> -> vector<4x1xf32>
    %123 = vector.broadcast %122 : vector<4x1xf32> to vector<4x4xf32>
    %124 = arith.mulf %119, %123 : vector<4x4xf32>
    %125 = arith.truncf %124 : vector<4x4xf32> to vector<4x4xbf16>
    %cst_48 = arith.constant dense<0.000000e+00> : vector<4x128xf32>
    %126 = tpu.matmul %125, %109, %cst_48 {dimension_numbers = #tpu.dot_dimension_numbers<[1], [0], [0], [1], [0, 0, 1, 1], [], []>} : vector<4x4xbf16>, vector<4x128xbf16>, vector<4x128xf32> -> vector<4x128xf32>
    %127 = tpu.concatenate %103, %126 in 1 : vector<4x128xf32>, vector<4x128xf32> -> vector<4x256xf32>
    %128 = arith.truncf %127 : vector<4x256xf32> to vector<4x256xbf16>
    %c0_49 = arith.constant 0 : index
    %c0_50 = arith.constant 0 : index
    %c0_51 = arith.constant 0 : index
    %c0_52 = arith.constant 0 : index
    %129 = vector.load %arg2[%c0_49, %c0_50, %c0_51, %c0_52] : memref<2x1x256x128xbf16, #tpu.memory_space<vmem>>, vector<1x1x256x128xbf16>
    %130 = vector.shape_cast %129 : vector<1x1x256x128xbf16> to vector<256x128xbf16>
    %cst_53 = arith.constant dense<0.000000e+00> : vector<4x128xf32>
    %131 = tpu.matmul %128, %130, %cst_53 {dimension_numbers = #tpu.dot_dimension_numbers<[1], [0], [0], [1], [0, 0, 1, 1], [], []>} : vector<4x256xbf16>, vector<256x128xbf16>, vector<4x128xf32> -> vector<4x128xf32>
    %132 = vector.broadcast %44 : vector<1x128xf32> to vector<4x128xf32>
    %133 = arith.addf %131, %132 : vector<4x128xf32>
    %134 = arith.addf %74, %133 : vector<4x128xf32>
    %135 = arith.addf %134, %36 : vector<4x128xf32>
    %cst_54 = arith.constant dense<0.000000e+00> : vector<4xf32>
    %136 = vector.multi_reduction <add>, %135, %cst_54 [1] : vector<4x128xf32> to vector<4xf32>
    %137 = vector.shape_cast %136 : vector<4xf32> to vector<4x1xf32>
    %cst_55 = arith.constant 1.280000e+02 : f32
    %138 = vector.broadcast %cst_55 : f32 to vector<4x1xf32>
    %139 = arith.divf %137, %138 : vector<4x1xf32>
    %140 = vector.broadcast %139 : vector<4x1xf32> to vector<4x128xf32>
    %141 = arith.subf %135, %140 : vector<4x128xf32>
    %142 = arith.mulf %141, %141 : vector<4x128xf32>
    %cst_56 = arith.constant dense<0.000000e+00> : vector<4xf32>
    %143 = vector.multi_reduction <add>, %142, %cst_56 [1] : vector<4x128xf32> to vector<4xf32>
    %144 = vector.shape_cast %143 : vector<4xf32> to vector<4x1xf32>
    %cst_57 = arith.constant 1.280000e+02 : f32
    %145 = vector.broadcast %cst_57 : f32 to vector<4x1xf32>
    %146 = arith.divf %144, %145 : vector<4x1xf32>
    %147 = vector.broadcast %139 : vector<4x1xf32> to vector<4x128xf32>
    %148 = arith.subf %135, %147 : vector<4x128xf32>
    %cst_58 = arith.constant 9.99999974E-6 : f32
    %149 = vector.broadcast %cst_58 : f32 to vector<4x1xf32>
    %150 = arith.addf %146, %149 : vector<4x1xf32>
    %151 = math.rsqrt %150 : vector<4x1xf32>
    %152 = vector.broadcast %151 : vector<4x1xf32> to vector<4x128xf32>
    %153 = arith.mulf %148, %152 : vector<4x128xf32>
    %154 = vector.broadcast %46 : vector<1x128xf32> to vector<4x128xf32>
    %155 = arith.mulf %153, %154 : vector<4x128xf32>
    %156 = vector.broadcast %48 : vector<1x128xf32> to vector<4x128xf32>
    %157 = arith.addf %155, %156 : vector<4x128xf32>
    %158 = arith.truncf %157 : vector<4x128xf32> to vector<4x128xbf16>
    %c0_59 = arith.constant 0 : index
    %c0_60 = arith.constant 0 : index
    %c0_61 = arith.constant 0 : index
    %c0_62 = arith.constant 0 : index
    %159 = vector.load %arg3[%c0_59, %c0_60, %c0_61, %c0_62] : memref<2x1x128x256xbf16, #tpu.memory_space<vmem>>, vector<1x1x128x256xbf16>
    %160 = vector.shape_cast %159 : vector<1x1x128x256xbf16> to vector<128x256xbf16>
    %cst_63 = arith.constant dense<0.000000e+00> : vector<4x256xf32>
    %161 = tpu.matmul %158, %160, %cst_63 {dimension_numbers = #tpu.dot_dimension_numbers<[1], [0], [0], [1], [0, 0, 1, 1], [], []>} : vector<4x128xbf16>, vector<128x256xbf16>, vector<4x256xf32> -> vector<4x256xf32>
    %162 = vector.broadcast %50 : vector<1x256xf32> to vector<4x256xf32>
    %163 = arith.addf %161, %162 : vector<4x256xf32>
    %cst_64 = arith.constant 5.000000e-01 : f32
    %164 = vector.broadcast %cst_64 : f32 to vector<4x256xf32>
    %165 = arith.mulf %164, %163 : vector<4x256xf32>
    %cst_65 = arith.constant 4.471500e-02 : f32
    %166 = vector.broadcast %cst_65 : f32 to vector<4x256xf32>
    %167 = arith.mulf %166, %163 : vector<4x256xf32>
    %168 = arith.mulf %167, %163 : vector<4x256xf32>
    %169 = arith.mulf %168, %163 : vector<4x256xf32>
    %170 = arith.addf %163, %169 : vector<4x256xf32>
    %cst_66 = arith.constant 0.797884583 : f32
    %171 = vector.broadcast %cst_66 : f32 to vector<4x256xf32>
    %172 = arith.mulf %171, %170 : vector<4x256xf32>
    %173 = math.tanh %172 : vector<4x256xf32>
    %cst_67 = arith.constant 1.000000e+00 : f32
    %174 = vector.broadcast %cst_67 : f32 to vector<4x256xf32>
    %175 = arith.addf %174, %173 : vector<4x256xf32>
    %176 = arith.mulf %165, %175 : vector<4x256xf32>
    %177 = arith.truncf %176 : vector<4x256xf32> to vector<4x256xbf16>
    %c0_68 = arith.constant 0 : index
    %c0_69 = arith.constant 0 : index
    %c0_70 = arith.constant 0 : index
    %c0_71 = arith.constant 0 : index
    %178 = vector.load %arg4[%c0_68, %c0_69, %c0_70, %c0_71] : memref<2x1x256x128xbf16, #tpu.memory_space<vmem>>, vector<1x1x256x128xbf16>
    %179 = vector.shape_cast %178 : vector<1x1x256x128xbf16> to vector<256x128xbf16>
    %cst_72 = arith.constant dense<0.000000e+00> : vector<4x128xf32>
    %180 = tpu.matmul %177, %179, %cst_72 {dimension_numbers = #tpu.dot_dimension_numbers<[1], [0], [0], [1], [0, 0, 1, 1], [], []>} : vector<4x256xbf16>, vector<256x128xbf16>, vector<4x128xf32> -> vector<4x128xf32>
    %181 = vector.broadcast %52 : vector<1x128xf32> to vector<4x128xf32>
    %182 = arith.addf %180, %181 : vector<4x128xf32>
    %183 = arith.addf %182, %135 : vector<4x128xf32>
    %c0_73 = arith.constant 0 : index
    %c8 = arith.constant 8 : index
    %c0_74 = arith.constant 0 : index
    %184 = vector.load %arg7[%c0_73, %c8, %c0_74] : memref<2x10x768xf32, #tpu.memory_space<vmem>>, vector<1x1x256xf32>
    %185 = vector.shape_cast %184 : vector<1x1x256xf32> to vector<1x256xf32>
    %c0_75 = arith.constant 0 : index
    %c9 = arith.constant 9 : index
    %c0_76 = arith.constant 0 : index
    %186 = vector.load %arg7[%c0_75, %c9, %c0_76] : memref<2x10x768xf32, #tpu.memory_space<vmem>>, vector<1x1x128xf32>
    %187 = vector.shape_cast %186 : vector<1x1x128xf32> to vector<1x128xf32>
    %188 = vector.extract_strided_slice %183 {offsets = [0, 0], sizes = [2, 128], strides = [1, 1]} : vector<4x128xf32> to vector<2x128xf32>
    %189 = arith.truncf %188 : vector<2x128xf32> to vector<2x128xbf16>
    %c0_77 = arith.constant 0 : index
    %c0_78 = arith.constant 0 : index
    %c0_79 = arith.constant 0 : index
    %c0_80 = arith.constant 0 : index
    %190 = vector.load %arg5[%c0_77, %c0_78, %c0_79, %c0_80] : memref<2x1x128x256xbf16, #tpu.memory_space<vmem>>, vector<1x1x128x256xbf16>
    %191 = vector.shape_cast %190 : vector<1x1x128x256xbf16> to vector<128x256xbf16>
    %cst_81 = arith.constant dense<0.000000e+00> : vector<2x256xf32>
    %192 = tpu.matmul %189, %191, %cst_81 {dimension_numbers = #tpu.dot_dimension_numbers<[1], [0], [0], [1], [0, 0, 1, 1], [], []>} : vector<2x128xbf16>, vector<128x256xbf16>, vector<2x256xf32> -> vector<2x256xf32>
    %193 = vector.broadcast %185 : vector<1x256xf32> to vector<2x256xf32>
    %194 = arith.addf %192, %193 : vector<2x256xf32>
    %195 = arith.truncf %194 : vector<2x256xf32> to vector<2x256xbf16>
    %c0_82 = arith.constant 0 : index
    %c0_83 = arith.constant 0 : index
    %c0_84 = arith.constant 0 : index
    %c0_85 = arith.constant 0 : index
    %196 = vector.load %arg6[%c0_82, %c0_83, %c0_84, %c0_85] : memref<2x1x256x128xbf16, #tpu.memory_space<vmem>>, vector<1x1x256x128xbf16>
    %197 = vector.shape_cast %196 : vector<1x1x256x128xbf16> to vector<256x128xbf16>
    %cst_86 = arith.constant dense<0.000000e+00> : vector<2x128xf32>
    %198 = tpu.matmul %195, %197, %cst_86 {dimension_numbers = #tpu.dot_dimension_numbers<[1], [0], [0], [1], [0, 0, 1, 1], [], []>} : vector<2x256xbf16>, vector<256x128xbf16>, vector<2x128xf32> -> vector<2x128xf32>
    %199 = vector.broadcast %187 : vector<1x128xf32> to vector<2x128xf32>
    %200 = arith.addf %198, %199 : vector<2x128xf32>
    %201 = arith.addf %188, %200 : vector<2x128xf32>
    %202 = arith.addf %201, %188 : vector<2x128xf32>
    %203 = vector.extract_strided_slice %183 {offsets = [2, 0], sizes = [2, 128], strides = [1, 1]} : vector<4x128xf32> to vector<2x128xf32>
    %204 = tpu.concatenate %202, %203 in 0 : vector<2x128xf32>, vector<2x128xf32> -> vector<4x128xf32>
    %c0_87 = arith.constant 0 : index
    %c0_88 = arith.constant 0 : index
    %c0_89 = arith.constant 0 : index
    %205 = vector.load %arg8[%c0_87, %c0_88, %c0_89] : memref<2x4x128xf32, #tpu.memory_space<vmem>>, vector<1x4x128xf32>
    %206 = vector.shape_cast %205 : vector<1x4x128xf32> to vector<4x128xf32>
    %207 = vector.shape_cast %204 : vector<4x128xf32> to vector<1x4x128xf32>
    tpu.vector_store %arg8[%c0_87, %c0_88, %c0_89], %207 {strides = array<i32>} : memref<2x4x128xf32, #tpu.memory_space<vmem>>, vector<1x4x128xf32>,
    %c1_90 = arith.constant 1 : index
    %c0_91 = arith.constant 0 : index
    %c0_92 = arith.constant 0 : index
    %208 = vector.load %arg0[%c1_90, %c0_91, %c0_92] : memref<2x4x128xf32, #tpu.memory_space<vmem>>, vector<1x4x128xf32>
    %209 = vector.shape_cast %208 : vector<1x4x128xf32> to vector<4x128xf32>
    %c1_93 = arith.constant 1 : index
    %c0_94 = arith.constant 0 : index
    %c0_95 = arith.constant 0 : index
    %210 = vector.load %arg7[%c1_93, %c0_94, %c0_95] : memref<2x10x768xf32, #tpu.memory_space<vmem>>, vector<1x1x128xf32>
    %211 = vector.shape_cast %210 : vector<1x1x128xf32> to vector<1x128xf32>
    %c1_96 = arith.constant 1 : index
    %c1_97 = arith.constant 1 : index
    %c0_98 = arith.constant 0 : index
    %212 = vector.load %arg7[%c1_96, %c1_97, %c0_98] : memref<2x10x768xf32, #tpu.memory_space<vmem>>, vector<1x1x128xf32>
    %213 = vector.shape_cast %212 : vector<1x1x128xf32> to vector<1x128xf32>
    %c1_99 = arith.constant 1 : index
    %c2_100 = arith.constant 2 : index
    %c0_101 = arith.constant 0 : index
    %214 = vector.load %arg7[%c1_99, %c2_100, %c0_101] : memref<2x10x768xf32, #tpu.memory_space<vmem>>, vector<1x1x768xf32>
    %215 = vector.shape_cast %214 : vector<1x1x768xf32> to vector<1x768xf32>
    %c1_102 = arith.constant 1 : index
    %c3_103 = arith.constant 3 : index
    %c0_104 = arith.constant 0 : index
    %216 = vector.load %arg7[%c1_102, %c3_103, %c0_104] : memref<2x10x768xf32, #tpu.memory_space<vmem>>, vector<1x1x128xf32>
    %217 = vector.shape_cast %216 : vector<1x1x128xf32> to vector<1x128xf32>
    %c1_105 = arith.constant 1 : index
    %c4_106 = arith.constant 4 : index
    %c0_107 = arith.constant 0 : index
    %218 = vector.load %arg7[%c1_105, %c4_106, %c0_107] : memref<2x10x768xf32, #tpu.memory_space<vmem>>, vector<1x1x128xf32>
    %219 = vector.shape_cast %218 : vector<1x1x128xf32> to vector<1x128xf32>
    %c1_108 = arith.constant 1 : index
    %c5_109 = arith.constant 5 : index
    %c0_110 = arith.constant 0 : index
    %220 = vector.load %arg7[%c1_108, %c5_109, %c0_110] : memref<2x10x768xf32, #tpu.memory_space<vmem>>, vector<1x1x128xf32>
    %221 = vector.shape_cast %220 : vector<1x1x128xf32> to vector<1x128xf32>
    %c1_111 = arith.constant 1 : index
    %c6_112 = arith.constant 6 : index
    %c0_113 = arith.constant 0 : index
    %222 = vector.load %arg7[%c1_111, %c6_112, %c0_113] : memref<2x10x768xf32, #tpu.memory_space<vmem>>, vector<1x1x256xf32>
    %223 = vector.shape_cast %222 : vector<1x1x256xf32> to vector<1x256xf32>
    %c1_114 = arith.constant 1 : index
    %c7_115 = arith.constant 7 : index
    %c0_116 = arith.constant 0 : index
    %224 = vector.load %arg7[%c1_114, %c7_115, %c0_116] : memref<2x10x768xf32, #tpu.memory_space<vmem>>, vector<1x1x128xf32>
    %225 = vector.shape_cast %224 : vector<1x1x128xf32> to vector<1x128xf32>
    %cst_117 = arith.constant dense<0.000000e+00> : vector<4xf32>
    %226 = vector.multi_reduction <add>, %209, %cst_117 [1] : vector<4x128xf32> to vector<4xf32>
    %227 = vector.shape_cast %226 : vector<4xf32> to vector<4x1xf32>
    %cst_118 = arith.constant 1.280000e+02 : f32
    %228 = vector.broadcast %cst_118 : f32 to vector<4x1xf32>
    %229 = arith.divf %227, %228 : vector<4x1xf32>
    %230 = vector.broadcast %229 : vector<4x1xf32> to vector<4x128xf32>
    %231 = arith.subf %209, %230 : vector<4x128xf32>
    %232 = arith.mulf %231, %231 : vector<4x128xf32>
    %cst_119 = arith.constant dense<0.000000e+00> : vector<4xf32>
    %233 = vector.multi_reduction <add>, %232, %cst_119 [1] : vector<4x128xf32> to vector<4xf32>
    %234 = vector.shape_cast %233 : vector<4xf32> to vector<4x1xf32>
    %cst_120 = arith.constant 1.280000e+02 : f32
    %235 = vector.broadcast %cst_120 : f32 to vector<4x1xf32>
    %236 = arith.divf %234, %235 : vector<4x1xf32>
    %237 = vector.broadcast %229 : vector<4x1xf32> to vector<4x128xf32>
    %238 = arith.subf %209, %237 : vector<4x128xf32>
    %cst_121 = arith.constant 9.99999974E-6 : f32
    %239 = vector.broadcast %cst_121 : f32 to vector<4x1xf32>
    %240 = arith.addf %236, %239 : vector<4x1xf32>
    %241 = math.rsqrt %240 : vector<4x1xf32>
    %242 = vector.broadcast %241 : vector<4x1xf32> to vector<4x128xf32>
    %243 = arith.mulf %238, %242 : vector<4x128xf32>
    %244 = vector.broadcast %211 : vector<1x128xf32> to vector<4x128xf32>
    %245 = arith.mulf %243, %244 : vector<4x128xf32>
    %246 = vector.broadcast %213 : vector<1x128xf32> to vector<4x128xf32>
    %247 = arith.addf %245, %246 : vector<4x128xf32>
    %248 = arith.truncf %247 : vector<4x128xf32> to vector<4x128xbf16>
    %c1_122 = arith.constant 1 : index
    %c0_123 = arith.constant 0 : index
    %c0_124 = arith.constant 0 : index
    %c0_125 = arith.constant 0 : index
    %249 = vector.load %arg1[%c1_122, %c0_123, %c0_124, %c0_125] : memref<2x1x128x768xbf16, #tpu.memory_space<vmem>>, vector<1x1x128x768xbf16>
    %250 = vector.shape_cast %249 : vector<1x1x128x768xbf16> to vector<128x768xbf16>
    %cst_126 = arith.constant dense<0.000000e+00> : vector<4x768xf32>
    %251 = tpu.matmul %248, %250, %cst_126 {dimension_numbers = #tpu.dot_dimension_numbers<[1], [0], [0], [1], [0, 0, 1, 1], [], []>} : vector<4x128xbf16>, vector<128x768xbf16>, vector<4x768xf32> -> vector<4x768xf32>
    %252 = vector.broadcast %215 : vector<1x768xf32> to vector<4x768xf32>
    %253 = arith.addf %251, %252 : vector<4x768xf32>
    %254 = vector.extract_strided_slice %253 {offsets = [0, 0], sizes = [4, 128], strides = [1, 1]} : vector<4x768xf32> to vector<4x128xf32>
    %255 = arith.truncf %254 : vector<4x128xf32> to vector<4x128xbf16>
    %256 = vector.extract_strided_slice %253 {offsets = [0, 256], sizes = [4, 128], strides = [1, 1]} : vector<4x768xf32> to vector<4x128xf32>
    %257 = arith.truncf %256 : vector<4x128xf32> to vector<4x128xbf16>
    %258 = vector.extract_strided_slice %253 {offsets = [0, 512], sizes = [4, 128], strides = [1, 1]} : vector<4x768xf32> to vector<4x128xf32>
    %259 = arith.truncf %258 : vector<4x128xf32> to vector<4x128xbf16>
    %cst_127 = arith.constant dense<0.000000e+00> : vector<4x4xf32>
    %260 = tpu.matmul %255, %257, %cst_127 {dimension_numbers = #tpu.dot_dimension_numbers<[1], [1], [0], [0], [0, 0, 1, 0], [], []>} : vector<4x128xbf16>, vector<4x128xbf16>, vector<4x4xf32> -> vector<4x4xf32>
    %cst_128 = arith.constant 0.0883883461 : f32
    %261 = vector.broadcast %cst_128 : f32 to vector<4x4xf32>
    %262 = arith.mulf %260, %261 : vector<4x4xf32>
    %cst_129 = arith.constant -1.000000e+30 : f32
    %263 = vector.broadcast %cst_129 : f32 to vector<4x4xf32>
    %264 = arith.select %34, %262, %263 : vector<4x4xi1>, vector<4x4xf32>
    %cst_130 = arith.constant dense<0xFF800000> : vector<4xf32>
    %265 = vector.multi_reduction <maximumf>, %264, %cst_130 [1] : vector<4x4xf32> to vector<4xf32>
    %266 = vector.shape_cast %265 : vector<4xf32> to vector<4x1xf32>
    %267 = vector.broadcast %266 : vector<4x1xf32> to vector<4x4xf32>
    %268 = arith.subf %264, %267 : vector<4x4xf32>
    %269 = math.exp %268 : vector<4x4xf32>
    %cst_131 = arith.constant dense<0.000000e+00> : vector<4xf32>
    %270 = vector.multi_reduction <add>, %269, %cst_131 [1] : vector<4x4xf32> to vector<4xf32>
    %271 = vector.shape_cast %270 : vector<4xf32> to vector<4x1xf32>
    %272 = tpu.reciprocal %271 {approx = true} : vector<4x1xf32> -> vector<4x1xf32>
    %273 = vector.broadcast %272 : vector<4x1xf32> to vector<4x4xf32>
    %274 = arith.mulf %269, %273 : vector<4x4xf32>
    %275 = arith.truncf %274 : vector<4x4xf32> to vector<4x4xbf16>
    %cst_132 = arith.constant dense<0.000000e+00> : vector<4x128xf32>
    %276 = tpu.matmul %275, %259, %cst_132 {dimension_numbers = #tpu.dot_dimension_numbers<[1], [0], [0], [1], [0, 0, 1, 1], [], []>} : vector<4x4xbf16>, vector<4x128xbf16>, vector<4x128xf32> -> vector<4x128xf32>
    %277 = vector.extract_strided_slice %253 {offsets = [0, 128], sizes = [4, 128], strides = [1, 1]} : vector<4x768xf32> to vector<4x128xf32>
    %278 = arith.truncf %277 : vector<4x128xf32> to vector<4x128xbf16>
    %279 = vector.extract_strided_slice %253 {offsets = [0, 384], sizes = [4, 128], strides = [1, 1]} : vector<4x768xf32> to vector<4x128xf32>
    %280 = arith.truncf %279 : vector<4x128xf32> to vector<4x128xbf16>
    %281 = vector.extract_strided_slice %253 {offsets = [0, 640], sizes = [4, 128], strides = [1, 1]} : vector<4x768xf32> to vector<4x128xf32>
    %282 = arith.truncf %281 : vector<4x128xf32> to vector<4x128xbf16>
    %cst_133 = arith.constant dense<0.000000e+00> : vector<4x4xf32>
    %283 = tpu.matmul %278, %280, %cst_133 {dimension_numbers = #tpu.dot_dimension_numbers<[1], [1], [0], [0], [0, 0, 1, 0], [], []>} : vector<4x128xbf16>, vector<4x128xbf16>, vector<4x4xf32> -> vector<4x4xf32>
    %cst_134 = arith.constant 0.0883883461 : f32
    %284 = vector.broadcast %cst_134 : f32 to vector<4x4xf32>
    %285 = arith.mulf %283, %284 : vector<4x4xf32>
    %cst_135 = arith.constant -1.000000e+30 : f32
    %286 = vector.broadcast %cst_135 : f32 to vector<4x4xf32>
    %287 = arith.select %34, %285, %286 : vector<4x4xi1>, vector<4x4xf32>
    %cst_136 = arith.constant dense<0xFF800000> : vector<4xf32>
    %288 = vector.multi_reduction <maximumf>, %287, %cst_136 [1] : vector<4x4xf32> to vector<4xf32>
    %289 = vector.shape_cast %288 : vector<4xf32> to vector<4x1xf32>
    %290 = vector.broadcast %289 : vector<4x1xf32> to vector<4x4xf32>
    %291 = arith.subf %287, %290 : vector<4x4xf32>
    %292 = math.exp %291 : vector<4x4xf32>
    %cst_137 = arith.constant dense<0.000000e+00> : vector<4xf32>
    %293 = vector.multi_reduction <add>, %292, %cst_137 [1] : vector<4x4xf32> to vector<4xf32>
    %294 = vector.shape_cast %293 : vector<4xf32> to vector<4x1xf32>
    %295 = tpu.reciprocal %294 {approx = true} : vector<4x1xf32> -> vector<4x1xf32>
    %296 = vector.broadcast %295 : vector<4x1xf32> to vector<4x4xf32>
    %297 = arith.mulf %292, %296 : vector<4x4xf32>
    %298 = arith.truncf %297 : vector<4x4xf32> to vector<4x4xbf16>
    %cst_138 = arith.constant dense<0.000000e+00> : vector<4x128xf32>
    %299 = tpu.matmul %298, %282, %cst_138 {dimension_numbers = #tpu.dot_dimension_numbers<[1], [0], [0], [1], [0, 0, 1, 1], [], []>} : vector<4x4xbf16>, vector<4x128xbf16>, vector<4x128xf32> -> vector<4x128xf32>
    %300 = tpu.concatenate %276, %299 in 1 : vector<4x128xf32>, vector<4x128xf32> -> vector<4x256xf32>
    %301 = arith.truncf %300 : vector<4x256xf32> to vector<4x256xbf16>
    %c1_139 = arith.constant 1 : index
    %c0_140 = arith.constant 0 : index
    %c0_141 = arith.constant 0 : index
    %c0_142 = arith.constant 0 : index
    %302 = vector.load %arg2[%c1_139, %c0_140, %c0_141, %c0_142] : memref<2x1x256x128xbf16, #tpu.memory_space<vmem>>, vector<1x1x256x128xbf16>
    %303 = vector.shape_cast %302 : vector<1x1x256x128xbf16> to vector<256x128xbf16>
    %cst_143 = arith.constant dense<0.000000e+00> : vector<4x128xf32>
    %304 = tpu.matmul %301, %303, %cst_143 {dimension_numbers = #tpu.dot_dimension_numbers<[1], [0], [0], [1], [0, 0, 1, 1], [], []>} : vector<4x256xbf16>, vector<256x128xbf16>, vector<4x128xf32> -> vector<4x128xf32>
    %305 = vector.broadcast %217 : vector<1x128xf32> to vector<4x128xf32>
    %306 = arith.addf %304, %305 : vector<4x128xf32>
    %307 = arith.addf %247, %306 : vector<4x128xf32>
    %308 = arith.addf %307, %209 : vector<4x128xf32>
    %cst_144 = arith.constant dense<0.000000e+00> : vector<4xf32>
    %309 = vector.multi_reduction <add>, %308, %cst_144 [1] : vector<4x128xf32> to vector<4xf32>
    %310 = vector.shape_cast %309 : vector<4xf32> to vector<4x1xf32>
    %cst_145 = arith.constant 1.280000e+02 : f32
    %311 = vector.broadcast %cst_145 : f32 to vector<4x1xf32>
    %312 = arith.divf %310, %311 : vector<4x1xf32>
    %313 = vector.broadcast %312 : vector<4x1xf32> to vector<4x128xf32>
    %314 = arith.subf %308, %313 : vector<4x128xf32>
    %315 = arith.mulf %314, %314 : vector<4x128xf32>
    %cst_146 = arith.constant dense<0.000000e+00> : vector<4xf32>
    %316 = vector.multi_reduction <add>, %315, %cst_146 [1] : vector<4x128xf32> to vector<4xf32>
    %317 = vector.shape_cast %316 : vector<4xf32> to vector<4x1xf32>
    %cst_147 = arith.constant 1.280000e+02 : f32
    %318 = vector.broadcast %cst_147 : f32 to vector<4x1xf32>
    %319 = arith.divf %317, %318 : vector<4x1xf32>
    %320 = vector.broadcast %312 : vector<4x1xf32> to vector<4x128xf32>
    %321 = arith.subf %308, %320 : vector<4x128xf32>
    %cst_148 = arith.constant 9.99999974E-6 : f32
    %322 = vector.broadcast %cst_148 : f32 to vector<4x1xf32>
    %323 = arith.addf %319, %322 : vector<4x1xf32>
    %324 = math.rsqrt %323 : vector<4x1xf32>
    %325 = vector.broadcast %324 : vector<4x1xf32> to vector<4x128xf32>
    %326 = arith.mulf %321, %325 : vector<4x128xf32>
    %327 = vector.broadcast %219 : vector<1x128xf32> to vector<4x128xf32>
    %328 = arith.mulf %326, %327 : vector<4x128xf32>
    %329 = vector.broadcast %221 : vector<1x128xf32> to vector<4x128xf32>
    %330 = arith.addf %328, %329 : vector<4x128xf32>
    %331 = arith.truncf %330 : vector<4x128xf32> to vector<4x128xbf16>
    %c1_149 = arith.constant 1 : index
    %c0_150 = arith.constant 0 : index
    %c0_151 = arith.constant 0 : index
    %c0_152 = arith.constant 0 : index
    %332 = vector.load %arg3[%c1_149, %c0_150, %c0_151, %c0_152] : memref<2x1x128x256xbf16, #tpu.memory_space<vmem>>, vector<1x1x128x256xbf16>
    %333 = vector.shape_cast %332 : vector<1x1x128x256xbf16> to vector<128x256xbf16>
    %cst_153 = arith.constant dense<0.000000e+00> : vector<4x256xf32>
    %334 = tpu.matmul %331, %333, %cst_153 {dimension_numbers = #tpu.dot_dimension_numbers<[1], [0], [0], [1], [0, 0, 1, 1], [], []>} : vector<4x128xbf16>, vector<128x256xbf16>, vector<4x256xf32> -> vector<4x256xf32>
    %335 = vector.broadcast %223 : vector<1x256xf32> to vector<4x256xf32>
    %336 = arith.addf %334, %335 : vector<4x256xf32>
    %cst_154 = arith.constant 5.000000e-01 : f32
    %337 = vector.broadcast %cst_154 : f32 to vector<4x256xf32>
    %338 = arith.mulf %337, %336 : vector<4x256xf32>
    %cst_155 = arith.constant 4.471500e-02 : f32
    %339 = vector.broadcast %cst_155 : f32 to vector<4x256xf32>
    %340 = arith.mulf %339, %336 : vector<4x256xf32>
    %341 = arith.mulf %340, %336 : vector<4x256xf32>
    %342 = arith.mulf %341, %336 : vector<4x256xf32>
    %343 = arith.addf %336, %342 : vector<4x256xf32>
    %cst_156 = arith.constant 0.797884583 : f32
    %344 = vector.broadcast %cst_156 : f32 to vector<4x256xf32>
    %345 = arith.mulf %344, %343 : vector<4x256xf32>
    %346 = math.tanh %345 : vector<4x256xf32>
    %cst_157 = arith.constant 1.000000e+00 : f32
    %347 = vector.broadcast %cst_157 : f32 to vector<4x256xf32>
    %348 = arith.addf %347, %346 : vector<4x256xf32>
    %349 = arith.mulf %338, %348 : vector<4x256xf32>
    %350 = arith.truncf %349 : vector<4x256xf32> to vector<4x256xbf16>
    %c1_158 = arith.constant 1 : index
    %c0_159 = arith.constant 0 : index
    %c0_160 = arith.constant 0 : index
    %c0_161 = arith.constant 0 : index
    %351 = vector.load %arg4[%c1_158, %c0_159, %c0_160, %c0_161] : memref<2x1x256x128xbf16, #tpu.memory_space<vmem>>, vector<1x1x256x128xbf16>
    %352 = vector.shape_cast %351 : vector<1x1x256x128xbf16> to vector<256x128xbf16>
    %cst_162 = arith.constant dense<0.000000e+00> : vector<4x128xf32>
    %353 = tpu.matmul %350, %352, %cst_162 {dimension_numbers = #tpu.dot_dimension_numbers<[1], [0], [0], [1], [0, 0, 1, 1], [], []>} : vector<4x256xbf16>, vector<256x128xbf16>, vector<4x128xf32> -> vector<4x128xf32>
    %354 = vector.broadcast %225 : vector<1x128xf32> to vector<4x128xf32>
    %355 = arith.addf %353, %354 : vector<4x128xf32>
    %356 = arith.addf %355, %308 : vector<4x128xf32>
    %c1_163 = arith.constant 1 : index
    %c8_164 = arith.constant 8 : index
    %c0_165 = arith.constant 0 : index
    %357 = vector.load %arg7[%c1_163, %c8_164, %c0_165] : memref<2x10x768xf32, #tpu.memory_space<vmem>>, vector<1x1x256xf32>
    %358 = vector.shape_cast %357 : vector<1x1x256xf32> to vector<1x256xf32>
    %c1_166 = arith.constant 1 : index
    %c9_167 = arith.constant 9 : index
    %c0_168 = arith.constant 0 : index
    %359 = vector.load %arg7[%c1_166, %c9_167, %c0_168] : memref<2x10x768xf32, #tpu.memory_space<vmem>>, vector<1x1x128xf32>
    %360 = vector.shape_cast %359 : vector<1x1x128xf32> to vector<1x128xf32>
    %361 = vector.extract_strided_slice %356 {offsets = [0, 0], sizes = [2, 128], strides = [1, 1]} : vector<4x128xf32> to vector<2x128xf32>
    %362 = arith.truncf %361 : vector<2x128xf32> to vector<2x128xbf16>
    %c1_169 = arith.constant 1 : index
    %c0_170 = arith.constant 0 : index
    %c0_171 = arith.constant 0 : index
    %c0_172 = arith.constant 0 : index
    %363 = vector.load %arg5[%c1_169, %c0_170, %c0_171, %c0_172] : memref<2x1x128x256xbf16, #tpu.memory_space<vmem>>, vector<1x1x128x256xbf16>
    %364 = vector.shape_cast %363 : vector<1x1x128x256xbf16> to vector<128x256xbf16>
    %cst_173 = arith.constant dense<0.000000e+00> : vector<2x256xf32>
    %365 = tpu.matmul %362, %364, %cst_173 {dimension_numbers = #tpu.dot_dimension_numbers<[1], [0], [0], [1], [0, 0, 1, 1], [], []>} : vector<2x128xbf16>, vector<128x256xbf16>, vector<2x256xf32> -> vector<2x256xf32>
    %366 = vector.broadcast %358 : vector<1x256xf32> to vector<2x256xf32>
    %367 = arith.addf %365, %366 : vector<2x256xf32>
    %368 = arith.truncf %367 : vector<2x256xf32> to vector<2x256xbf16>
    %c1_174 = arith.constant 1 : index
    %c0_175 = arith.constant 0 : index
    %c0_176 = arith.constant 0 : index
    %c0_177 = arith.constant 0 : index
    %369 = vector.load %arg6[%c1_174, %c0_175, %c0_176, %c0_177] : memref<2x1x256x128xbf16, #tpu.memory_space<vmem>>, vector<1x1x256x128xbf16>
    %370 = vector.shape_cast %369 : vector<1x1x256x128xbf16> to vector<256x128xbf16>
    %cst_178 = arith.constant dense<0.000000e+00> : vector<2x128xf32>
    %371 = tpu.matmul %368, %370, %cst_178 {dimension_numbers = #tpu.dot_dimension_numbers<[1], [0], [0], [1], [0, 0, 1, 1], [], []>} : vector<2x256xbf16>, vector<256x128xbf16>, vector<2x128xf32> -> vector<2x128xf32>
    %372 = vector.broadcast %360 : vector<1x128xf32> to vector<2x128xf32>
    %373 = arith.addf %371, %372 : vector<2x128xf32>
    %374 = arith.addf %361, %373 : vector<2x128xf32>
    %375 = arith.addf %374, %361 : vector<2x128xf32>
    %376 = vector.extract_strided_slice %356 {offsets = [2, 0], sizes = [2, 128], strides = [1, 1]} : vector<4x128xf32> to vector<2x128xf32>
    %377 = tpu.concatenate %375, %376 in 0 : vector<2x128xf32>, vector<2x128xf32> -> vector<4x128xf32>
    %c1_179 = arith.constant 1 : index
    %c0_180 = arith.constant 0 : index
    %c0_181 = arith.constant 0 : index
    %378 = vector.load %arg8[%c1_179, %c0_180, %c0_181] : memref<2x4x128xf32, #tpu.memory_space<vmem>>, vector<1x4x128xf32>
    %379 = vector.shape_cast %378 : vector<1x4x128xf32> to vector<4x128xf32>
    %380 = vector.shape_cast %377 : vector<4x128xf32> to vector<1x4x128xf32>
    tpu.vector_store %arg8[%c1_179, %c0_180, %c0_181], %380 {strides = array<i32>} : memref<2x4x128xf32, #tpu.memory_space<vmem>>, vector<1x4x128xf32>,
    return
  }
}

</mosaic_0001>

<llo_original>
// kernel: tpu_custom_call.1
$region0: #{tpu_custom_call.1}
  #allocation0 [shape = 'u32[]', space=smem, size = 0x4, offset = 0x4, fixed_abs, tag = 'smem constant byte address 0x4 - core index']
  #allocation1 [shape = 'u32[144,128]{1,0:T(1,128)}', space=vmem, size = 0x12000, scoped, tag = 'internal scratch']
  %s0 = inlined_call_operand.vmem [shape: f32[2,4,128], index: 0, kind: input, shape index: {}]
  %s1 = inlined_call_operand.hbm [shape: bf16[2,1,128,768], index: 1, kind: input, shape index: {}]
  %s2 = inlined_call_operand.vmem [shape: bf16[2,1,256,128], index: 2, kind: input, shape index: {}]
  %s3 = inlined_call_operand.hbm [shape: bf16[2,1,128,256], index: 3, kind: input, shape index: {}]
  %s4 = inlined_call_operand.hbm [shape: bf16[2,1,256,128], index: 4, kind: input, shape index: {}]
  %s5 = inlined_call_operand.hbm [shape: bf16[2,1,128,256], index: 5, kind: input, shape index: {}]
  %s6 = inlined_call_operand.hbm [shape: bf16[2,1,256,128], index: 6, kind: input, shape index: {}]
  %s7 = inlined_call_operand.vmem [shape: f32[2,10,768], index: 7, kind: input, shape index: {}]
  %s8 = inlined_call_operand.hbm [shape: f32[2,4,128], index: 8, kind: output, shape index: {}]
  %s9 = sld [smem:[#allocation0]]
  $region62: #{tpu_custom_call.1} parent=0
    _
  %s11 = ssub.s32 1, %s9
  %s12 = scalar_select 0, %s11, %s9
  $region1: #{tpu_custom_call.1} parent=0
    #allocation2 [shape = 'u8[393216]{0}', space=vmem, size = 0x60000, scoped, tag = 'input window, operand 1, single buffered']
    #allocation3 [shape = 's32[1]{0}', space=sflag, size = 0x4, scoped, tag = 'scoped memory for tpu_custom_call.1']
    #allocation4 [shape = 's32[1]{0}', space=sflag, size = 0x4, scoped, tag = 'scoped memory for tpu_custom_call.1']
    #allocation5 [shape = 'u8[131072]{0}', space=vmem, size = 0x20000, scoped, tag = 'input window, operand 3, single buffered']
    #allocation6 [shape = 's32[1]{0}', space=sflag, size = 0x4, scoped, tag = 'scoped memory for tpu_custom_call.1']
    #allocation7 [shape = 'u8[131072]{0}', space=vmem, size = 0x20000, scoped, tag = 'input window, operand 4, single buffered']
    #allocation8 [shape = 'u8[131072]{0}', space=vmem, size = 0x20000, scoped, tag = 'input window, operand 5, single buffered']
    #allocation9 [shape = 's32[1]{0}', space=sflag, size = 0x4, scoped, tag = 'scoped memory for tpu_custom_call.1']
    #allocation10 [shape = 'u8[131072]{0}', space=vmem, size = 0x20000, scoped, tag = 'input window, operand 6, single buffered']
    #allocation11 [shape = 'u8[4096]{0}', space=vmem, size = 0x1000, scoped, tag = 'output window, operand 0, single buffered']
    %13 = vsyncpa [#allocation3], 0
    %14 = vsyncpa [#allocation6], 0
    %15 = vsyncpa [#allocation9], 0
    %16 = vsyncpa [#allocation4], 0
    // Predicated region
    $region2: #{tpu_custom_call.1} parent=1 // pred_check
      _
    $region3: #{tpu_custom_call.1} parent=1 // pred_check_branch
      %18 = sbr.rel (0) target = $region5
    $region4: #{tpu_custom_call.1} parent=1 // pred_region
      _
    $region5: #{tpu_custom_call.1} parent=1 // pred_fallthru
      _
    // Predicated region
    $region6: #{tpu_custom_call.1} parent=1 // pred_check
      _
    $region7: #{tpu_custom_call.1} parent=1 // pred_check_branch
      %20 = sbr.rel (0) target = $region9
    $region8: #{tpu_custom_call.1} parent=1 // pred_region
      %s22 = ssub.s32 12288, 12288
      %23 = vsyncadd [#allocation3], %s22
      %s24 = sshll.u32 [#allocation2], 4
      %s25 = int_to_ptr.vmem [resolvable:$true] %s24
      %30 = dma.hbm_to_vmem [thread:$0]  %s1, 12288, %s25, [#allocation3], 384, 384, 24
    $region9: #{tpu_custom_call.1} parent=1 // pred_fallthru
      _
    // Predicated region
    $region10: #{tpu_custom_call.1} parent=1 // pred_check
      _
    $region11: #{tpu_custom_call.1} parent=1 // pred_check_branch
      %32 = sbr.rel (0) target = $region13
    $region12: #{tpu_custom_call.1} parent=1 // pred_region
      _
    $region13: #{tpu_custom_call.1} parent=1 // pred_fallthru
      _
    // Predicated region
    $region14: #{tpu_custom_call.1} parent=1 // pred_check
      _
    $region15: #{tpu_custom_call.1} parent=1 // pred_check_branch
      %34 = sbr.rel (0) target = $region17
    $region16: #{tpu_custom_call.1} parent=1 // pred_region
      %s36 = ssub.s32 4096, 4096
      %37 = vsyncadd [#allocation6], %s36
      %s38 = sshll.u32 [#allocation5], 4
      %s39 = int_to_ptr.vmem [resolvable:$true] %s38
      %44 = dma.hbm_to_vmem [thread:$0]  %s3, 4096, %s39, [#allocation6], 128, 128, 8
    $region17: #{tpu_custom_call.1} parent=1 // pred_fallthru
      _
    // Predicated region
    $region18: #{tpu_custom_call.1} parent=1 // pred_check
      _
    $region19: #{tpu_custom_call.1} parent=1 // pred_check_branch
      %46 = sbr.rel (0) target = $region21
    $region20: #{tpu_custom_call.1} parent=1 // pred_region
      %s48 = ssub.s32 4096, 4096
      %49 = vsyncadd [#allocation6], %s48
      %s50 = sshll.u32 [#allocation7], 4
      %s51 = int_to_ptr.vmem [resolvable:$true] %s50
      %56 = dma.hbm_to_vmem [thread:$0]  %s4, 4096, %s51, [#allocation6], 64, 64, 4
    $region21: #{tpu_custom_call.1} parent=1 // pred_fallthru
      _
    // Predicated region
    $region22: #{tpu_custom_call.1} parent=1 // pred_check
      _
    $region23: #{tpu_custom_call.1} parent=1 // pred_check_branch
      %58 = sbr.rel (0) target = $region25
    $region24: #{tpu_custom_call.1} parent=1 // pred_region
      %s60 = ssub.s32 4096, 4096
      %61 = vsyncadd [#allocation9], %s60
      %s62 = sshll.u32 [#allocation8], 4
      %s63 = int_to_ptr.vmem [resolvable:$true] %s62
      %68 = dma.hbm_to_vmem [thread:$0]  %s5, 4096, %s63, [#allocation9], 128, 128, 8
    $region25: #{tpu_custom_call.1} parent=1 // pred_fallthru
      _
    // Predicated region
    $region26: #{tpu_custom_call.1} parent=1 // pred_check
      _
    $region27: #{tpu_custom_call.1} parent=1 // pred_check_branch
      %70 = sbr.rel (0) target = $region29
    $region28: #{tpu_custom_call.1} parent=1 // pred_region
      %s72 = ssub.s32 4096, 4096
      %73 = vsyncadd [#allocation9], %s72
      %s74 = sshll.u32 [#allocation10], 4
      %s75 = int_to_ptr.vmem [resolvable:$true] %s74
      %80 = dma.hbm_to_vmem [thread:$0]  %s6, 4096, %s75, [#allocation9], 64, 64, 4
    $region29: #{tpu_custom_call.1} parent=1 // pred_fallthru
      _
    // Predicated region
    $region30: #{tpu_custom_call.1} parent=1 // pred_check
      _
    $region31: #{tpu_custom_call.1} parent=1 // pred_check_branch
      %82 = sbr.rel (0) target = $region33
    $region32: #{tpu_custom_call.1} parent=1 // pred_region
      _
    $region33: #{tpu_custom_call.1} parent=1 // pred_fallthru
      _
    // Predicated region
    $region34: #{tpu_custom_call.1} parent=1 // pred_check
      _
    $region35: #{tpu_custom_call.1} parent=1 // pred_check_branch
      %84 = sbr.rel (0) target = $region37
    $region36: #{tpu_custom_call.1} parent=1 // pred_region
      %85 = dma.done [#allocation3], 12288
    $region37: #{tpu_custom_call.1} parent=1 // pred_fallthru
      _
    // Predicated region
    $region38: #{tpu_custom_call.1} parent=1 // pred_check
      _
    $region39: #{tpu_custom_call.1} parent=1 // pred_check_branch
      %87 = sbr.rel (0) target = $region41
    $region40: #{tpu_custom_call.1} parent=1 // pred_region
      %88 = dma.done [#allocation6], 4096
    $region41: #{tpu_custom_call.1} parent=1 // pred_fallthru
      _
    // Predicated region
    $region42: #{tpu_custom_call.1} parent=1 // pred_check
      _
    $region43: #{tpu_custom_call.1} parent=1 // pred_check_branch
      %90 = sbr.rel (0) target = $region45
    $region44: #{tpu_custom_call.1} parent=1 // pred_region
      %91 = dma.done [#allocation6], 4096
    $region45: #{tpu_custom_call.1} parent=1 // pred_fallthru
      _
    // Predicated region
    $region46: #{tpu_custom_call.1} parent=1 // pred_check
      _
    $region47: #{tpu_custom_call.1} parent=1 // pred_check_branch
      %93 = sbr.rel (0) target = $region49
    $region48: #{tpu_custom_call.1} parent=1 // pred_region
      %94 = dma.done [#allocation9], 4096
    $region49: #{tpu_custom_call.1} parent=1 // pred_fallthru
      _
    // Predicated region
    $region50: #{tpu_custom_call.1} parent=1 // pred_check
      _
    $region51: #{tpu_custom_call.1} parent=1 // pred_check_branch
      %96 = sbr.rel (0) target = $region53
    $region52: #{tpu_custom_call.1} parent=1 // pred_region
      %97 = dma.done [#allocation9], 4096
    $region53: #{tpu_custom_call.1} parent=1 // pred_fallthru
      _
    %v99 = vlaneseq
    %v100 = vshrl.u32 %v99, 7
    %vm101 = vcmp.lt.s32.totalorder %v100, 0
    %v102 = vsub.s32 0, %v100
    %v103 = vsel %vm101, %v102, %v100
    %v104 = vshrl.u32 %v103, 1
    %v105 = vand.u32 %v103, 1
    %v106 = vsub.s32 0, %v105
    %v107 = vsel %vm101, %v106, %v105
    %vm108 = vcmp.ne.s32.totalorder %v107, 0
    %vm109 = vcmp.lt.s32.totalorder %v107, 0
    %vm110 = vmand %vm109, %vm108
    %v111 = vadd.s32 %v107, 2
    %v112 = vsel %vm110, %v111, %v107
    %v113 = vlaneseq
    %v114 = vand.u32 %v113, 127
    %vm115 = vcmp.lt.s32.totalorder %v114, 0
    %v116 = vsub.s32 0, %v114
    %v117 = vsel %vm115, %v116, %v114
    %v118 = vshrl.u32 %v117, 1
    %v119 = vand.u32 %v117, 1
    %v120 = vsub.s32 0, %v119
    %v121 = vsel %vm115, %v120, %v119
    %vm122 = vcmp.ne.s32.totalorder %v121, 0
    %vm123 = vcmp.lt.s32.totalorder %v121, 0
    %vm124 = vmand %vm123, %vm122
    %v125 = vadd.s32 %v121, 2
    %v126 = vsel %vm124, %v125, %v121
    %vm127 = vcmp.eq.s32.totalorder %v112, %v126
    %v128 = vld [vmem:[%s0] sm:$0xf]
    %v129 = vld [vmem:[%s7] ss:$0 sm:$0xff]
    %v130 = vld [vmem:[%s7 + $0x1] ss:$0 sm:$0xff]
    %s131 = scalar_lea.vmem %s7, 2
    %v132 = vld [vmem:[%s131] ss:$8 sm:$0xf]
    %v133 = vld [vmem:[%s131] ss:$8 sm:$0x30]
    %v134 = vor.u32 %v132, %v133
    %v135 = vld [vmem:[%s7 + $0x3] ss:$0 sm:$0xff]
    %v136 = vld [vmem:[%s7 + $0x4] ss:$0 sm:$0xff]
    %v137 = vld [vmem:[%s7 + $0x5] ss:$0 sm:$0xff]
    %s138 = scalar_lea.vmem %s7, 6
    %v139 = vld [vmem:[%s138] ss:$8 sm:$0x3]
    %v140 = vld [vmem:[%s7 + $0x7] ss:$0 sm:$0xff]
    %vm141 = vcmask 1043456
    %v142 = vsel %vm141, %v128, 0.0
    %143 = vadd.xlane.f32.xlu0 %v142
    %v144 = vpop.xlane.xlu0 %143
    %v145 = vrcp.pop 128.0
    %v146 = vmul.f32 %v144, %v145
    %v147 = vsub.f32 %v128, %v146
    %v148 = vmul.f32 %v147, %v147
    %v149 = vsel %vm141, %v148, 0.0
    %150 = vadd.xlane.f32.xlu0 %v149
    %v151 = vpop.xlane.xlu0 %150
    %v152 = vmul.f32 %v151, %v145
    %v153 = vadd.f32 %v152, 1e-05
    %v154 = vrsqrt.pop %v153
    %v155 = vmul.f32 %v147, %v154
    %v156 = vmul.f32 %v155, %v129
    %v157 = vadd.f32 %v156, %v130
    %v158 = vpack.c.bf16 %v157, %v157
    %v159 = vld [vmem:[#allocation2] sm:$0xff]
    %v160 = vld [vmem:[#allocation2 + $0x8] sm:$0xff]
    %v161 = vld [vmem:[#allocation2 + $0x10] sm:$0xff]
    %v162 = vld [vmem:[#allocation2 + $0x18] sm:$0xff]
    %v163 = vld [vmem:[#allocation2 + $0x20] sm:$0xff]
    %v164 = vld [vmem:[#allocation2 + $0x28] sm:$0xff]
    %v165 = vld [vmem:[#allocation2 + $0x30] sm:$0xff]
    %v166 = vld [vmem:[#allocation2 + $0x38] sm:$0xff]
    %v167 = vld [vmem:[#allocation2 + $0x40] sm:$0xff]
    %v168 = vld [vmem:[#allocation2 + $0x48] sm:$0xff]
    %v169 = vld [vmem:[#allocation2 + $0x50] sm:$0xff]
    %v170 = vld [vmem:[#allocation2 + $0x58] sm:$0xff]
    %v171 = vld [vmem:[#allocation2 + $0x60] sm:$0xff]
    %v172 = vld [vmem:[#allocation2 + $0x68] sm:$0xff]
    %v173 = vld [vmem:[#allocation2 + $0x70] sm:$0xff]
    %v174 = vld [vmem:[#allocation2 + $0x78] sm:$0xff]
    %v175 = vld [vmem:[#allocation2 + $0x80] sm:$0xff]
    %v176 = vld [vmem:[#allocation2 + $0x88] sm:$0xff]
    %v177 = vld [vmem:[#allocation2 + $0x90] sm:$0xff]
    %v178 = vld [vmem:[#allocation2 + $0x98] sm:$0xff]
    %v179 = vld [vmem:[#allocation2 + $0xa0] sm:$0xff]
    %v180 = vld [vmem:[#allocation2 + $0xa8] sm:$0xff]
    %v181 = vld [vmem:[#allocation2 + $0xb0] sm:$0xff]
    %v182 = vld [vmem:[#allocation2 + $0xb8] sm:$0xff]
    %v183 = vld [vmem:[#allocation2 + $0xc0] sm:$0xff]
    %v184 = vld [vmem:[#allocation2 + $0xc8] sm:$0xff]
    %v185 = vld [vmem:[#allocation2 + $0xd0] sm:$0xff]
    %v186 = vld [vmem:[#allocation2 + $0xd8] sm:$0xff]
    %v187 = vld [vmem:[#allocation2 + $0xe0] sm:$0xff]
    %v188 = vld [vmem:[#allocation2 + $0xe8] sm:$0xff]
    %v189 = vld [vmem:[#allocation2 + $0xf0] sm:$0xff]
    %v190 = vld [vmem:[#allocation2 + $0xf8] sm:$0xff]
    %v191 = vld [vmem:[#allocation2 + $0x100] sm:$0xff]
    %v192 = vld [vmem:[#allocation2 + $0x108] sm:$0xff]
    %v193 = vld [vmem:[#allocation2 + $0x110] sm:$0xff]
    %v194 = vld [vmem:[#allocation2 + $0x118] sm:$0xff]
    %v195 = vld [vmem:[#allocation2 + $0x120] sm:$0xff]
    %v196 = vld [vmem:[#allocation2 + $0x128] sm:$0xff]
    %v197 = vld [vmem:[#allocation2 + $0x130] sm:$0xff]
    %v198 = vld [vmem:[#allocation2 + $0x138] sm:$0xff]
    %v199 = vld [vmem:[#allocation2 + $0x140] sm:$0xff]
    %v200 = vld [vmem:[#allocation2 + $0x148] sm:$0xff]
    %v201 = vld [vmem:[#allocation2 + $0x150] sm:$0xff]
    %v202 = vld [vmem:[#allocation2 + $0x158] sm:$0xff]
    %v203 = vld [vmem:[#allocation2 + $0x160] sm:$0xff]
    %v204 = vld [vmem:[#allocation2 + $0x168] sm:$0xff]
    %v205 = vld [vmem:[#allocation2 + $0x170] sm:$0xff]
    %v206 = vld [vmem:[#allocation2 + $0x178] sm:$0xff]
    %v208 = vlaneseq
    %v209 = vshrl.u32 %v208, 7
    %v210 = vsub.s32 0, %v209
    %v211 = vrot.slane %v134, %v210
    %v212 = vlaneseq
    %v213 = vshrl.u32 %v212, 7
    %v214 = vsub.s32 1, %v213
    %v215 = vrot.slane %v134, %v214
    %v216 = vlaneseq
    %v217 = vshrl.u32 %v216, 7
    %v218 = vsub.s32 2, %v217
    %v219 = vrot.slane %v134, %v218
    %v220 = vlaneseq
    %v221 = vshrl.u32 %v220, 7
    %v222 = vsub.s32 3, %v221
    %v223 = vrot.slane %v134, %v222
    %v224 = vlaneseq
    %v225 = vshrl.u32 %v224, 7
    %v226 = vsub.s32 4, %v225
    %v227 = vrot.slane %v134, %v226
    %v228 = vlaneseq
    %v229 = vshrl.u32 %v228, 7
    %v230 = vsub.s32 5, %v229
    %v231 = vrot.slane %v134, %v230
    %v286 = vunpack.c.l.b16 %v159
    %v287 = vunpack.c.h.b16 %v159
    %v288 = vunpack.c.l.b16 %v160
    %v289 = vunpack.c.h.b16 %v160
    %v290 = vunpack.c.l.b16 %v161
    %v291 = vunpack.c.h.b16 %v161
    %v292 = vunpack.c.l.b16 %v162
    %v293 = vunpack.c.h.b16 %v162
    %v294 = vunpack.c.l.b16 %v163
    %v295 = vunpack.c.h.b16 %v163
    %v296 = vunpack.c.l.b16 %v164
    %v297 = vunpack.c.h.b16 %v164
    %v298 = vunpack.c.l.b16 %v165
    %v299 = vunpack.c.h.b16 %v165
    %v300 = vunpack.c.l.b16 %v166
    %v301 = vunpack.c.h.b16 %v166
    %v302 = vunpack.c.l.b16 %v167
    %v303 = vunpack.c.h.b16 %v167
    %v304 = vunpack.c.l.b16 %v168
    %v305 = vunpack.c.h.b16 %v168
    %v306 = vunpack.c.l.b16 %v169
    %v307 = vunpack.c.h.b16 %v169
    %v308 = vunpack.c.l.b16 %v170
    %v309 = vunpack.c.h.b16 %v170
    %v310 = vunpack.c.l.b16 %v171
    %v311 = vunpack.c.h.b16 %v171
    %v312 = vunpack.c.l.b16 %v172
    %v313 = vunpack.c.h.b16 %v172
    %v314 = vunpack.c.l.b16 %v173
    %v315 = vunpack.c.h.b16 %v173
    %v316 = vunpack.c.l.b16 %v174
    %v317 = vunpack.c.h.b16 %v174
    %v318 = vunpack.c.l.b16 %v175
    %v319 = vunpack.c.h.b16 %v175
    %v320 = vunpack.c.l.b16 %v176
    %v321 = vunpack.c.h.b16 %v176
    %v322 = vunpack.c.l.b16 %v177
    %v323 = vunpack.c.h.b16 %v177
    %v324 = vunpack.c.l.b16 %v178
    %v325 = vunpack.c.h.b16 %v178
    %v326 = vunpack.c.l.b16 %v179
    %v327 = vunpack.c.h.b16 %v179
    %v328 = vunpack.c.l.b16 %v180
    %v329 = vunpack.c.h.b16 %v180
    %v330 = vunpack.c.l.b16 %v181
    %v331 = vunpack.c.h.b16 %v181
    %v332 = vunpack.c.l.b16 %v182
    %v333 = vunpack.c.h.b16 %v182
    %v334 = vunpack.c.l.b16 %v183
    %v335 = vunpack.c.h.b16 %v183
    %v336 = vunpack.c.l.b16 %v184
    %v337 = vunpack.c.h.b16 %v184
    %v338 = vunpack.c.l.b16 %v185
    %v339 = vunpack.c.h.b16 %v185
    %v340 = vunpack.c.l.b16 %v186
    %v341 = vunpack.c.h.b16 %v186
    %v342 = vunpack.c.l.b16 %v187
    %v343 = vunpack.c.h.b16 %v187
    %v344 = vunpack.c.l.b16 %v188
    %v345 = vunpack.c.h.b16 %v188
    %v346 = vunpack.c.l.b16 %v189
    %v347 = vunpack.c.h.b16 %v189
    %v348 = vunpack.c.l.b16 %v190
    %v349 = vunpack.c.h.b16 %v190
    %v350 = vunpack.c.l.b16 %v191
    %v351 = vunpack.c.h.b16 %v191
    %v352 = vunpack.c.l.b16 %v192
    %v353 = vunpack.c.h.b16 %v192
    %v354 = vunpack.c.l.b16 %v193
    %v355 = vunpack.c.h.b16 %v193
    %v356 = vunpack.c.l.b16 %v194
    %v357 = vunpack.c.h.b16 %v194
    %v358 = vunpack.c.l.b16 %v195
    %v359 = vunpack.c.h.b16 %v195
    %v360 = vunpack.c.l.b16 %v196
    %v361 = vunpack.c.h.b16 %v196
    %v362 = vunpack.c.l.b16 %v197
    %v363 = vunpack.c.h.b16 %v197
    %v364 = vunpack.c.l.b16 %v198
    %v365 = vunpack.c.h.b16 %v198
    %v366 = vunpack.c.l.b16 %v199
    %v367 = vunpack.c.h.b16 %v199
    %v368 = vunpack.c.l.b16 %v200
    %v369 = vunpack.c.h.b16 %v200
    %v370 = vunpack.c.l.b16 %v201
    %v371 = vunpack.c.h.b16 %v201
    %v372 = vunpack.c.l.b16 %v202
    %v373 = vunpack.c.h.b16 %v202
    %v374 = vunpack.c.l.b16 %v203
    %v375 = vunpack.c.h.b16 %v203
    %v376 = vunpack.c.l.b16 %v204
    %v377 = vunpack.c.h.b16 %v204
    %v378 = vunpack.c.l.b16 %v205
    %v379 = vunpack.c.h.b16 %v205
    %v380 = vunpack.c.l.b16 %v206
    %v381 = vunpack.c.h.b16 %v206
    %v382 = vpack.c.b16 %v292, %v286
    %v383 = vpack.c.b16 %v293, %v287
    %v384 = vpack.c.b16 %v294, %v288
    %v385 = vpack.c.b16 %v295, %v289
    %v386 = vpack.c.b16 %v296, %v290
    %v387 = vpack.c.b16 %v297, %v291
    %v388 = vpack.c.b16 %v304, %v298
    %v389 = vpack.c.b16 %v305, %v299
    %v390 = vpack.c.b16 %v306, %v300
    %v391 = vpack.c.b16 %v307, %v301
    %v392 = vpack.c.b16 %v308, %v302
    %v393 = vpack.c.b16 %v309, %v303
    %v394 = vpack.c.b16 %v316, %v310
    %v395 = vpack.c.b16 %v317, %v311
    %v396 = vpack.c.b16 %v318, %v312
    %v397 = vpack.c.b16 %v319, %v313
    %v398 = vpack.c.b16 %v320, %v314
    %v399 = vpack.c.b16 %v321, %v315
    %v400 = vpack.c.b16 %v328, %v322
    %v401 = vpack.c.b16 %v329, %v323
    %v402 = vpack.c.b16 %v330, %v324
    %v403 = vpack.c.b16 %v331, %v325
    %v404 = vpack.c.b16 %v332, %v326
    %v405 = vpack.c.b16 %v333, %v327
    %v406 = vpack.c.b16 %v340, %v334
    %v407 = vpack.c.b16 %v341, %v335
    %v408 = vpack.c.b16 %v342, %v336
    %v409 = vpack.c.b16 %v343, %v337
    %v410 = vpack.c.b16 %v344, %v338
    %v411 = vpack.c.b16 %v345, %v339
    %v412 = vpack.c.b16 %v352, %v346
    %v413 = vpack.c.b16 %v353, %v347
    %v414 = vpack.c.b16 %v354, %v348
    %v415 = vpack.c.b16 %v355, %v349
    %v416 = vpack.c.b16 %v356, %v350
    %v417 = vpack.c.b16 %v357, %v351
    %v418 = vpack.c.b16 %v364, %v358
    %v419 = vpack.c.b16 %v365, %v359
    %v420 = vpack.c.b16 %v366, %v360
    %v421 = vpack.c.b16 %v367, %v361
    %v422 = vpack.c.b16 %v368, %v362
    %v423 = vpack.c.b16 %v369, %v363
    %v424 = vpack.c.b16 %v376, %v370
    %v425 = vpack.c.b16 %v377, %v371
    %v426 = vpack.c.b16 %v378, %v372
    %v427 = vpack.c.b16 %v379, %v373
    %v428 = vpack.c.b16 %v380, %v374
    %v429 = vpack.c.b16 %v381, %v375
    %478 = vmatprep.subr.bf16.mxu0 %v425
    %479 = vmatpush1.bf16.msra.mxu0 %v424
    %480 = vmatprep.subr.bf16.mxu0 %v419
    %481 = vmatpush1.bf16.msra.mxu0 %v418
    %482 = vmatprep.subr.bf16.mxu0 %v413
    %483 = vmatpush1.bf16.msra.mxu0 %v412
    %484 = vmatprep.subr.bf16.mxu0 %v407
    %485 = vmatpush1.bf16.msra.mxu0 %v406
    %486 = vmatprep.subr.bf16.mxu0 %v401
    %487 = vmatpush1.bf16.msra.mxu0 %v400
    %488 = vmatprep.subr.bf16.mxu0 %v395
    %489 = vmatpush1.bf16.msra.mxu0 %v394
    %490 = vmatprep.subr.bf16.mxu0 %v389
    %491 = vmatpush1.bf16.msra.mxu0 %v388
    %492 = vmatprep.subr.bf16.mxu0 %v383
    %493 = vmatpush1.bf16.msra.mxu0 %v382
    %494 = vmatprep.subr.bf16.mxu0 0
    %495 = vmatpush2.bf16.msra.mxu0 0
    %496 = vmatprep.subr.bf16.mxu0 0
    %497 = vmatpush2.bf16.msra.mxu0 0
    %498 = vmatprep.subr.bf16.mxu0 0
    %499 = vmatpush2.bf16.msra.mxu0 0
    %500 = vmatprep.subr.bf16.mxu0 0
    %501 = vmatpush2.bf16.msra.mxu0 0
    %502 = vmatprep.subr.bf16.mxu0 0
    %503 = vmatpush2.bf16.msra.mxu0 0
    %504 = vmatprep.subr.bf16.mxu0 0
    %505 = vmatpush2.bf16.msra.mxu0 0
    %506 = vmatprep.subr.bf16.mxu0 0
    %507 = vmatpush2.bf16.msra.mxu0 0
    %508 = vmatprep.subr.bf16.mxu0 0
    %509 = vmatpush2.bf16.msra.mxu0 0
    %510 = vmatprep.mubr.bf16.mxu0 0
    %511 = vmatmul.mubr.bf16.gmra.mxu0 %v158
    %v512 = vpop.f32.mrf.mxu0
    %v513 = vadd.f32 %v211, %v512
    %v514 = vpop.f32.mrf.mxu0
    %v515 = vadd.f32 %v215, %v514
    %v516 = vpop.f32.mrf.mxu0
    %v517 = vpop.f32.mrf.mxu0
    %518 = vdwg.mxu0
    %519 = vmatprep.subr.bf16.mxu0 %v427
    %520 = vmatpush1.bf16.msra.mxu0 %v426
    %521 = vmatprep.subr.bf16.mxu0 %v421
    %522 = vmatpush1.bf16.msra.mxu0 %v420
    %523 = vmatprep.subr.bf16.mxu0 %v415
    %524 = vmatpush1.bf16.msra.mxu0 %v414
    %525 = vmatprep.subr.bf16.mxu0 %v409
    %526 = vmatpush1.bf16.msra.mxu0 %v408
    %527 = vmatprep.subr.bf16.mxu0 %v403
    %528 = vmatpush1.bf16.msra.mxu0 %v402
    %529 = vmatprep.subr.bf16.mxu0 %v397
    %530 = vmatpush1.bf16.msra.mxu0 %v396
    %531 = vmatprep.subr.bf16.mxu0 %v391
    %532 = vmatpush1.bf16.msra.mxu0 %v390
    %533 = vmatprep.subr.bf16.mxu0 %v385
    %534 = vmatpush1.bf16.msra.mxu0 %v384
    %535 = vmatprep.subr.bf16.mxu0 0
    %536 = vmatpush2.bf16.msra.mxu0 0
    %537 = vmatprep.subr.bf16.mxu0 0
    %538 = vmatpush2.bf16.msra.mxu0 0
    %539 = vmatprep.subr.bf16.mxu0 0
    %540 = vmatpush2.bf16.msra.mxu0 0
    %541 = vmatprep.subr.bf16.mxu0 0
    %542 = vmatpush2.bf16.msra.mxu0 0
    %543 = vmatprep.subr.bf16.mxu0 0
    %544 = vmatpush2.bf16.msra.mxu0 0
    %545 = vmatprep.subr.bf16.mxu0 0
    %546 = vmatpush2.bf16.msra.mxu0 0
    %547 = vmatprep.subr.bf16.mxu0 0
    %548 = vmatpush2.bf16.msra.mxu0 0
    %549 = vmatprep.subr.bf16.mxu0 0
    %550 = vmatpush2.bf16.msra.mxu0 0
    %551 = vmatprep.mubr.bf16.mxu0 0
    %552 = vmatmul.mubr.bf16.gmra.mxu0 %v158
    %v553 = vpop.f32.mrf.mxu0
    %v554 = vadd.f32 %v219, %v553
    %v555 = vpop.f32.mrf.mxu0
    %v556 = vadd.f32 %v223, %v555
    %v557 = vpop.f32.mrf.mxu0
    %v558 = vpop.f32.mrf.mxu0
    %559 = vdwg.mxu0
    %560 = vmatprep.subr.bf16.mxu0 %v429
    %561 = vmatpush1.bf16.msra.mxu0 %v428
    %562 = vmatprep.subr.bf16.mxu0 %v423
    %563 = vmatpush1.bf16.msra.mxu0 %v422
    %564 = vmatprep.subr.bf16.mxu0 %v417
    %565 = vmatpush1.bf16.msra.mxu0 %v416
    %566 = vmatprep.subr.bf16.mxu0 %v411
    %567 = vmatpush1.bf16.msra.mxu0 %v410
    %568 = vmatprep.subr.bf16.mxu0 %v405
    %569 = vmatpush1.bf16.msra.mxu0 %v404
    %570 = vmatprep.subr.bf16.mxu0 %v399
    %571 = vmatpush1.bf16.msra.mxu0 %v398
    %572 = vmatprep.subr.bf16.mxu0 %v393
    %573 = vmatpush1.bf16.msra.mxu0 %v392
    %574 = vmatprep.subr.bf16.mxu0 %v387
    %575 = vmatpush1.bf16.msra.mxu0 %v386
    %576 = vmatprep.subr.bf16.mxu0 0
    %577 = vmatpush2.bf16.msra.mxu0 0
    %578 = vmatprep.subr.bf16.mxu0 0
    %579 = vmatpush2.bf16.msra.mxu0 0
    %580 = vmatprep.subr.bf16.mxu0 0
    %581 = vmatpush2.bf16.msra.mxu0 0
    %582 = vmatprep.subr.bf16.mxu0 0
    %583 = vmatpush2.bf16.msra.mxu0 0
    %584 = vmatprep.subr.bf16.mxu0 0
    %585 = vmatpush2.bf16.msra.mxu0 0
    %586 = vmatprep.subr.bf16.mxu0 0
    %587 = vmatpush2.bf16.msra.mxu0 0
    %588 = vmatprep.subr.bf16.mxu0 0
    %589 = vmatpush2.bf16.msra.mxu0 0
    %590 = vmatprep.subr.bf16.mxu0 0
    %591 = vmatpush2.bf16.msra.mxu0 0
    %592 = vmatprep.mubr.bf16.mxu0 0
    %593 = vmatmul.mubr.bf16.gmra.mxu0 %v158
    %v594 = vpop.f32.mrf.mxu0
    %v595 = vadd.f32 %v227, %v594
    %v596 = vpop.f32.mrf.mxu0
    %v597 = vadd.f32 %v231, %v596
    %v598 = vpop.f32.mrf.mxu0
    %v599 = vpop.f32.mrf.mxu0
    %600 = vdwg.mxu0
    %v601 = vpack.c.bf16 %v513, %v513
    %v602 = vpack.c.bf16 %v554, %v554
    %v603 = vpack.c.bf16 %v595, %v595
    %604 = vmatprep.subr.bf16.mxu0 0
    %605 = vmatpush1.bf16.xpose.msra.mxu0 0
    %606 = vmatprep.subr.bf16.mxu0 0
    %607 = vmatpush1.bf16.xpose.msra.mxu0 0
    %608 = vmatprep.subr.bf16.mxu0 0
    %609 = vmatpush1.bf16.xpose.msra.mxu0 0
    %610 = vmatprep.subr.bf16.mxu0 0
    %611 = vmatpush1.bf16.xpose.msra.mxu0 0
    %612 = vmatprep.subr.bf16.mxu0 0
    %613 = vmatpush1.bf16.xpose.msra.mxu0 0
    %614 = vmatprep.subr.bf16.mxu0 0
    %615 = vmatpush1.bf16.xpose.msra.mxu0 0
    %616 = vmatprep.subr.bf16.mxu0 0
    %617 = vmatpush1.bf16.xpose.msra.mxu0 0
    %618 = vmatprep.subr.bf16.mxu0 0
    %619 = vmatpush1.bf16.xpose.msra.mxu0 %v602
    %620 = vmatprep.subr.bf16.mxu0 0
    %621 = vmatpush2.bf16.xpose.msra.mxu0 0
    %622 = vmatprep.subr.bf16.mxu0 0
    %623 = vmatpush2.bf16.xpose.msra.mxu0 0
    %624 = vmatprep.subr.bf16.mxu0 0
    %625 = vmatpush2.bf16.xpose.msra.mxu0 0
    %626 = vmatprep.subr.bf16.mxu0 0
    %627 = vmatpush2.bf16.xpose.msra.mxu0 0
    %628 = vmatprep.subr.bf16.mxu0 0
    %629 = vmatpush2.bf16.xpose.msra.mxu0 0
    %630 = vmatprep.subr.bf16.mxu0 0
    %631 = vmatpush2.bf16.xpose.msra.mxu0 0
    %632 = vmatprep.subr.bf16.mxu0 0
    %633 = vmatpush2.bf16.xpose.msra.mxu0 0
    %634 = vmatprep.subr.bf16.mxu0 0
    %635 = vmatpush2.bf16.xpose.msra.mxu0 0
    %636 = vmatprep.mubr.bf16.mxu0 0
    %637 = vmatmul.mubr.bf16.gmra.mxu0 %v601
    %v638 = vpop.f32.mrf.mxu0
    %v639 = vadd.f32 0.0, %v638
    %v640 = vpop.f32.mrf.mxu0
    %v641 = vpop.f32.mrf.mxu0
    %v642 = vpop.f32.mrf.mxu0
    %643 = vdwg.mxu0
    %v644 = vmul.f32 %v639, 0.088388346
    %v645 = vsel %vm127, %v644, -1e+30
    %vm646 = vcmask 27648
    %v647 = vsel %vm646, %v645, -inf
    %648 = vmax.xlane.f32.xlu0 %v647
    %v649 = vpop.xlane.xlu0 %648
    %v650 = vsub.f32 %v645, %v649
    %v651 = vmul.f32 %v650, 1.442695
    %v652 = vpow.pop %v651
    %v653 = vsel %vm646, %v652, 0.0
    %654 = vadd.xlane.f32.xlu0 %v653
    %v655 = vpop.xlane.xlu0 %654
    %v656 = vrcp.pop %v655
    %v657 = vmul.f32 %v652, %v656
    %v658 = vpack.c.bf16 %v657, %v657
    %vm659 = vcmask 31744
    %v661 = vsel %vm659, %v658, 0
    %vm663 = vcmask 1041408
    %v665 = vsel %vm663, %v603, 0
    %667 = vmatprep.subr.bf16.mxu0 0
    %668 = vmatpush1.bf16.msra.mxu0 0
    %669 = vmatprep.subr.bf16.mxu0 0
    %670 = vmatpush1.bf16.msra.mxu0 0
    %671 = vmatprep.subr.bf16.mxu0 0
    %672 = vmatpush1.bf16.msra.mxu0 0
    %673 = vmatprep.subr.bf16.mxu0 0
    %674 = vmatpush1.bf16.msra.mxu0 0
    %675 = vmatprep.subr.bf16.mxu0 0
    %676 = vmatpush1.bf16.msra.mxu0 0
    %677 = vmatprep.subr.bf16.mxu0 0
    %678 = vmatpush1.bf16.msra.mxu0 0
    %679 = vmatprep.subr.bf16.mxu0 0
    %680 = vmatpush1.bf16.msra.mxu0 0
    %681 = vmatprep.subr.bf16.mxu0 0
    %682 = vmatpush1.bf16.msra.mxu0 %v665
    %683 = vmatprep.subr.bf16.mxu0 0
    %684 = vmatpush2.bf16.msra.mxu0 0
    %685 = vmatprep.subr.bf16.mxu0 0
    %686 = vmatpush2.bf16.msra.mxu0 0
    %687 = vmatprep.subr.bf16.mxu0 0
    %688 = vmatpush2.bf16.msra.mxu0 0
    %689 = vmatprep.subr.bf16.mxu0 0
    %690 = vmatpush2.bf16.msra.mxu0 0
    %691 = vmatprep.subr.bf16.mxu0 0
    %692 = vmatpush2.bf16.msra.mxu0 0
    %693 = vmatprep.subr.bf16.mxu0 0
    %694 = vmatpush2.bf16.msra.mxu0 0
    %695 = vmatprep.subr.bf16.mxu0 0
    %696 = vmatpush2.bf16.msra.mxu0 0
    %697 = vmatprep.subr.bf16.mxu0 0
    %698 = vmatpush2.bf16.msra.mxu0 0
    %699 = vmatprep.mubr.bf16.mxu0 0
    %700 = vmatmul.mubr.bf16.gmra.mxu0 %v661
    %v701 = vpop.f32.mrf.mxu0
    %v702 = vadd.f32 0.0, %v701
    %v703 = vpop.f32.mrf.mxu0
    %v704 = vpop.f32.mrf.mxu0
    %v705 = vpop.f32.mrf.mxu0
    %706 = vdwg.mxu0
    %v707 = vpack.c.bf16 %v515, %v515
    %v708 = vpack.c.bf16 %v556, %v556
    %v709 = vpack.c.bf16 %v597, %v597
    %710 = vmatprep.subr.bf16.mxu0 0
    %711 = vmatpush1.bf16.xpose.msra.mxu0 0
    %712 = vmatprep.subr.bf16.mxu0 0
    %713 = vmatpush1.bf16.xpose.msra.mxu0 0
    %714 = vmatprep.subr.bf16.mxu0 0
    %715 = vmatpush1.bf16.xpose.msra.mxu0 0
    %716 = vmatprep.subr.bf16.mxu0 0
    %717 = vmatpush1.bf16.xpose.msra.mxu0 0
    %718 = vmatprep.subr.bf16.mxu0 0
    %719 = vmatpush1.bf16.xpose.msra.mxu0 0
    %720 = vmatprep.subr.bf16.mxu0 0
    %721 = vmatpush1.bf16.xpose.msra.mxu0 0
    %722 = vmatprep.subr.bf16.mxu0 0
    %723 = vmatpush1.bf16.xpose.msra.mxu0 0
    %724 = vmatprep.subr.bf16.mxu0 0
    %725 = vmatpush1.bf16.xpose.msra.mxu0 %v708
    %726 = vmatprep.subr.bf16.mxu0 0
    %727 = vmatpush2.bf16.xpose.msra.mxu0 0
    %728 = vmatprep.subr.bf16.mxu0 0
    %729 = vmatpush2.bf16.xpose.msra.mxu0 0
    %730 = vmatprep.subr.bf16.mxu0 0
    %731 = vmatpush2.bf16.xpose.msra.mxu0 0
    %732 = vmatprep.subr.bf16.mxu0 0
    %733 = vmatpush2.bf16.xpose.msra.mxu0 0
    %734 = vmatprep.subr.bf16.mxu0 0
    %735 = vmatpush2.bf16.xpose.msra.mxu0 0
    %736 = vmatprep.subr.bf16.mxu0 0
    %737 = vmatpush2.bf16.xpose.msra.mxu0 0
    %738 = vmatprep.subr.bf16.mxu0 0
    %739 = vmatpush2.bf16.xpose.msra.mxu0 0
    %740 = vmatprep.subr.bf16.mxu0 0
    %741 = vmatpush2.bf16.xpose.msra.mxu0 0
    %742 = vmatprep.mubr.bf16.mxu0 0
    %743 = vmatmul.mubr.bf16.gmra.mxu0 %v707
    %v744 = vpop.f32.mrf.mxu0
    %v745 = vadd.f32 0.0, %v744
    %v746 = vpop.f32.mrf.mxu0
    %v747 = vpop.f32.mrf.mxu0
    %v748 = vpop.f32.mrf.mxu0
    %749 = vdwg.mxu0
    %v750 = vmul.f32 %v745, 0.088388346
    %v751 = vsel %vm127, %v750, -1e+30
    %v752 = vsel %vm646, %v751, -inf
    %753 = vmax.xlane.f32.xlu0 %v752
    %v754 = vpop.xlane.xlu0 %753
    %v755 = vsub.f32 %v751, %v754
    %v756 = vmul.f32 %v755, 1.442695
    %v757 = vpow.pop %v756
    %v758 = vsel %vm646, %v757, 0.0
    %759 = vadd.xlane.f32.xlu0 %v758
    %v760 = vpop.xlane.xlu0 %759
    %v761 = vrcp.pop %v760
    %v762 = vmul.f32 %v757, %v761
    %v763 = vpack.c.bf16 %v762, %v762
    %v765 = vsel %vm659, %v763, 0
    %v768 = vsel %vm663, %v709, 0
    %770 = vmatprep.subr.bf16.mxu0 0
    %771 = vmatpush1.bf16.msra.mxu0 0
    %772 = vmatprep.subr.bf16.mxu0 0
    %773 = vmatpush1.bf16.msra.mxu0 0
    %774 = vmatprep.subr.bf16.mxu0 0
    %775 = vmatpush1.bf16.msra.mxu0 0
    %776 = vmatprep.subr.bf16.mxu0 0
    %777 = vmatpush1.bf16.msra.mxu0 0
    %778 = vmatprep.subr.bf16.mxu0 0
    %779 = vmatpush1.bf16.msra.mxu0 0
    %780 = vmatprep.subr.bf16.mxu0 0
    %781 = vmatpush1.bf16.msra.mxu0 0
    %782 = vmatprep.subr.bf16.mxu0 0
    %783 = vmatpush1.bf16.msra.mxu0 0
    %784 = vmatprep.subr.bf16.mxu0 0
    %785 = vmatpush1.bf16.msra.mxu0 %v768
    %786 = vmatprep.subr.bf16.mxu0 0
    %787 = vmatpush2.bf16.msra.mxu0 0
    %788 = vmatprep.subr.bf16.mxu0 0
    %789 = vmatpush2.bf16.msra.mxu0 0
    %790 = vmatprep.subr.bf16.mxu0 0
    %791 = vmatpush2.bf16.msra.mxu0 0
    %792 = vmatprep.subr.bf16.mxu0 0
    %793 = vmatpush2.bf16.msra.mxu0 0
    %794 = vmatprep.subr.bf16.mxu0 0
    %795 = vmatpush2.bf16.msra.mxu0 0
    %796 = vmatprep.subr.bf16.mxu0 0
    %797 = vmatpush2.bf16.msra.mxu0 0
    %798 = vmatprep.subr.bf16.mxu0 0
    %799 = vmatpush2.bf16.msra.mxu0 0
    %800 = vmatprep.subr.bf16.mxu0 0
    %801 = vmatpush2.bf16.msra.mxu0 0
    %802 = vmatprep.mubr.bf16.mxu0 0
    %803 = vmatmul.mubr.bf16.gmra.mxu0 %v765
    %v804 = vpop.f32.mrf.mxu0
    %v805 = vadd.f32 0.0, %v804
    %v806 = vpop.f32.mrf.mxu0
    %v807 = vpop.f32.mrf.mxu0
    %v808 = vpop.f32.mrf.mxu0
    %809 = vdwg.mxu0
    %v810 = vpack.c.bf16 %v702, %v702
    %v811 = vpack.c.bf16 %v805, %v805
    %v812 = vld [vmem:[%s2] sm:$0xf]
    %v813 = vld [vmem:[%s2 + $0x4] sm:$0xf]
    %v814 = vld [vmem:[%s2 + $0x8] sm:$0xf]
    %v815 = vld [vmem:[%s2 + $0xc] sm:$0xf]
    %v816 = vld [vmem:[%s2 + $0x10] sm:$0xf]
    %v817 = vld [vmem:[%s2 + $0x14] sm:$0xf]
    %v818 = vld [vmem:[%s2 + $0x18] sm:$0xf]
    %v819 = vld [vmem:[%s2 + $0x1c] sm:$0xf]
    %v820 = vld [vmem:[%s2 + $0x20] sm:$0xf]
    %v821 = vld [vmem:[%s2 + $0x24] sm:$0xf]
    %v822 = vld [vmem:[%s2 + $0x28] sm:$0xf]
    %v823 = vld [vmem:[%s2 + $0x2c] sm:$0xf]
    %v824 = vld [vmem:[%s2 + $0x30] sm:$0xf]
    %v825 = vld [vmem:[%s2 + $0x34] sm:$0xf]
    %v826 = vld [vmem:[%s2 + $0x38] sm:$0xf]
    %v827 = vld [vmem:[%s2 + $0x3c] sm:$0xf]
    %v828 = vld [vmem:[%s2 + $0x40] sm:$0xf]
    %v829 = vld [vmem:[%s2 + $0x44] sm:$0xf]
    %v830 = vld [vmem:[%s2 + $0x48] sm:$0xf]
    %v831 = vld [vmem:[%s2 + $0x4c] sm:$0xf]
    %v832 = vld [vmem:[%s2 + $0x50] sm:$0xf]
    %v833 = vld [vmem:[%s2 + $0x54] sm:$0xf]
    %v834 = vld [vmem:[%s2 + $0x58] sm:$0xf]
    %v835 = vld [vmem:[%s2 + $0x5c] sm:$0xf]
    %v836 = vld [vmem:[%s2 + $0x60] sm:$0xf]
    %v837 = vld [vmem:[%s2 + $0x64] sm:$0xf]
    %v838 = vld [vmem:[%s2 + $0x68] sm:$0xf]
    %v839 = vld [vmem:[%s2 + $0x6c] sm:$0xf]
    %v840 = vld [vmem:[%s2 + $0x70] sm:$0xf]
    %v841 = vld [vmem:[%s2 + $0x74] sm:$0xf]
    %v842 = vld [vmem:[%s2 + $0x78] sm:$0xf]
    %v843 = vld [vmem:[%s2 + $0x7c] sm:$0xf]
    %v876 = vunpack.c.l.b16 %v812
    %v877 = vunpack.c.l.b16 %v813
    %v878 = vunpack.c.l.b16 %v814
    %v879 = vunpack.c.l.b16 %v815
    %v880 = vunpack.c.l.b16 %v816
    %v881 = vunpack.c.l.b16 %v817
    %v882 = vunpack.c.l.b16 %v818
    %v883 = vunpack.c.l.b16 %v819
    %v884 = vunpack.c.l.b16 %v820
    %v885 = vunpack.c.l.b16 %v821
    %v886 = vunpack.c.l.b16 %v822
    %v887 = vunpack.c.l.b16 %v823
    %v888 = vunpack.c.l.b16 %v824
    %v889 = vunpack.c.l.b16 %v825
    %v890 = vunpack.c.l.b16 %v826
    %v891 = vunpack.c.l.b16 %v827
    %v892 = vunpack.c.l.b16 %v828
    %v893 = vunpack.c.l.b16 %v829
    %v894 = vunpack.c.l.b16 %v830
    %v895 = vunpack.c.l.b16 %v831
    %v896 = vunpack.c.l.b16 %v832
    %v897 = vunpack.c.l.b16 %v833
    %v898 = vunpack.c.l.b16 %v834
    %v899 = vunpack.c.l.b16 %v835
    %v900 = vunpack.c.l.b16 %v836
    %v901 = vunpack.c.l.b16 %v837
    %v902 = vunpack.c.l.b16 %v838
    %v903 = vunpack.c.l.b16 %v839
    %v904 = vunpack.c.l.b16 %v840
    %v905 = vunpack.c.l.b16 %v841
    %v906 = vunpack.c.l.b16 %v842
    %v907 = vunpack.c.l.b16 %v843
    %v908 = vpack.c.b16 %v877, %v876
    %v909 = vpack.c.b16 %v879, %v878
    %v910 = vpack.c.b16 %v881, %v880
    %v911 = vpack.c.b16 %v883, %v882
    %v912 = vpack.c.b16 %v885, %v884
    %v913 = vpack.c.b16 %v887, %v886
    %v914 = vpack.c.b16 %v889, %v888
    %v915 = vpack.c.b16 %v891, %v890
    %v916 = vpack.c.b16 %v893, %v892
    %v917 = vpack.c.b16 %v895, %v894
    %v918 = vpack.c.b16 %v897, %v896
    %v919 = vpack.c.b16 %v899, %v898
    %v920 = vpack.c.b16 %v901, %v900
    %v921 = vpack.c.b16 %v903, %v902
    %v922 = vpack.c.b16 %v905, %v904
    %v923 = vpack.c.b16 %v907, %v906
    %940 = vmatprep.subr.bf16.mxu0 0
    %941 = vmatpush1.bf16.msra.mxu0 %v915
    %942 = vmatprep.subr.bf16.mxu0 0
    %943 = vmatpush1.bf16.msra.mxu0 %v914
    %944 = vmatprep.subr.bf16.mxu0 0
    %945 = vmatpush1.bf16.msra.mxu0 %v913
    %946 = vmatprep.subr.bf16.mxu0 0
    %947 = vmatpush1.bf16.msra.mxu0 %v912
    %948 = vmatprep.subr.bf16.mxu0 0
    %949 = vmatpush1.bf16.msra.mxu0 %v911
    %950 = vmatprep.subr.bf16.mxu0 0
    %951 = vmatpush1.bf16.msra.mxu0 %v910
    %952 = vmatprep.subr.bf16.mxu0 0
    %953 = vmatpush1.bf16.msra.mxu0 %v909
    %954 = vmatprep.subr.bf16.mxu0 0
    %955 = vmatpush1.bf16.msra.mxu0 %v908
    %956 = vmatprep.subr.bf16.mxu0 0
    %957 = vmatpush2.bf16.msra.mxu0 %v923
    %958 = vmatprep.subr.bf16.mxu0 0
    %959 = vmatpush2.bf16.msra.mxu0 %v922
    %960 = vmatprep.subr.bf16.mxu0 0
    %961 = vmatpush2.bf16.msra.mxu0 %v921
    %962 = vmatprep.subr.bf16.mxu0 0
    %963 = vmatpush2.bf16.msra.mxu0 %v920
    %964 = vmatprep.subr.bf16.mxu0 0
    %965 = vmatpush2.bf16.msra.mxu0 %v919
    %966 = vmatprep.subr.bf16.mxu0 0
    %967 = vmatpush2.bf16.msra.mxu0 %v918
    %968 = vmatprep.subr.bf16.mxu0 0
    %969 = vmatpush2.bf16.msra.mxu0 %v917
    %970 = vmatprep.subr.bf16.mxu0 0
    %971 = vmatpush2.bf16.msra.mxu0 %v916
    %972 = vmatprep.mubr.bf16.mxu0 %v811
    %973 = vmatmul.mubr.bf16.gmra.mxu0 %v810
    %v974 = vpop.f32.mrf.mxu0
    %v975 = vadd.f32 %v135, %v974
    %v976 = vpop.f32.mrf.mxu0
    %v977 = vpop.f32.mrf.mxu0
    %v978 = vpop.f32.mrf.mxu0
    %979 = vdwg.mxu0
    %v980 = vadd.f32 %v157, %v975
    %v981 = vadd.f32 %v980, %v128
    %v982 = vsel %vm141, %v981, 0.0
    %983 = vadd.xlane.f32.xlu0 %v982
    %v984 = vpop.xlane.xlu0 %983
    %v985 = vmul.f32 %v984, %v145
    %v986 = vsub.f32 %v981, %v985
    %v987 = vmul.f32 %v986, %v986
    %v988 = vsel %vm141, %v987, 0.0
    %989 = vadd.xlane.f32.xlu0 %v988
    %v990 = vpop.xlane.xlu0 %989
    %v991 = vmul.f32 %v990, %v145
    %v992 = vadd.f32 %v991, 1e-05
    %v993 = vrsqrt.pop %v992
    %v994 = vmul.f32 %v986, %v993
    %v995 = vmul.f32 %v994, %v136
    %v996 = vadd.f32 %v995, %v137
    %v997 = vpack.c.bf16 %v996, %v996
    %v998 = vld [vmem:[#allocation5] sm:$0xff]
    %v999 = vld [vmem:[#allocation5 + $0x8] sm:$0xff]
    %v1000 = vld [vmem:[#allocation5 + $0x10] sm:$0xff]
    %v1001 = vld [vmem:[#allocation5 + $0x18] sm:$0xff]
    %v1002 = vld [vmem:[#allocation5 + $0x20] sm:$0xff]
    %v1003 = vld [vmem:[#allocation5 + $0x28] sm:$0xff]
    %v1004 = vld [vmem:[#allocation5 + $0x30] sm:$0xff]
    %v1005 = vld [vmem:[#allocation5 + $0x38] sm:$0xff]
    %v1006 = vld [vmem:[#allocation5 + $0x40] sm:$0xff]
    %v1007 = vld [vmem:[#allocation5 + $0x48] sm:$0xff]
    %v1008 = vld [vmem:[#allocation5 + $0x50] sm:$0xff]
    %v1009 = vld [vmem:[#allocation5 + $0x58] sm:$0xff]
    %v1010 = vld [vmem:[#allocation5 + $0x60] sm:$0xff]
    %v1011 = vld [vmem:[#allocation5 + $0x68] sm:$0xff]
    %v1012 = vld [vmem:[#allocation5 + $0x70] sm:$0xff]
    %v1013 = vld [vmem:[#allocation5 + $0x78] sm:$0xff]
    %v1015 = vlaneseq
    %v1016 = vshrl.u32 %v1015, 7
    %v1017 = vsub.s32 0, %v1016
    %v1018 = vrot.slane %v139, %v1017
    %v1019 = vlaneseq
    %v1020 = vshrl.u32 %v1019, 7
    %v1021 = vsub.s32 1, %v1020
    %v1022 = vrot.slane %v139, %v1021
    %v1041 = vunpack.c.l.b16 %v998
    %v1042 = vunpack.c.h.b16 %v998
    %v1043 = vunpack.c.l.b16 %v999
    %v1044 = vunpack.c.h.b16 %v999
    %v1045 = vunpack.c.l.b16 %v1000
    %v1046 = vunpack.c.h.b16 %v1000
    %v1047 = vunpack.c.l.b16 %v1001
    %v1048 = vunpack.c.h.b16 %v1001
    %v1049 = vunpack.c.l.b16 %v1002
    %v1050 = vunpack.c.h.b16 %v1002
    %v1051 = vunpack.c.l.b16 %v1003
    %v1052 = vunpack.c.h.b16 %v1003
    %v1053 = vunpack.c.l.b16 %v1004
    %v1054 = vunpack.c.h.b16 %v1004
    %v1055 = vunpack.c.l.b16 %v1005
    %v1056 = vunpack.c.h.b16 %v1005
    %v1057 = vunpack.c.l.b16 %v1006
    %v1058 = vunpack.c.h.b16 %v1006
    %v1059 = vunpack.c.l.b16 %v1007
    %v1060 = vunpack.c.h.b16 %v1007
    %v1061 = vunpack.c.l.b16 %v1008
    %v1062 = vunpack.c.h.b16 %v1008
    %v1063 = vunpack.c.l.b16 %v1009
    %v1064 = vunpack.c.h.b16 %v1009
    %v1065 = vunpack.c.l.b16 %v1010
    %v1066 = vunpack.c.h.b16 %v1010
    %v1067 = vunpack.c.l.b16 %v1011
    %v1068 = vunpack.c.h.b16 %v1011
    %v1069 = vunpack.c.l.b16 %v1012
    %v1070 = vunpack.c.h.b16 %v1012
    %v1071 = vunpack.c.l.b16 %v1013
    %v1072 = vunpack.c.h.b16 %v1013
    %v1073 = vpack.c.b16 %v1043, %v1041
    %v1074 = vpack.c.b16 %v1044, %v1042
    %v1075 = vpack.c.b16 %v1047, %v1045
    %v1076 = vpack.c.b16 %v1048, %v1046
    %v1077 = vpack.c.b16 %v1051, %v1049
    %v1078 = vpack.c.b16 %v1052, %v1050
    %v1079 = vpack.c.b16 %v1055, %v1053
    %v1080 = vpack.c.b16 %v1056, %v1054
    %v1081 = vpack.c.b16 %v1059, %v1057
    %v1082 = vpack.c.b16 %v1060, %v1058
    %v1083 = vpack.c.b16 %v1063, %v1061
    %v1084 = vpack.c.b16 %v1064, %v1062
    %v1085 = vpack.c.b16 %v1067, %v1065
    %v1086 = vpack.c.b16 %v1068, %v1066
    %v1087 = vpack.c.b16 %v1071, %v1069
    %v1088 = vpack.c.b16 %v1072, %v1070
    %1105 = vmatprep.subr.bf16.mxu0 %v1088
    %1106 = vmatpush1.bf16.msra.mxu0 %v1087
    %1107 = vmatprep.subr.bf16.mxu0 %v1086
    %1108 = vmatpush1.bf16.msra.mxu0 %v1085
    %1109 = vmatprep.subr.bf16.mxu0 %v1084
    %1110 = vmatpush1.bf16.msra.mxu0 %v1083
    %1111 = vmatprep.subr.bf16.mxu0 %v1082
    %1112 = vmatpush1.bf16.msra.mxu0 %v1081
    %1113 = vmatprep.subr.bf16.mxu0 %v1080
    %1114 = vmatpush1.bf16.msra.mxu0 %v1079
    %1115 = vmatprep.subr.bf16.mxu0 %v1078
    %1116 = vmatpush1.bf16.msra.mxu0 %v1077
    %1117 = vmatprep.subr.bf16.mxu0 %v1076
    %1118 = vmatpush1.bf16.msra.mxu0 %v1075
    %1119 = vmatprep.subr.bf16.mxu0 %v1074
    %1120 = vmatpush1.bf16.msra.mxu0 %v1073
    %1121 = vmatprep.subr.bf16.mxu0 0
    %1122 = vmatpush2.bf16.msra.mxu0 0
    %1123 = vmatprep.subr.bf16.mxu0 0
    %1124 = vmatpush2.bf16.msra.mxu0 0
    %1125 = vmatprep.subr.bf16.mxu0 0
    %1126 = vmatpush2.bf16.msra.mxu0 0
    %1127 = vmatprep.subr.bf16.mxu0 0
    %1128 = vmatpush2.bf16.msra.mxu0 0
    %1129 = vmatprep.subr.bf16.mxu0 0
    %1130 = vmatpush2.bf16.msra.mxu0 0
    %1131 = vmatprep.subr.bf16.mxu0 0
    %1132 = vmatpush2.bf16.msra.mxu0 0
    %1133 = vmatprep.subr.bf16.mxu0 0
    %1134 = vmatpush2.bf16.msra.mxu0 0
    %1135 = vmatprep.subr.bf16.mxu0 0
    %1136 = vmatpush2.bf16.msra.mxu0 0
    %1137 = vmatprep.mubr.bf16.mxu0 0
    %1138 = vmatmul.mubr.bf16.gmra.mxu0 %v997
    %v1139 = vpop.f32.mrf.mxu0
    %v1140 = vadd.f32 %v1018, %v1139
    %v1141 = vpop.f32.mrf.mxu0
    %v1142 = vadd.f32 %v1022, %v1141
    %v1143 = vpop.f32.mrf.mxu0
    %v1144 = vpop.f32.mrf.mxu0
    %1145 = vdwg.mxu0
    %v1146 = vmul.f32 %v1140, 0.5
    %v1147 = vmul.f32 %v1142, 0.5
    %v1148 = vmul.f32 %v1140, 0.044715
    %v1149 = vmul.f32 %v1142, 0.044715
    %v1150 = vmul.f32 %v1148, %v1140
    %v1151 = vmul.f32 %v1149, %v1142
    %v1152 = vmul.f32 %v1150, %v1140
    %v1153 = vmul.f32 %v1151, %v1142
    %v1154 = vadd.f32 %v1140, %v1152
    %v1155 = vadd.f32 %v1142, %v1153
    %v1156 = vmul.f32 %v1154, 0.7978846
    %v1157 = vmul.f32 %v1155, 0.7978846
    %v1158 = vtanh.pop %v1156
    %v1159 = vtanh.pop %v1157
    %v1160 = vadd.f32 %v1158, 1.0
    %v1161 = vadd.f32 %v1159, 1.0
    %v1162 = vmul.f32 %v1146, %v1160
    %v1163 = vmul.f32 %v1147, %v1161
    %v1164 = vpack.c.bf16 %v1162, %v1162
    %v1165 = vpack.c.bf16 %v1163, %v1163
    %v1166 = vld [vmem:[#allocation7] sm:$0xf]
    %v1167 = vld [vmem:[#allocation7 + $0x4] sm:$0xf]
    %v1168 = vld [vmem:[#allocation7 + $0x8] sm:$0xf]
    %v1169 = vld [vmem:[#allocation7 + $0xc] sm:$0xf]
    %v1170 = vld [vmem:[#allocation7 + $0x10] sm:$0xf]
    %v1171 = vld [vmem:[#allocation7 + $0x14] sm:$0xf]
    %v1172 = vld [vmem:[#allocation7 + $0x18] sm:$0xf]
    %v1173 = vld [vmem:[#allocation7 + $0x1c] sm:$0xf]
    %v1174 = vld [vmem:[#allocation7 + $0x20] sm:$0xf]
    %v1175 = vld [vmem:[#allocation7 + $0x24] sm:$0xf]
    %v1176 = vld [vmem:[#allocation7 + $0x28] sm:$0xf]
    %v1177 = vld [vmem:[#allocation7 + $0x2c] sm:$0xf]
    %v1178 = vld [vmem:[#allocation7 + $0x30] sm:$0xf]
    %v1179 = vld [vmem:[#allocation7 + $0x34] sm:$0xf]
    %v1180 = vld [vmem:[#allocation7 + $0x38] sm:$0xf]
    %v1181 = vld [vmem:[#allocation7 + $0x3c] sm:$0xf]
    %v1182 = vld [vmem:[#allocation7 + $0x40] sm:$0xf]
    %v1183 = vld [vmem:[#allocation7 + $0x44] sm:$0xf]
    %v1184 = vld [vmem:[#allocation7 + $0x48] sm:$0xf]
    %v1185 = vld [vmem:[#allocation7 + $0x4c] sm:$0xf]
    %v1186 = vld [vmem:[#allocation7 + $0x50] sm:$0xf]
    %v1187 = vld [vmem:[#allocation7 + $0x54] sm:$0xf]
    %v1188 = vld [vmem:[#allocation7 + $0x58] sm:$0xf]
    %v1189 = vld [vmem:[#allocation7 + $0x5c] sm:$0xf]
    %v1190 = vld [vmem:[#allocation7 + $0x60] sm:$0xf]
    %v1191 = vld [vmem:[#allocation7 + $0x64] sm:$0xf]
    %v1192 = vld [vmem:[#allocation7 + $0x68] sm:$0xf]
    %v1193 = vld [vmem:[#allocation7 + $0x6c] sm:$0xf]
    %v1194 = vld [vmem:[#allocation7 + $0x70] sm:$0xf]
    %v1195 = vld [vmem:[#allocation7 + $0x74] sm:$0xf]
    %v1196 = vld [vmem:[#allocation7 + $0x78] sm:$0xf]
    %v1197 = vld [vmem:[#allocation7 + $0x7c] sm:$0xf]
    %v1230 = vunpack.c.l.b16 %v1166
    %v1231 = vunpack.c.l.b16 %v1167
    %v1232 = vunpack.c.l.b16 %v1168
    %v1233 = vunpack.c.l.b16 %v1169
    %v1234 = vunpack.c.l.b16 %v1170
    %v1235 = vunpack.c.l.b16 %v1171
    %v1236 = vunpack.c.l.b16 %v1172
    %v1237 = vunpack.c.l.b16 %v1173
    %v1238 = vunpack.c.l.b16 %v1174
    %v1239 = vunpack.c.l.b16 %v1175
    %v1240 = vunpack.c.l.b16 %v1176
    %v1241 = vunpack.c.l.b16 %v1177
    %v1242 = vunpack.c.l.b16 %v1178
    %v1243 = vunpack.c.l.b16 %v1179
    %v1244 = vunpack.c.l.b16 %v1180
    %v1245 = vunpack.c.l.b16 %v1181
    %v1246 = vunpack.c.l.b16 %v1182
    %v1247 = vunpack.c.l.b16 %v1183
    %v1248 = vunpack.c.l.b16 %v1184
    %v1249 = vunpack.c.l.b16 %v1185
    %v1250 = vunpack.c.l.b16 %v1186
    %v1251 = vunpack.c.l.b16 %v1187
    %v1252 = vunpack.c.l.b16 %v1188
    %v1253 = vunpack.c.l.b16 %v1189
    %v1254 = vunpack.c.l.b16 %v1190
    %v1255 = vunpack.c.l.b16 %v1191
    %v1256 = vunpack.c.l.b16 %v1192
    %v1257 = vunpack.c.l.b16 %v1193
    %v1258 = vunpack.c.l.b16 %v1194
    %v1259 = vunpack.c.l.b16 %v1195
    %v1260 = vunpack.c.l.b16 %v1196
    %v1261 = vunpack.c.l.b16 %v1197
    %v1262 = vpack.c.b16 %v1231, %v1230
    %v1263 = vpack.c.b16 %v1233, %v1232
    %v1264 = vpack.c.b16 %v1235, %v1234
    %v1265 = vpack.c.b16 %v1237, %v1236
    %v1266 = vpack.c.b16 %v1239, %v1238
    %v1267 = vpack.c.b16 %v1241, %v1240
    %v1268 = vpack.c.b16 %v1243, %v1242
    %v1269 = vpack.c.b16 %v1245, %v1244
    %v1270 = vpack.c.b16 %v1247, %v1246
    %v1271 = vpack.c.b16 %v1249, %v1248
    %v1272 = vpack.c.b16 %v1251, %v1250
    %v1273 = vpack.c.b16 %v1253, %v1252
    %v1274 = vpack.c.b16 %v1255, %v1254
    %v1275 = vpack.c.b16 %v1257, %v1256
    %v1276 = vpack.c.b16 %v1259, %v1258
    %v1277 = vpack.c.b16 %v1261, %v1260
    %1294 = vmatprep.subr.bf16.mxu0 0
    %1295 = vmatpush1.bf16.msra.mxu0 %v1269
    %1296 = vmatprep.subr.bf16.mxu0 0
    %1297 = vmatpush1.bf16.msra.mxu0 %v1268
    %1298 = vmatprep.subr.bf16.mxu0 0
    %1299 = vmatpush1.bf16.msra.mxu0 %v1267
    %1300 = vmatprep.subr.bf16.mxu0 0
    %1301 = vmatpush1.bf16.msra.mxu0 %v1266
    %1302 = vmatprep.subr.bf16.mxu0 0
    %1303 = vmatpush1.bf16.msra.mxu0 %v1265
    %1304 = vmatprep.subr.bf16.mxu0 0
    %1305 = vmatpush1.bf16.msra.mxu0 %v1264
    %1306 = vmatprep.subr.bf16.mxu0 0
    %1307 = vmatpush1.bf16.msra.mxu0 %v1263
    %1308 = vmatprep.subr.bf16.mxu0 0
    %1309 = vmatpush1.bf16.msra.mxu0 %v1262
    %1310 = vmatprep.subr.bf16.mxu0 0
    %1311 = vmatpush2.bf16.msra.mxu0 %v1277
    %1312 = vmatprep.subr.bf16.mxu0 0
    %1313 = vmatpush2.bf16.msra.mxu0 %v1276
    %1314 = vmatprep.subr.bf16.mxu0 0
    %1315 = vmatpush2.bf16.msra.mxu0 %v1275
    %1316 = vmatprep.subr.bf16.mxu0 0
    %1317 = vmatpush2.bf16.msra.mxu0 %v1274
    %1318 = vmatprep.subr.bf16.mxu0 0
    %1319 = vmatpush2.bf16.msra.mxu0 %v1273
    %1320 = vmatprep.subr.bf16.mxu0 0
    %1321 = vmatpush2.bf16.msra.mxu0 %v1272
    %1322 = vmatprep.subr.bf16.mxu0 0
    %1323 = vmatpush2.bf16.msra.mxu0 %v1271
    %1324 = vmatprep.subr.bf16.mxu0 0
    %1325 = vmatpush2.bf16.msra.mxu0 %v1270
    %1326 = vmatprep.mubr.bf16.mxu0 %v1165
    %1327 = vmatmul.mubr.bf16.gmra.mxu0 %v1164
    %v1328 = vpop.f32.mrf.mxu0
    %v1329 = vadd.f32 %v140, %v1328
    %v1330 = vpop.f32.mrf.mxu0
    %v1331 = vpop.f32.mrf.mxu0
    %v1332 = vpop.f32.mrf.mxu0
    %1333 = vdwg.mxu0
    %v1334 = vadd.f32 %v1329, %v981
    %s1335 = scalar_lea.vmem %s7, 48
    %v1336 = vld [vmem:[%s1335] ss:$8 sm:$0x3]
    %v1337 = vld [vmem:[%s7 + $0x31] ss:$0 sm:$0xff]
    %v1338 = vpack.c.bf16 %v1334, %v1334
    %v1339 = vld [vmem:[#allocation8] sm:$0xff]
    %v1340 = vld [vmem:[#allocation8 + $0x8] sm:$0xff]
    %v1341 = vld [vmem:[#allocation8 + $0x10] sm:$0xff]
    %v1342 = vld [vmem:[#allocation8 + $0x18] sm:$0xff]
    %v1343 = vld [vmem:[#allocation8 + $0x20] sm:$0xff]
    %v1344 = vld [vmem:[#allocation8 + $0x28] sm:$0xff]
    %v1345 = vld [vmem:[#allocation8 + $0x30] sm:$0xff]
    %v1346 = vld [vmem:[#allocation8 + $0x38] sm:$0xff]
    %v1347 = vld [vmem:[#allocation8 + $0x40] sm:$0xff]
    %v1348 = vld [vmem:[#allocation8 + $0x48] sm:$0xff]
    %v1349 = vld [vmem:[#allocation8 + $0x50] sm:$0xff]
    %v1350 = vld [vmem:[#allocation8 + $0x58] sm:$0xff]
    %v1351 = vld [vmem:[#allocation8 + $0x60] sm:$0xff]
    %v1352 = vld [vmem:[#allocation8 + $0x68] sm:$0xff]
    %v1353 = vld [vmem:[#allocation8 + $0x70] sm:$0xff]
    %v1354 = vld [vmem:[#allocation8 + $0x78] sm:$0xff]
    %v1356 = vlaneseq
    %v1357 = vshrl.u32 %v1356, 7
    %v1358 = vsub.s32 0, %v1357
    %v1359 = vrot.slane %v1336, %v1358
    %v1360 = vlaneseq
    %v1361 = vshrl.u32 %v1360, 7
    %v1362 = vsub.s32 1, %v1361
    %v1363 = vrot.slane %v1336, %v1362
    %v1382 = vunpack.c.l.b16 %v1339
    %v1383 = vunpack.c.h.b16 %v1339
    %v1384 = vunpack.c.l.b16 %v1340
    %v1385 = vunpack.c.h.b16 %v1340
    %v1386 = vunpack.c.l.b16 %v1341
    %v1387 = vunpack.c.h.b16 %v1341
    %v1388 = vunpack.c.l.b16 %v1342
    %v1389 = vunpack.c.h.b16 %v1342
    %v1390 = vunpack.c.l.b16 %v1343
    %v1391 = vunpack.c.h.b16 %v1343
    %v1392 = vunpack.c.l.b16 %v1344
    %v1393 = vunpack.c.h.b16 %v1344
    %v1394 = vunpack.c.l.b16 %v1345
    %v1395 = vunpack.c.h.b16 %v1345
    %v1396 = vunpack.c.l.b16 %v1346
    %v1397 = vunpack.c.h.b16 %v1346
    %v1398 = vunpack.c.l.b16 %v1347
    %v1399 = vunpack.c.h.b16 %v1347
    %v1400 = vunpack.c.l.b16 %v1348
    %v1401 = vunpack.c.h.b16 %v1348
    %v1402 = vunpack.c.l.b16 %v1349
    %v1403 = vunpack.c.h.b16 %v1349
    %v1404 = vunpack.c.l.b16 %v1350
    %v1405 = vunpack.c.h.b16 %v1350
    %v1406 = vunpack.c.l.b16 %v1351
    %v1407 = vunpack.c.h.b16 %v1351
    %v1408 = vunpack.c.l.b16 %v1352
    %v1409 = vunpack.c.h.b16 %v1352
    %v1410 = vunpack.c.l.b16 %v1353
    %v1411 = vunpack.c.h.b16 %v1353
    %v1412 = vunpack.c.l.b16 %v1354
    %v1413 = vunpack.c.h.b16 %v1354
    %v1414 = vpack.c.b16 %v1384, %v1382
    %v1415 = vpack.c.b16 %v1385, %v1383
    %v1416 = vpack.c.b16 %v1388, %v1386
    %v1417 = vpack.c.b16 %v1389, %v1387
    %v1418 = vpack.c.b16 %v1392, %v1390
    %v1419 = vpack.c.b16 %v1393, %v1391
    %v1420 = vpack.c.b16 %v1396, %v1394
    %v1421 = vpack.c.b16 %v1397, %v1395
    %v1422 = vpack.c.b16 %v1400, %v1398
    %v1423 = vpack.c.b16 %v1401, %v1399
    %v1424 = vpack.c.b16 %v1404, %v1402
    %v1425 = vpack.c.b16 %v1405, %v1403
    %v1426 = vpack.c.b16 %v1408, %v1406
    %v1427 = vpack.c.b16 %v1409, %v1407
    %v1428 = vpack.c.b16 %v1412, %v1410
    %v1429 = vpack.c.b16 %v1413, %v1411
    %1446 = vmatprep.subr.bf16.mxu0 %v1429
    %1447 = vmatpush1.bf16.msra.mxu0 %v1428
    %1448 = vmatprep.subr.bf16.mxu0 %v1427
    %1449 = vmatpush1.bf16.msra.mxu0 %v1426
    %1450 = vmatprep.subr.bf16.mxu0 %v1425
    %1451 = vmatpush1.bf16.msra.mxu0 %v1424
    %1452 = vmatprep.subr.bf16.mxu0 %v1423
    %1453 = vmatpush1.bf16.msra.mxu0 %v1422
    %1454 = vmatprep.subr.bf16.mxu0 %v1421
    %1455 = vmatpush1.bf16.msra.mxu0 %v1420
    %1456 = vmatprep.subr.bf16.mxu0 %v1419
    %1457 = vmatpush1.bf16.msra.mxu0 %v1418
    %1458 = vmatprep.subr.bf16.mxu0 %v1417
    %1459 = vmatpush1.bf16.msra.mxu0 %v1416
    %1460 = vmatprep.subr.bf16.mxu0 %v1415
    %1461 = vmatpush1.bf16.msra.mxu0 %v1414
    %1462 = vmatprep.subr.bf16.mxu0 0
    %1463 = vmatpush2.bf16.msra.mxu0 0
    %1464 = vmatprep.subr.bf16.mxu0 0
    %1465 = vmatpush2.bf16.msra.mxu0 0
    %1466 = vmatprep.subr.bf16.mxu0 0
    %1467 = vmatpush2.bf16.msra.mxu0 0
    %1468 = vmatprep.subr.bf16.mxu0 0
    %1469 = vmatpush2.bf16.msra.mxu0 0
    %1470 = vmatprep.subr.bf16.mxu0 0
    %1471 = vmatpush2.bf16.msra.mxu0 0
    %1472 = vmatprep.subr.bf16.mxu0 0
    %1473 = vmatpush2.bf16.msra.mxu0 0
    %1474 = vmatprep.subr.bf16.mxu0 0
    %1475 = vmatpush2.bf16.msra.mxu0 0
    %1476 = vmatprep.subr.bf16.mxu0 0
    %1477 = vmatpush2.bf16.msra.mxu0 0
    %1478 = vmatprep.mubr.bf16.mxu0 0
    %1479 = vmatmul.mubr.bf16.gmra.mxu0 %v1338
    %v1480 = vpop.f32.mrf.mxu0
    %v1481 = vadd.f32 %v1359, %v1480
    %v1482 = vpop.f32.mrf.mxu0
    %v1483 = vadd.f32 %v1363, %v1482
    %v1484 = vpop.f32.mrf.mxu0
    %v1485 = vpop.f32.mrf.mxu0
    %1486 = vdwg.mxu0
    %v1487 = vpack.c.bf16 %v1481, %v1481
    %v1488 = vpack.c.bf16 %v1483, %v1483
    %v1489 = vld [vmem:[#allocation10] sm:$0xf]
    %v1490 = vld [vmem:[#allocation10 + $0x4] sm:$0xf]
    %v1491 = vld [vmem:[#allocation10 + $0x8] sm:$0xf]
    %v1492 = vld [vmem:[#allocation10 + $0xc] sm:$0xf]
    %v1493 = vld [vmem:[#allocation10 + $0x10] sm:$0xf]
    %v1494 = vld [vmem:[#allocation10 + $0x14] sm:$0xf]
    %v1495 = vld [vmem:[#allocation10 + $0x18] sm:$0xf]
    %v1496 = vld [vmem:[#allocation10 + $0x1c] sm:$0xf]
    %v1497 = vld [vmem:[#allocation10 + $0x20] sm:$0xf]
    %v1498 = vld [vmem:[#allocation10 + $0x24] sm:$0xf]
    %v1499 = vld [vmem:[#allocation10 + $0x28] sm:$0xf]
    %v1500 = vld [vmem:[#allocation10 + $0x2c] sm:$0xf]
    %v1501 = vld [vmem:[#allocation10 + $0x30] sm:$0xf]
    %v1502 = vld [vmem:[#allocation10 + $0x34] sm:$0xf]
    %v1503 = vld [vmem:[#allocation10 + $0x38] sm:$0xf]
    %v1504 = vld [vmem:[#allocation10 + $0x3c] sm:$0xf]
    %v1505 = vld [vmem:[#allocation10 + $0x40] sm:$0xf]
    %v1506 = vld [vmem:[#allocation10 + $0x44] sm:$0xf]
    %v1507 = vld [vmem:[#allocation10 + $0x48] sm:$0xf]
    %v1508 = vld [vmem:[#allocation10 + $0x4c] sm:$0xf]
    %v1509 = vld [vmem:[#allocation10 + $0x50] sm:$0xf]
    %v1510 = vld [vmem:[#allocation10 + $0x54] sm:$0xf]
    %v1511 = vld [vmem:[#allocation10 + $0x58] sm:$0xf]
    %v1512 = vld [vmem:[#allocation10 + $0x5c] sm:$0xf]
    %v1513 = vld [vmem:[#allocation10 + $0x60] sm:$0xf]
    %v1514 = vld [vmem:[#allocation10 + $0x64] sm:$0xf]
    %v1515 = vld [vmem:[#allocation10 + $0x68] sm:$0xf]
    %v1516 = vld [vmem:[#allocation10 + $0x6c] sm:$0xf]
    %v1517 = vld [vmem:[#allocation10 + $0x70] sm:$0xf]
    %v1518 = vld [vmem:[#allocation10 + $0x74] sm:$0xf]
    %v1519 = vld [vmem:[#allocation10 + $0x78] sm:$0xf]
    %v1520 = vld [vmem:[#allocation10 + $0x7c] sm:$0xf]
    %v1553 = vunpack.c.l.b16 %v1489
    %v1554 = vunpack.c.l.b16 %v1490
    %v1555 = vunpack.c.l.b16 %v1491
    %v1556 = vunpack.c.l.b16 %v1492
    %v1557 = vunpack.c.l.b16 %v1493
    %v1558 = vunpack.c.l.b16 %v1494
    %v1559 = vunpack.c.l.b16 %v1495
    %v1560 = vunpack.c.l.b16 %v1496
    %v1561 = vunpack.c.l.b16 %v1497
    %v1562 = vunpack.c.l.b16 %v1498
    %v1563 = vunpack.c.l.b16 %v1499
    %v1564 = vunpack.c.l.b16 %v1500
    %v1565 = vunpack.c.l.b16 %v1501
    %v1566 = vunpack.c.l.b16 %v1502
    %v1567 = vunpack.c.l.b16 %v1503
    %v1568 = vunpack.c.l.b16 %v1504
    %v1569 = vunpack.c.l.b16 %v1505
    %v1570 = vunpack.c.l.b16 %v1506
    %v1571 = vunpack.c.l.b16 %v1507
    %v1572 = vunpack.c.l.b16 %v1508
    %v1573 = vunpack.c.l.b16 %v1509
    %v1574 = vunpack.c.l.b16 %v1510
    %v1575 = vunpack.c.l.b16 %v1511
    %v1576 = vunpack.c.l.b16 %v1512
    %v1577 = vunpack.c.l.b16 %v1513
    %v1578 = vunpack.c.l.b16 %v1514
    %v1579 = vunpack.c.l.b16 %v1515
    %v1580 = vunpack.c.l.b16 %v1516
    %v1581 = vunpack.c.l.b16 %v1517
    %v1582 = vunpack.c.l.b16 %v1518
    %v1583 = vunpack.c.l.b16 %v1519
    %v1584 = vunpack.c.l.b16 %v1520
    %v1585 = vpack.c.b16 %v1554, %v1553
    %v1586 = vpack.c.b16 %v1556, %v1555
    %v1587 = vpack.c.b16 %v1558, %v1557
    %v1588 = vpack.c.b16 %v1560, %v1559
    %v1589 = vpack.c.b16 %v1562, %v1561
    %v1590 = vpack.c.b16 %v1564, %v1563
    %v1591 = vpack.c.b16 %v1566, %v1565
    %v1592 = vpack.c.b16 %v1568, %v1567
    %v1593 = vpack.c.b16 %v1570, %v1569
    %v1594 = vpack.c.b16 %v1572, %v1571
    %v1595 = vpack.c.b16 %v1574, %v1573
    %v1596 = vpack.c.b16 %v1576, %v1575
    %v1597 = vpack.c.b16 %v1578, %v1577
    %v1598 = vpack.c.b16 %v1580, %v1579
    %v1599 = vpack.c.b16 %v1582, %v1581
    %v1600 = vpack.c.b16 %v1584, %v1583
    %1617 = vmatprep.subr.bf16.mxu0 0
    %1618 = vmatpush1.bf16.msra.mxu0 %v1592
    %1619 = vmatprep.subr.bf16.mxu0 0
    %1620 = vmatpush1.bf16.msra.mxu0 %v1591
    %1621 = vmatprep.subr.bf16.mxu0 0
    %1622 = vmatpush1.bf16.msra.mxu0 %v1590
    %1623 = vmatprep.subr.bf16.mxu0 0
    %1624 = vmatpush1.bf16.msra.mxu0 %v1589
    %1625 = vmatprep.subr.bf16.mxu0 0
    %1626 = vmatpush1.bf16.msra.mxu0 %v1588
    %1627 = vmatprep.subr.bf16.mxu0 0
    %1628 = vmatpush1.bf16.msra.mxu0 %v1587
    %1629 = vmatprep.subr.bf16.mxu0 0
    %1630 = vmatpush1.bf16.msra.mxu0 %v1586
    %1631 = vmatprep.subr.bf16.mxu0 0
    %1632 = vmatpush1.bf16.msra.mxu0 %v1585
    %1633 = vmatprep.subr.bf16.mxu0 0
    %1634 = vmatpush2.bf16.msra.mxu0 %v1600
    %1635 = vmatprep.subr.bf16.mxu0 0
    %1636 = vmatpush2.bf16.msra.mxu0 %v1599
    %1637 = vmatprep.subr.bf16.mxu0 0
    %1638 = vmatpush2.bf16.msra.mxu0 %v1598
    %1639 = vmatprep.subr.bf16.mxu0 0
    %1640 = vmatpush2.bf16.msra.mxu0 %v1597
    %1641 = vmatprep.subr.bf16.mxu0 0
    %1642 = vmatpush2.bf16.msra.mxu0 %v1596
    %1643 = vmatprep.subr.bf16.mxu0 0
    %1644 = vmatpush2.bf16.msra.mxu0 %v1595
    %1645 = vmatprep.subr.bf16.mxu0 0
    %1646 = vmatpush2.bf16.msra.mxu0 %v1594
    %1647 = vmatprep.subr.bf16.mxu0 0
    %1648 = vmatpush2.bf16.msra.mxu0 %v1593
    %1649 = vmatprep.mubr.bf16.mxu0 %v1488
    %1650 = vmatmul.mubr.bf16.gmra.mxu0 %v1487
    %v1651 = vpop.f32.mrf.mxu0
    %v1652 = vadd.f32 %v1337, %v1651
    %v1653 = vpop.f32.mrf.mxu0
    %v1654 = vpop.f32.mrf.mxu0
    %v1655 = vpop.f32.mrf.mxu0
    %1656 = vdwg.mxu0
    %v1657 = vadd.f32 %v1334, %v1652
    %v1658 = vadd.f32 %v1657, %v1334
    %v1659 = vsel %vm663, %v1658, %v1334
    %1660 = vst [vmem:[#allocation11] sm:$0xf] %v1659
    %s1661 = scalar_lea.vmem %s0, 4
    %v1662 = vld [vmem:[%s1661] sm:$0xf]
    %s1663 = scalar_lea.vmem %s7, 96
    %v1664 = vld [vmem:[%s1663] ss:$0 sm:$0xff]
    %v1665 = vld [vmem:[%s1663 + $0x1] ss:$0 sm:$0xff]
    %s1666 = scalar_lea.vmem %s1663, 2
    %v1667 = vld [vmem:[%s1666] ss:$8 sm:$0xf]
    %v1668 = vld [vmem:[%s1666] ss:$8 sm:$0x30]
    %v1669 = vor.u32 %v1667, %v1668
    %v1670 = vld [vmem:[%s1663 + $0x3] ss:$0 sm:$0xff]
    %v1671 = vld [vmem:[%s1663 + $0x4] ss:$0 sm:$0xff]
    %v1672 = vld [vmem:[%s1663 + $0x5] ss:$0 sm:$0xff]
    %s1673 = scalar_lea.vmem %s1663, 6
    %v1674 = vld [vmem:[%s1673] ss:$8 sm:$0x3]
    %v1675 = vld [vmem:[%s1663 + $0x7] ss:$0 sm:$0xff]
    %v1676 = vsel %vm141, %v1662, 0.0
    %1677 = vadd.xlane.f32.xlu0 %v1676
    %v1678 = vpop.xlane.xlu0 %1677
    %v1679 = vmul.f32 %v1678, %v145
    %v1680 = vsub.f32 %v1662, %v1679
    %v1681 = vmul.f32 %v1680, %v1680
    %v1682 = vsel %vm141, %v1681, 0.0
    %1683 = vadd.xlane.f32.xlu0 %v1682
    %v1684 = vpop.xlane.xlu0 %1683
    %v1685 = vmul.f32 %v1684, %v145
    %v1686 = vadd.f32 %v1685, 1e-05
    %v1687 = vrsqrt.pop %v1686
    %v1688 = vmul.f32 %v1680, %v1687
    %v1689 = vmul.f32 %v1688, %v1664
    %v1690 = vadd.f32 %v1689, %v1665
    %v1691 = vpack.c.bf16 %v1690, %v1690
    %s1692 = scalar_lea.vmem [#allocation2], 384
    %v1693 = vld [vmem:[%s1692] sm:$0xff]
    %v1694 = vld [vmem:[%s1692 + $0x8] sm:$0xff]
    %v1695 = vld [vmem:[%s1692 + $0x10] sm:$0xff]
    %v1696 = vld [vmem:[%s1692 + $0x18] sm:$0xff]
    %v1697 = vld [vmem:[%s1692 + $0x20] sm:$0xff]
    %v1698 = vld [vmem:[%s1692 + $0x28] sm:$0xff]
    %v1699 = vld [vmem:[%s1692 + $0x30] sm:$0xff]
    %v1700 = vld [vmem:[%s1692 + $0x38] sm:$0xff]
    %v1701 = vld [vmem:[%s1692 + $0x40] sm:$0xff]
    %v1702 = vld [vmem:[%s1692 + $0x48] sm:$0xff]
    %v1703 = vld [vmem:[%s1692 + $0x50] sm:$0xff]
    %v1704 = vld [vmem:[%s1692 + $0x58] sm:$0xff]
    %v1705 = vld [vmem:[%s1692 + $0x60] sm:$0xff]
    %v1706 = vld [vmem:[%s1692 + $0x68] sm:$0xff]
    %v1707 = vld [vmem:[%s1692 + $0x70] sm:$0xff]
    %v1708 = vld [vmem:[%s1692 + $0x78] sm:$0xff]
    %v1709 = vld [vmem:[%s1692 + $0x80] sm:$0xff]
    %v1710 = vld [vmem:[%s1692 + $0x88] sm:$0xff]
    %v1711 = vld [vmem:[%s1692 + $0x90] sm:$0xff]
    %v1712 = vld [vmem:[%s1692 + $0x98] sm:$0xff]
    %v1713 = vld [vmem:[%s1692 + $0xa0] sm:$0xff]
    %v1714 = vld [vmem:[%s1692 + $0xa8] sm:$0xff]
    %v1715 = vld [vmem:[%s1692 + $0xb0] sm:$0xff]
    %v1716 = vld [vmem:[%s1692 + $0xb8] sm:$0xff]
    %v1717 = vld [vmem:[%s1692 + $0xc0] sm:$0xff]
    %v1718 = vld [vmem:[%s1692 + $0xc8] sm:$0xff]
    %v1719 = vld [vmem:[%s1692 + $0xd0] sm:$0xff]
    %v1720 = vld [vmem:[%s1692 + $0xd8] sm:$0xff]
    %v1721 = vld [vmem:[%s1692 + $0xe0] sm:$0xff]
    %v1722 = vld [vmem:[%s1692 + $0xe8] sm:$0xff]
    %v1723 = vld [vmem:[%s1692 + $0xf0] sm:$0xff]
    %v1724 = vld [vmem:[%s1692 + $0xf8] sm:$0xff]
    %v1725 = vld [vmem:[%s1692 + $0x100] sm:$0xff]
    %v1726 = vld [vmem:[%s1692 + $0x108] sm:$0xff]
    %v1727 = vld [vmem:[%s1692 + $0x110] sm:$0xff]
    %v1728 = vld [vmem:[%s1692 + $0x118] sm:$0xff]
    %v1729 = vld [vmem:[%s1692 + $0x120] sm:$0xff]
    %v1730 = vld [vmem:[%s1692 + $0x128] sm:$0xff]
    %v1731 = vld [vmem:[%s1692 + $0x130] sm:$0xff]
    %v1732 = vld [vmem:[%s1692 + $0x138] sm:$0xff]
    %v1733 = vld [vmem:[%s1692 + $0x140] sm:$0xff]
    %v1734 = vld [vmem:[%s1692 + $0x148] sm:$0xff]
    %v1735 = vld [vmem:[%s1692 + $0x150] sm:$0xff]
    %v1736 = vld [vmem:[%s1692 + $0x158] sm:$0xff]
    %v1737 = vld [vmem:[%s1692 + $0x160] sm:$0xff]
    %v1738 = vld [vmem:[%s1692 + $0x168] sm:$0xff]
    %v1739 = vld [vmem:[%s1692 + $0x170] sm:$0xff]
    %v1740 = vld [vmem:[%s1692 + $0x178] sm:$0xff]
    %v1742 = vlaneseq
    %v1743 = vshrl.u32 %v1742, 7
    %v1744 = vsub.s32 0, %v1743
    %v1745 = vrot.slane %v1669, %v1744
    %v1746 = vlaneseq
    %v1747 = vshrl.u32 %v1746, 7
    %v1748 = vsub.s32 1, %v1747
    %v1749 = vrot.slane %v1669, %v1748
    %v1750 = vlaneseq
    %v1751 = vshrl.u32 %v1750, 7
    %v1752 = vsub.s32 2, %v1751
    %v1753 = vrot.slane %v1669, %v1752
    %v1754 = vlaneseq
    %v1755 = vshrl.u32 %v1754, 7
    %v1756 = vsub.s32 3, %v1755
    %v1757 = vrot.slane %v1669, %v1756
    %v1758 = vlaneseq
    %v1759 = vshrl.u32 %v1758, 7
    %v1760 = vsub.s32 4, %v1759
    %v1761 = vrot.slane %v1669, %v1760
    %v1762 = vlaneseq
    %v1763 = vshrl.u32 %v1762, 7
    %v1764 = vsub.s32 5, %v1763
    %v1765 = vrot.slane %v1669, %v1764
    %v1820 = vunpack.c.l.b16 %v1693
    %v1821 = vunpack.c.h.b16 %v1693
    %v1822 = vunpack.c.l.b16 %v1694
    %v1823 = vunpack.c.h.b16 %v1694
    %v1824 = vunpack.c.l.b16 %v1695
    %v1825 = vunpack.c.h.b16 %v1695
    %v1826 = vunpack.c.l.b16 %v1696
    %v1827 = vunpack.c.h.b16 %v1696
    %v1828 = vunpack.c.l.b16 %v1697
    %v1829 = vunpack.c.h.b16 %v1697
    %v1830 = vunpack.c.l.b16 %v1698
    %v1831 = vunpack.c.h.b16 %v1698
    %v1832 = vunpack.c.l.b16 %v1699
    %v1833 = vunpack.c.h.b16 %v1699
    %v1834 = vunpack.c.l.b16 %v1700
    %v1835 = vunpack.c.h.b16 %v1700
    %v1836 = vunpack.c.l.b16 %v1701
    %v1837 = vunpack.c.h.b16 %v1701
    %v1838 = vunpack.c.l.b16 %v1702
    %v1839 = vunpack.c.h.b16 %v1702
    %v1840 = vunpack.c.l.b16 %v1703
    %v1841 = vunpack.c.h.b16 %v1703
    %v1842 = vunpack.c.l.b16 %v1704
    %v1843 = vunpack.c.h.b16 %v1704
    %v1844 = vunpack.c.l.b16 %v1705
    %v1845 = vunpack.c.h.b16 %v1705
    %v1846 = vunpack.c.l.b16 %v1706
    %v1847 = vunpack.c.h.b16 %v1706
    %v1848 = vunpack.c.l.b16 %v1707
    %v1849 = vunpack.c.h.b16 %v1707
    %v1850 = vunpack.c.l.b16 %v1708
    %v1851 = vunpack.c.h.b16 %v1708
    %v1852 = vunpack.c.l.b16 %v1709
    %v1853 = vunpack.c.h.b16 %v1709
    %v1854 = vunpack.c.l.b16 %v1710
    %v1855 = vunpack.c.h.b16 %v1710
    %v1856 = vunpack.c.l.b16 %v1711
    %v1857 = vunpack.c.h.b16 %v1711
    %v1858 = vunpack.c.l.b16 %v1712
    %v1859 = vunpack.c.h.b16 %v1712
    %v1860 = vunpack.c.l.b16 %v1713
    %v1861 = vunpack.c.h.b16 %v1713
    %v1862 = vunpack.c.l.b16 %v1714
    %v1863 = vunpack.c.h.b16 %v1714
    %v1864 = vunpack.c.l.b16 %v1715
    %v1865 = vunpack.c.h.b16 %v1715
    %v1866 = vunpack.c.l.b16 %v1716
    %v1867 = vunpack.c.h.b16 %v1716
    %v1868 = vunpack.c.l.b16 %v1717
    %v1869 = vunpack.c.h.b16 %v1717
    %v1870 = vunpack.c.l.b16 %v1718
    %v1871 = vunpack.c.h.b16 %v1718
    %v1872 = vunpack.c.l.b16 %v1719
    %v1873 = vunpack.c.h.b16 %v1719
    %v1874 = vunpack.c.l.b16 %v1720
    %v1875 = vunpack.c.h.b16 %v1720
    %v1876 = vunpack.c.l.b16 %v1721
    %v1877 = vunpack.c.h.b16 %v1721
    %v1878 = vunpack.c.l.b16 %v1722
    %v1879 = vunpack.c.h.b16 %v1722
    %v1880 = vunpack.c.l.b16 %v1723
    %v1881 = vunpack.c.h.b16 %v1723
    %v1882 = vunpack.c.l.b16 %v1724
    %v1883 = vunpack.c.h.b16 %v1724
    %v1884 = vunpack.c.l.b16 %v1725
    %v1885 = vunpack.c.h.b16 %v1725
    %v1886 = vunpack.c.l.b16 %v1726
    %v1887 = vunpack.c.h.b16 %v1726
    %v1888 = vunpack.c.l.b16 %v1727
    %v1889 = vunpack.c.h.b16 %v1727
    %v1890 = vunpack.c.l.b16 %v1728
    %v1891 = vunpack.c.h.b16 %v1728
    %v1892 = vunpack.c.l.b16 %v1729
    %v1893 = vunpack.c.h.b16 %v1729
    %v1894 = vunpack.c.l.b16 %v1730
    %v1895 = vunpack.c.h.b16 %v1730
    %v1896 = vunpack.c.l.b16 %v1731
    %v1897 = vunpack.c.h.b16 %v1731
    %v1898 = vunpack.c.l.b16 %v1732
    %v1899 = vunpack.c.h.b16 %v1732
    %v1900 = vunpack.c.l.b16 %v1733
    %v1901 = vunpack.c.h.b16 %v1733
    %v1902 = vunpack.c.l.b16 %v1734
    %v1903 = vunpack.c.h.b16 %v1734
    %v1904 = vunpack.c.l.b16 %v1735
    %v1905 = vunpack.c.h.b16 %v1735
    %v1906 = vunpack.c.l.b16 %v1736
    %v1907 = vunpack.c.h.b16 %v1736
    %v1908 = vunpack.c.l.b16 %v1737
    %v1909 = vunpack.c.h.b16 %v1737
    %v1910 = vunpack.c.l.b16 %v1738
    %v1911 = vunpack.c.h.b16 %v1738
    %v1912 = vunpack.c.l.b16 %v1739
    %v1913 = vunpack.c.h.b16 %v1739
    %v1914 = vunpack.c.l.b16 %v1740
    %v1915 = vunpack.c.h.b16 %v1740
    %v1916 = vpack.c.b16 %v1826, %v1820
    %v1917 = vpack.c.b16 %v1827, %v1821
    %v1918 = vpack.c.b16 %v1828, %v1822
    %v1919 = vpack.c.b16 %v1829, %v1823
    %v1920 = vpack.c.b16 %v1830, %v1824
    %v1921 = vpack.c.b16 %v1831, %v1825
    %v1922 = vpack.c.b16 %v1838, %v1832
    %v1923 = vpack.c.b16 %v1839, %v1833
    %v1924 = vpack.c.b16 %v1840, %v1834
    %v1925 = vpack.c.b16 %v1841, %v1835
    %v1926 = vpack.c.b16 %v1842, %v1836
    %v1927 = vpack.c.b16 %v1843, %v1837
    %v1928 = vpack.c.b16 %v1850, %v1844
    %v1929 = vpack.c.b16 %v1851, %v1845
    %v1930 = vpack.c.b16 %v1852, %v1846
    %v1931 = vpack.c.b16 %v1853, %v1847
    %v1932 = vpack.c.b16 %v1854, %v1848
    %v1933 = vpack.c.b16 %v1855, %v1849
    %v1934 = vpack.c.b16 %v1862, %v1856
    %v1935 = vpack.c.b16 %v1863, %v1857
    %v1936 = vpack.c.b16 %v1864, %v1858
    %v1937 = vpack.c.b16 %v1865, %v1859
    %v1938 = vpack.c.b16 %v1866, %v1860
    %v1939 = vpack.c.b16 %v1867, %v1861
    %v1940 = vpack.c.b16 %v1874, %v1868
    %v1941 = vpack.c.b16 %v1875, %v1869
    %v1942 = vpack.c.b16 %v1876, %v1870
    %v1943 = vpack.c.b16 %v1877, %v1871
    %v1944 = vpack.c.b16 %v1878, %v1872
    %v1945 = vpack.c.b16 %v1879, %v1873
    %v1946 = vpack.c.b16 %v1886, %v1880
    %v1947 = vpack.c.b16 %v1887, %v1881
    %v1948 = vpack.c.b16 %v1888, %v1882
    %v1949 = vpack.c.b16 %v1889, %v1883
    %v1950 = vpack.c.b16 %v1890, %v1884
    %v1951 = vpack.c.b16 %v1891, %v1885
    %v1952 = vpack.c.b16 %v1898, %v1892
    %v1953 = vpack.c.b16 %v1899, %v1893
    %v1954 = vpack.c.b16 %v1900, %v1894
    %v1955 = vpack.c.b16 %v1901, %v1895
    %v1956 = vpack.c.b16 %v1902, %v1896
    %v1957 = vpack.c.b16 %v1903, %v1897
    %v1958 = vpack.c.b16 %v1910, %v1904
    %v1959 = vpack.c.b16 %v1911, %v1905
    %v1960 = vpack.c.b16 %v1912, %v1906
    %v1961 = vpack.c.b16 %v1913, %v1907
    %v1962 = vpack.c.b16 %v1914, %v1908
    %v1963 = vpack.c.b16 %v1915, %v1909
    %2012 = vmatprep.subr.bf16.mxu0 %v1959
    %2013 = vmatpush1.bf16.msra.mxu0 %v1958
    %2014 = vmatprep.subr.bf16.mxu0 %v1953
    %2015 = vmatpush1.bf16.msra.mxu0 %v1952
    %2016 = vmatprep.subr.bf16.mxu0 %v1947
    %2017 = vmatpush1.bf16.msra.mxu0 %v1946
    %2018 = vmatprep.subr.bf16.mxu0 %v1941
    %2019 = vmatpush1.bf16.msra.mxu0 %v1940
    %2020 = vmatprep.subr.bf16.mxu0 %v1935
    %2021 = vmatpush1.bf16.msra.mxu0 %v1934
    %2022 = vmatprep.subr.bf16.mxu0 %v1929
    %2023 = vmatpush1.bf16.msra.mxu0 %v1928
    %2024 = vmatprep.subr.bf16.mxu0 %v1923
    %2025 = vmatpush1.bf16.msra.mxu0 %v1922
    %2026 = vmatprep.subr.bf16.mxu0 %v1917
    %2027 = vmatpush1.bf16.msra.mxu0 %v1916
    %2028 = vmatprep.subr.bf16.mxu0 0
    %2029 = vmatpush2.bf16.msra.mxu0 0
    %2030 = vmatprep.subr.bf16.mxu0 0
    %2031 = vmatpush2.bf16.msra.mxu0 0
    %2032 = vmatprep.subr.bf16.mxu0 0
    %2033 = vmatpush2.bf16.msra.mxu0 0
    %2034 = vmatprep.subr.bf16.mxu0 0
    %2035 = vmatpush2.bf16.msra.mxu0 0
    %2036 = vmatprep.subr.bf16.mxu0 0
    %2037 = vmatpush2.bf16.msra.mxu0 0
    %2038 = vmatprep.subr.bf16.mxu0 0
    %2039 = vmatpush2.bf16.msra.mxu0 0
    %2040 = vmatprep.subr.bf16.mxu0 0
    %2041 = vmatpush2.bf16.msra.mxu0 0
    %2042 = vmatprep.subr.bf16.mxu0 0
    %2043 = vmatpush2.bf16.msra.mxu0 0
    %2044 = vmatprep.mubr.bf16.mxu0 0
    %2045 = vmatmul.mubr.bf16.gmra.mxu0 %v1691
    %v2046 = vpop.f32.mrf.mxu0
    %v2047 = vadd.f32 %v1745, %v2046
    %v2048 = vpop.f32.mrf.mxu0
    %v2049 = vadd.f32 %v1749, %v2048
    %v2050 = vpop.f32.mrf.mxu0
    %v2051 = vpop.f32.mrf.mxu0
    %2052 = vdwg.mxu0
    %2053 = vmatprep.subr.bf16.mxu0 %v1961
    %2054 = vmatpush1.bf16.msra.mxu0 %v1960
    %2055 = vmatprep.subr.bf16.mxu0 %v1955
    %2056 = vmatpush1.bf16.msra.mxu0 %v1954
    %2057 = vmatprep.subr.bf16.mxu0 %v1949
    %2058 = vmatpush1.bf16.msra.mxu0 %v1948
    %2059 = vmatprep.subr.bf16.mxu0 %v1943
    %2060 = vmatpush1.bf16.msra.mxu0 %v1942
    %2061 = vmatprep.subr.bf16.mxu0 %v1937
    %2062 = vmatpush1.bf16.msra.mxu0 %v1936
    %2063 = vmatprep.subr.bf16.mxu0 %v1931
    %2064 = vmatpush1.bf16.msra.mxu0 %v1930
    %2065 = vmatprep.subr.bf16.mxu0 %v1925
    %2066 = vmatpush1.bf16.msra.mxu0 %v1924
    %2067 = vmatprep.subr.bf16.mxu0 %v1919
    %2068 = vmatpush1.bf16.msra.mxu0 %v1918
    %2069 = vmatprep.subr.bf16.mxu0 0
    %2070 = vmatpush2.bf16.msra.mxu0 0
    %2071 = vmatprep.subr.bf16.mxu0 0
    %2072 = vmatpush2.bf16.msra.mxu0 0
    %2073 = vmatprep.subr.bf16.mxu0 0
    %2074 = vmatpush2.bf16.msra.mxu0 0
    %2075 = vmatprep.subr.bf16.mxu0 0
    %2076 = vmatpush2.bf16.msra.mxu0 0
    %2077 = vmatprep.subr.bf16.mxu0 0
    %2078 = vmatpush2.bf16.msra.mxu0 0
    %2079 = vmatprep.subr.bf16.mxu0 0
    %2080 = vmatpush2.bf16.msra.mxu0 0
    %2081 = vmatprep.subr.bf16.mxu0 0
    %2082 = vmatpush2.bf16.msra.mxu0 0
    %2083 = vmatprep.subr.bf16.mxu0 0
    %2084 = vmatpush2.bf16.msra.mxu0 0
    %2085 = vmatprep.mubr.bf16.mxu0 0
    %2086 = vmatmul.mubr.bf16.gmra.mxu0 %v1691
    %v2087 = vpop.f32.mrf.mxu0
    %v2088 = vadd.f32 %v1753, %v2087
    %v2089 = vpop.f32.mrf.mxu0
    %v2090 = vadd.f32 %v1757, %v2089
    %v2091 = vpop.f32.mrf.mxu0
    %v2092 = vpop.f32.mrf.mxu0
    %2093 = vdwg.mxu0
    %2094 = vmatprep.subr.bf16.mxu0 %v1963
    %2095 = vmatpush1.bf16.msra.mxu0 %v1962
    %2096 = vmatprep.subr.bf16.mxu0 %v1957
    %2097 = vmatpush1.bf16.msra.mxu0 %v1956
    %2098 = vmatprep.subr.bf16.mxu0 %v1951
    %2099 = vmatpush1.bf16.msra.mxu0 %v1950
    %2100 = vmatprep.subr.bf16.mxu0 %v1945
    %2101 = vmatpush1.bf16.msra.mxu0 %v1944
    %2102 = vmatprep.subr.bf16.mxu0 %v1939
    %2103 = vmatpush1.bf16.msra.mxu0 %v1938
    %2104 = vmatprep.subr.bf16.mxu0 %v1933
    %2105 = vmatpush1.bf16.msra.mxu0 %v1932
    %2106 = vmatprep.subr.bf16.mxu0 %v1927
    %2107 = vmatpush1.bf16.msra.mxu0 %v1926
    %2108 = vmatprep.subr.bf16.mxu0 %v1921
    %2109 = vmatpush1.bf16.msra.mxu0 %v1920
    %2110 = vmatprep.subr.bf16.mxu0 0
    %2111 = vmatpush2.bf16.msra.mxu0 0
    %2112 = vmatprep.subr.bf16.mxu0 0
    %2113 = vmatpush2.bf16.msra.mxu0 0
    %2114 = vmatprep.subr.bf16.mxu0 0
    %2115 = vmatpush2.bf16.msra.mxu0 0
    %2116 = vmatprep.subr.bf16.mxu0 0
    %2117 = vmatpush2.bf16.msra.mxu0 0
    %2118 = vmatprep.subr.bf16.mxu0 0
    %2119 = vmatpush2.bf16.msra.mxu0 0
    %2120 = vmatprep.subr.bf16.mxu0 0
    %2121 = vmatpush2.bf16.msra.mxu0 0
    %2122 = vmatprep.subr.bf16.mxu0 0
    %2123 = vmatpush2.bf16.msra.mxu0 0
    %2124 = vmatprep.subr.bf16.mxu0 0
    %2125 = vmatpush2.bf16.msra.mxu0 0
    %2126 = vmatprep.mubr.bf16.mxu0 0
    %2127 = vmatmul.mubr.bf16.gmra.mxu0 %v1691
    %v2128 = vpop.f32.mrf.mxu0
    %v2129 = vadd.f32 %v1761, %v2128
    %v2130 = vpop.f32.mrf.mxu0
    %v2131 = vadd.f32 %v1765, %v2130
    %v2132 = vpop.f32.mrf.mxu0
    %v2133 = vpop.f32.mrf.mxu0
    %2134 = vdwg.mxu0
    %v2135 = vpack.c.bf16 %v2047, %v2047
    %v2136 = vpack.c.bf16 %v2088, %v2088
    %v2137 = vpack.c.bf16 %v2129, %v2129
    %2138 = vmatprep.subr.bf16.mxu0 0
    %2139 = vmatpush1.bf16.xpose.msra.mxu0 0
    %2140 = vmatprep.subr.bf16.mxu0 0
    %2141 = vmatpush1.bf16.xpose.msra.mxu0 0
    %2142 = vmatprep.subr.bf16.mxu0 0
    %2143 = vmatpush1.bf16.xpose.msra.mxu0 0
    %2144 = vmatprep.subr.bf16.mxu0 0
    %2145 = vmatpush1.bf16.xpose.msra.mxu0 0
    %2146 = vmatprep.subr.bf16.mxu0 0
    %2147 = vmatpush1.bf16.xpose.msra.mxu0 0
    %2148 = vmatprep.subr.bf16.mxu0 0
    %2149 = vmatpush1.bf16.xpose.msra.mxu0 0
    %2150 = vmatprep.subr.bf16.mxu0 0
    %2151 = vmatpush1.bf16.xpose.msra.mxu0 0
    %2152 = vmatprep.subr.bf16.mxu0 0
    %2153 = vmatpush1.bf16.xpose.msra.mxu0 %v2136
    %2154 = vmatprep.subr.bf16.mxu0 0
    %2155 = vmatpush2.bf16.xpose.msra.mxu0 0
    %2156 = vmatprep.subr.bf16.mxu0 0
    %2157 = vmatpush2.bf16.xpose.msra.mxu0 0
    %2158 = vmatprep.subr.bf16.mxu0 0
    %2159 = vmatpush2.bf16.xpose.msra.mxu0 0
    %2160 = vmatprep.subr.bf16.mxu0 0
    %2161 = vmatpush2.bf16.xpose.msra.mxu0 0
    %2162 = vmatprep.subr.bf16.mxu0 0
    %2163 = vmatpush2.bf16.xpose.msra.mxu0 0
    %2164 = vmatprep.subr.bf16.mxu0 0
    %2165 = vmatpush2.bf16.xpose.msra.mxu0 0
    %2166 = vmatprep.subr.bf16.mxu0 0
    %2167 = vmatpush2.bf16.xpose.msra.mxu0 0
    %2168 = vmatprep.subr.bf16.mxu0 0
    %2169 = vmatpush2.bf16.xpose.msra.mxu0 0
    %2170 = vmatprep.mubr.bf16.mxu0 0
    %2171 = vmatmul.mubr.bf16.gmra.mxu0 %v2135
    %v2172 = vpop.f32.mrf.mxu0
    %v2173 = vadd.f32 0.0, %v2172
    %v2174 = vpop.f32.mrf.mxu0
    %v2175 = vpop.f32.mrf.mxu0
    %v2176 = vpop.f32.mrf.mxu0
    %2177 = vdwg.mxu0
    %v2178 = vmul.f32 %v2173, 0.088388346
    %v2179 = vsel %vm127, %v2178, -1e+30
    %v2180 = vsel %vm646, %v2179, -inf
    %2181 = vmax.xlane.f32.xlu0 %v2180
    %v2182 = vpop.xlane.xlu0 %2181
    %v2183 = vsub.f32 %v2179, %v2182
    %v2184 = vmul.f32 %v2183, 1.442695
    %v2185 = vpow.pop %v2184
    %v2186 = vsel %vm646, %v2185, 0.0
    %2187 = vadd.xlane.f32.xlu0 %v2186
    %v2188 = vpop.xlane.xlu0 %2187
    %v2189 = vrcp.pop %v2188
    %v2190 = vmul.f32 %v2185, %v2189
    %v2191 = vpack.c.bf16 %v2190, %v2190
    %v2193 = vsel %vm659, %v2191, 0
    %v2196 = vsel %vm663, %v2137, 0
    %2198 = vmatprep.subr.bf16.mxu0 0
    %2199 = vmatpush1.bf16.msra.mxu0 0
    %2200 = vmatprep.subr.bf16.mxu0 0
    %2201 = vmatpush1.bf16.msra.mxu0 0
    %2202 = vmatprep.subr.bf16.mxu0 0
    %2203 = vmatpush1.bf16.msra.mxu0 0
    %2204 = vmatprep.subr.bf16.mxu0 0
    %2205 = vmatpush1.bf16.msra.mxu0 0
    %2206 = vmatprep.subr.bf16.mxu0 0
    %2207 = vmatpush1.bf16.msra.mxu0 0
    %2208 = vmatprep.subr.bf16.mxu0 0
    %2209 = vmatpush1.bf16.msra.mxu0 0
    %2210 = vmatprep.subr.bf16.mxu0 0
    %2211 = vmatpush1.bf16.msra.mxu0 0
    %2212 = vmatprep.subr.bf16.mxu0 0
    %2213 = vmatpush1.bf16.msra.mxu0 %v2196
    %2214 = vmatprep.subr.bf16.mxu0 0
    %2215 = vmatpush2.bf16.msra.mxu0 0
    %2216 = vmatprep.subr.bf16.mxu0 0
    %2217 = vmatpush2.bf16.msra.mxu0 0
    %2218 = vmatprep.subr.bf16.mxu0 0
    %2219 = vmatpush2.bf16.msra.mxu0 0
    %2220 = vmatprep.subr.bf16.mxu0 0
    %2221 = vmatpush2.bf16.msra.mxu0 0
    %2222 = vmatprep.subr.bf16.mxu0 0
    %2223 = vmatpush2.bf16.msra.mxu0 0
    %2224 = vmatprep.subr.bf16.mxu0 0
    %2225 = vmatpush2.bf16.msra.mxu0 0
    %2226 = vmatprep.subr.bf16.mxu0 0
    %2227 = vmatpush2.bf16.msra.mxu0 0
    %2228 = vmatprep.subr.bf16.mxu0 0
    %2229 = vmatpush2.bf16.msra.mxu0 0
    %2230 = vmatprep.mubr.bf16.mxu0 0
    %2231 = vmatmul.mubr.bf16.gmra.mxu0 %v2193
    %v2232 = vpop.f32.mrf.mxu0
    %v2233 = vadd.f32 0.0, %v2232
    %v2234 = vpop.f32.mrf.mxu0
    %v2235 = vpop.f32.mrf.mxu0
    %v2236 = vpop.f32.mrf.mxu0
    %2237 = vdwg.mxu0
    %v2238 = vpack.c.bf16 %v2049, %v2049
    %v2239 = vpack.c.bf16 %v2090, %v2090
    %v2240 = vpack.c.bf16 %v2131, %v2131
    %2241 = vmatprep.subr.bf16.mxu0 0
    %2242 = vmatpush1.bf16.xpose.msra.mxu0 0
    %2243 = vmatprep.subr.bf16.mxu0 0
    %2244 = vmatpush1.bf16.xpose.msra.mxu0 0
    %2245 = vmatprep.subr.bf16.mxu0 0
    %2246 = vmatpush1.bf16.xpose.msra.mxu0 0
    %2247 = vmatprep.subr.bf16.mxu0 0
    %2248 = vmatpush1.bf16.xpose.msra.mxu0 0
    %2249 = vmatprep.subr.bf16.mxu0 0
    %2250 = vmatpush1.bf16.xpose.msra.mxu0 0
    %2251 = vmatprep.subr.bf16.mxu0 0
    %2252 = vmatpush1.bf16.xpose.msra.mxu0 0
    %2253 = vmatprep.subr.bf16.mxu0 0
    %2254 = vmatpush1.bf16.xpose.msra.mxu0 0
    %2255 = vmatprep.subr.bf16.mxu0 0
    %2256 = vmatpush1.bf16.xpose.msra.mxu0 %v2239
    %2257 = vmatprep.subr.bf16.mxu0 0
    %2258 = vmatpush2.bf16.xpose.msra.mxu0 0
    %2259 = vmatprep.subr.bf16.mxu0 0
    %2260 = vmatpush2.bf16.xpose.msra.mxu0 0
    %2261 = vmatprep.subr.bf16.mxu0 0
    %2262 = vmatpush2.bf16.xpose.msra.mxu0 0
    %2263 = vmatprep.subr.bf16.mxu0 0
    %2264 = vmatpush2.bf16.xpose.msra.mxu0 0
    %2265 = vmatprep.subr.bf16.mxu0 0
    %2266 = vmatpush2.bf16.xpose.msra.mxu0 0
    %2267 = vmatprep.subr.bf16.mxu0 0
    %2268 = vmatpush2.bf16.xpose.msra.mxu0 0
    %2269 = vmatprep.subr.bf16.mxu0 0
    %2270 = vmatpush2.bf16.xpose.msra.mxu0 0
    %2271 = vmatprep.subr.bf16.mxu0 0
    %2272 = vmatpush2.bf16.xpose.msra.mxu0 0
    %2273 = vmatprep.mubr.bf16.mxu0 0
    %2274 = vmatmul.mubr.bf16.gmra.mxu0 %v2238
    %v2275 = vpop.f32.mrf.mxu0
    %v2276 = vadd.f32 0.0, %v2275
    %v2277 = vpop.f32.mrf.mxu0
    %v2278 = vpop.f32.mrf.mxu0
    %v2279 = vpop.f32.mrf.mxu0
    %2280 = vdwg.mxu0
    %v2281 = vmul.f32 %v2276, 0.088388346
    %v2282 = vsel %vm127, %v2281, -1e+30
    %v2283 = vsel %vm646, %v2282, -inf
    %2284 = vmax.xlane.f32.xlu0 %v2283
    %v2285 = vpop.xlane.xlu0 %2284
    %v2286 = vsub.f32 %v2282, %v2285
    %v2287 = vmul.f32 %v2286, 1.442695
    %v2288 = vpow.pop %v2287
    %v2289 = vsel %vm646, %v2288, 0.0
    %2290 = vadd.xlane.f32.xlu0 %v2289
    %v2291 = vpop.xlane.xlu0 %2290
    %v2292 = vrcp.pop %v2291
    %v2293 = vmul.f32 %v2288, %v2292
    %v2294 = vpack.c.bf16 %v2293, %v2293
    %v2296 = vsel %vm659, %v2294, 0
    %v2299 = vsel %vm663, %v2240, 0
    %2301 = vmatprep.subr.bf16.mxu0 0
    %2302 = vmatpush1.bf16.msra.mxu0 0
    %2303 = vmatprep.subr.bf16.mxu0 0
    %2304 = vmatpush1.bf16.msra.mxu0 0
    %2305 = vmatprep.subr.bf16.mxu0 0
    %2306 = vmatpush1.bf16.msra.mxu0 0
    %2307 = vmatprep.subr.bf16.mxu0 0
    %2308 = vmatpush1.bf16.msra.mxu0 0
    %2309 = vmatprep.subr.bf16.mxu0 0
    %2310 = vmatpush1.bf16.msra.mxu0 0
    %2311 = vmatprep.subr.bf16.mxu0 0
    %2312 = vmatpush1.bf16.msra.mxu0 0
    %2313 = vmatprep.subr.bf16.mxu0 0
    %2314 = vmatpush1.bf16.msra.mxu0 0
    %2315 = vmatprep.subr.bf16.mxu0 0
    %2316 = vmatpush1.bf16.msra.mxu0 %v2299
    %2317 = vmatprep.subr.bf16.mxu0 0
    %2318 = vmatpush2.bf16.msra.mxu0 0
    %2319 = vmatprep.subr.bf16.mxu0 0
    %2320 = vmatpush2.bf16.msra.mxu0 0
    %2321 = vmatprep.subr.bf16.mxu0 0
    %2322 = vmatpush2.bf16.msra.mxu0 0
    %2323 = vmatprep.subr.bf16.mxu0 0
    %2324 = vmatpush2.bf16.msra.mxu0 0
    %2325 = vmatprep.subr.bf16.mxu0 0
    %2326 = vmatpush2.bf16.msra.mxu0 0
    %2327 = vmatprep.subr.bf16.mxu0 0
    %2328 = vmatpush2.bf16.msra.mxu0 0
    %2329 = vmatprep.subr.bf16.mxu0 0
    %2330 = vmatpush2.bf16.msra.mxu0 0
    %2331 = vmatprep.subr.bf16.mxu0 0
    %2332 = vmatpush2.bf16.msra.mxu0 0
    %2333 = vmatprep.mubr.bf16.mxu0 0
    %2334 = vmatmul.mubr.bf16.gmra.mxu0 %v2296
    %v2335 = vpop.f32.mrf.mxu0
    %v2336 = vadd.f32 0.0, %v2335
    %v2337 = vpop.f32.mrf.mxu0
    %v2338 = vpop.f32.mrf.mxu0
    %v2339 = vpop.f32.mrf.mxu0
    %2340 = vdwg.mxu0
    %v2341 = vpack.c.bf16 %v2233, %v2233
    %v2342 = vpack.c.bf16 %v2336, %v2336
    %s2343 = scalar_lea.vmem %s2, 128
    %v2344 = vld [vmem:[%s2343] sm:$0xf]
    %v2345 = vld [vmem:[%s2343 + $0x4] sm:$0xf]
    %v2346 = vld [vmem:[%s2343 + $0x8] sm:$0xf]
    %v2347 = vld [vmem:[%s2343 + $0xc] sm:$0xf]
    %v2348 = vld [vmem:[%s2343 + $0x10] sm:$0xf]
    %v2349 = vld [vmem:[%s2343 + $0x14] sm:$0xf]
    %v2350 = vld [vmem:[%s2343 + $0x18] sm:$0xf]
    %v2351 = vld [vmem:[%s2343 + $0x1c] sm:$0xf]
    %v2352 = vld [vmem:[%s2343 + $0x20] sm:$0xf]
    %v2353 = vld [vmem:[%s2343 + $0x24] sm:$0xf]
    %v2354 = vld [vmem:[%s2343 + $0x28] sm:$0xf]
    %v2355 = vld [vmem:[%s2343 + $0x2c] sm:$0xf]
    %v2356 = vld [vmem:[%s2343 + $0x30] sm:$0xf]
    %v2357 = vld [vmem:[%s2343 + $0x34] sm:$0xf]
    %v2358 = vld [vmem:[%s2343 + $0x38] sm:$0xf]
    %v2359 = vld [vmem:[%s2343 + $0x3c] sm:$0xf]
    %v2360 = vld [vmem:[%s2343 + $0x40] sm:$0xf]
    %v2361 = vld [vmem:[%s2343 + $0x44] sm:$0xf]
    %v2362 = vld [vmem:[%s2343 + $0x48] sm:$0xf]
    %v2363 = vld [vmem:[%s2343 + $0x4c] sm:$0xf]
    %v2364 = vld [vmem:[%s2343 + $0x50] sm:$0xf]
    %v2365 = vld [vmem:[%s2343 + $0x54] sm:$0xf]
    %v2366 = vld [vmem:[%s2343 + $0x58] sm:$0xf]
    %v2367 = vld [vmem:[%s2343 + $0x5c] sm:$0xf]
    %v2368 = vld [vmem:[%s2343 + $0x60] sm:$0xf]
    %v2369 = vld [vmem:[%s2343 + $0x64] sm:$0xf]
    %v2370 = vld [vmem:[%s2343 + $0x68] sm:$0xf]
    %v2371 = vld [vmem:[%s2343 + $0x6c] sm:$0xf]
    %v2372 = vld [vmem:[%s2343 + $0x70] sm:$0xf]
    %v2373 = vld [vmem:[%s2343 + $0x74] sm:$0xf]
    %v2374 = vld [vmem:[%s2343 + $0x78] sm:$0xf]
    %v2375 = vld [vmem:[%s2343 + $0x7c] sm:$0xf]
    %v2408 = vunpack.c.l.b16 %v2344
    %v2409 = vunpack.c.l.b16 %v2345
    %v2410 = vunpack.c.l.b16 %v2346
    %v2411 = vunpack.c.l.b16 %v2347
    %v2412 = vunpack.c.l.b16 %v2348
    %v2413 = vunpack.c.l.b16 %v2349
    %v2414 = vunpack.c.l.b16 %v2350
    %v2415 = vunpack.c.l.b16 %v2351
    %v2416 = vunpack.c.l.b16 %v2352
    %v2417 = vunpack.c.l.b16 %v2353
    %v2418 = vunpack.c.l.b16 %v2354
    %v2419 = vunpack.c.l.b16 %v2355
    %v2420 = vunpack.c.l.b16 %v2356
    %v2421 = vunpack.c.l.b16 %v2357
    %v2422 = vunpack.c.l.b16 %v2358
    %v2423 = vunpack.c.l.b16 %v2359
    %v2424 = vunpack.c.l.b16 %v2360
    %v2425 = vunpack.c.l.b16 %v2361
    %v2426 = vunpack.c.l.b16 %v2362
    %v2427 = vunpack.c.l.b16 %v2363
    %v2428 = vunpack.c.l.b16 %v2364
    %v2429 = vunpack.c.l.b16 %v2365
    %v2430 = vunpack.c.l.b16 %v2366
    %v2431 = vunpack.c.l.b16 %v2367
    %v2432 = vunpack.c.l.b16 %v2368
    %v2433 = vunpack.c.l.b16 %v2369
    %v2434 = vunpack.c.l.b16 %v2370
    %v2435 = vunpack.c.l.b16 %v2371
    %v2436 = vunpack.c.l.b16 %v2372
    %v2437 = vunpack.c.l.b16 %v2373
    %v2438 = vunpack.c.l.b16 %v2374
    %v2439 = vunpack.c.l.b16 %v2375
    %v2440 = vpack.c.b16 %v2409, %v2408
    %v2441 = vpack.c.b16 %v2411, %v2410
    %v2442 = vpack.c.b16 %v2413, %v2412
    %v2443 = vpack.c.b16 %v2415, %v2414
    %v2444 = vpack.c.b16 %v2417, %v2416
    %v2445 = vpack.c.b16 %v2419, %v2418
    %v2446 = vpack.c.b16 %v2421, %v2420
    %v2447 = vpack.c.b16 %v2423, %v2422
    %v2448 = vpack.c.b16 %v2425, %v2424
    %v2449 = vpack.c.b16 %v2427, %v2426
    %v2450 = vpack.c.b16 %v2429, %v2428
    %v2451 = vpack.c.b16 %v2431, %v2430
    %v2452 = vpack.c.b16 %v2433, %v2432
    %v2453 = vpack.c.b16 %v2435, %v2434
    %v2454 = vpack.c.b16 %v2437, %v2436
    %v2455 = vpack.c.b16 %v2439, %v2438
    %2472 = vmatprep.subr.bf16.mxu0 0
    %2473 = vmatpush1.bf16.msra.mxu0 %v2447
    %2474 = vmatprep.subr.bf16.mxu0 0
    %2475 = vmatpush1.bf16.msra.mxu0 %v2446
    %2476 = vmatprep.subr.bf16.mxu0 0
    %2477 = vmatpush1.bf16.msra.mxu0 %v2445
    %2478 = vmatprep.subr.bf16.mxu0 0
    %2479 = vmatpush1.bf16.msra.mxu0 %v2444
    %2480 = vmatprep.subr.bf16.mxu0 0
    %2481 = vmatpush1.bf16.msra.mxu0 %v2443
    %2482 = vmatprep.subr.bf16.mxu0 0
    %2483 = vmatpush1.bf16.msra.mxu0 %v2442
    %2484 = vmatprep.subr.bf16.mxu0 0
    %2485 = vmatpush1.bf16.msra.mxu0 %v2441
    %2486 = vmatprep.subr.bf16.mxu0 0
    %2487 = vmatpush1.bf16.msra.mxu0 %v2440
    %2488 = vmatprep.subr.bf16.mxu0 0
    %2489 = vmatpush2.bf16.msra.mxu0 %v2455
    %2490 = vmatprep.subr.bf16.mxu0 0
    %2491 = vmatpush2.bf16.msra.mxu0 %v2454
    %2492 = vmatprep.subr.bf16.mxu0 0
    %2493 = vmatpush2.bf16.msra.mxu0 %v2453
    %2494 = vmatprep.subr.bf16.mxu0 0
    %2495 = vmatpush2.bf16.msra.mxu0 %v2452
    %2496 = vmatprep.subr.bf16.mxu0 0
    %2497 = vmatpush2.bf16.msra.mxu0 %v2451
    %2498 = vmatprep.subr.bf16.mxu0 0
    %2499 = vmatpush2.bf16.msra.mxu0 %v2450
    %2500 = vmatprep.subr.bf16.mxu0 0
    %2501 = vmatpush2.bf16.msra.mxu0 %v2449
    %2502 = vmatprep.subr.bf16.mxu0 0
    %2503 = vmatpush2.bf16.msra.mxu0 %v2448
    %2504 = vmatprep.mubr.bf16.mxu0 %v2342
    %2505 = vmatmul.mubr.bf16.gmra.mxu0 %v2341
    %v2506 = vpop.f32.mrf.mxu0
    %v2507 = vadd.f32 %v1670, %v2506
    %v2508 = vpop.f32.mrf.mxu0
    %v2509 = vpop.f32.mrf.mxu0
    %v2510 = vpop.f32.mrf.mxu0
    %2511 = vdwg.mxu0
    %v2512 = vadd.f32 %v1690, %v2507
    %v2513 = vadd.f32 %v2512, %v1662
    %v2514 = vsel %vm141, %v2513, 0.0
    %2515 = vadd.xlane.f32.xlu0 %v2514
    %v2516 = vpop.xlane.xlu0 %2515
    %v2517 = vmul.f32 %v2516, %v145
    %v2518 = vsub.f32 %v2513, %v2517
    %v2519 = vmul.f32 %v2518, %v2518
    %v2520 = vsel %vm141, %v2519, 0.0
    %2521 = vadd.xlane.f32.xlu0 %v2520
    %v2522 = vpop.xlane.xlu0 %2521
    %v2523 = vmul.f32 %v2522, %v145
    %v2524 = vadd.f32 %v2523, 1e-05
    %v2525 = vrsqrt.pop %v2524
    %v2526 = vmul.f32 %v2518, %v2525
    %v2527 = vmul.f32 %v2526, %v1671
    %v2528 = vadd.f32 %v2527, %v1672
    %v2529 = vpack.c.bf16 %v2528, %v2528
    %s2530 = scalar_lea.vmem [#allocation5], 128
    %v2531 = vld [vmem:[%s2530] sm:$0xff]
    %v2532 = vld [vmem:[%s2530 + $0x8] sm:$0xff]
    %v2533 = vld [vmem:[%s2530 + $0x10] sm:$0xff]
    %v2534 = vld [vmem:[%s2530 + $0x18] sm:$0xff]
    %v2535 = vld [vmem:[%s2530 + $0x20] sm:$0xff]
    %v2536 = vld [vmem:[%s2530 + $0x28] sm:$0xff]
    %v2537 = vld [vmem:[%s2530 + $0x30] sm:$0xff]
    %v2538 = vld [vmem:[%s2530 + $0x38] sm:$0xff]
    %v2539 = vld [vmem:[%s2530 + $0x40] sm:$0xff]
    %v2540 = vld [vmem:[%s2530 + $0x48] sm:$0xff]
    %v2541 = vld [vmem:[%s2530 + $0x50] sm:$0xff]
    %v2542 = vld [vmem:[%s2530 + $0x58] sm:$0xff]
    %v2543 = vld [vmem:[%s2530 + $0x60] sm:$0xff]
    %v2544 = vld [vmem:[%s2530 + $0x68] sm:$0xff]
    %v2545 = vld [vmem:[%s2530 + $0x70] sm:$0xff]
    %v2546 = vld [vmem:[%s2530 + $0x78] sm:$0xff]
    %v2548 = vlaneseq
    %v2549 = vshrl.u32 %v2548, 7
    %v2550 = vsub.s32 0, %v2549
    %v2551 = vrot.slane %v1674, %v2550
    %v2552 = vlaneseq
    %v2553 = vshrl.u32 %v2552, 7
    %v2554 = vsub.s32 1, %v2553
    %v2555 = vrot.slane %v1674, %v2554
    %v2574 = vunpack.c.l.b16 %v2531
    %v2575 = vunpack.c.h.b16 %v2531
    %v2576 = vunpack.c.l.b16 %v2532
    %v2577 = vunpack.c.h.b16 %v2532
    %v2578 = vunpack.c.l.b16 %v2533
    %v2579 = vunpack.c.h.b16 %v2533
    %v2580 = vunpack.c.l.b16 %v2534
    %v2581 = vunpack.c.h.b16 %v2534
    %v2582 = vunpack.c.l.b16 %v2535
    %v2583 = vunpack.c.h.b16 %v2535
    %v2584 = vunpack.c.l.b16 %v2536
    %v2585 = vunpack.c.h.b16 %v2536
    %v2586 = vunpack.c.l.b16 %v2537
    %v2587 = vunpack.c.h.b16 %v2537
    %v2588 = vunpack.c.l.b16 %v2538
    %v2589 = vunpack.c.h.b16 %v2538
    %v2590 = vunpack.c.l.b16 %v2539
    %v2591 = vunpack.c.h.b16 %v2539
    %v2592 = vunpack.c.l.b16 %v2540
    %v2593 = vunpack.c.h.b16 %v2540
    %v2594 = vunpack.c.l.b16 %v2541
    %v2595 = vunpack.c.h.b16 %v2541
    %v2596 = vunpack.c.l.b16 %v2542
    %v2597 = vunpack.c.h.b16 %v2542
    %v2598 = vunpack.c.l.b16 %v2543
    %v2599 = vunpack.c.h.b16 %v2543
    %v2600 = vunpack.c.l.b16 %v2544
    %v2601 = vunpack.c.h.b16 %v2544
    %v2602 = vunpack.c.l.b16 %v2545
    %v2603 = vunpack.c.h.b16 %v2545
    %v2604 = vunpack.c.l.b16 %v2546
    %v2605 = vunpack.c.h.b16 %v2546
    %v2606 = vpack.c.b16 %v2576, %v2574
    %v2607 = vpack.c.b16 %v2577, %v2575
    %v2608 = vpack.c.b16 %v2580, %v2578
    %v2609 = vpack.c.b16 %v2581, %v2579
    %v2610 = vpack.c.b16 %v2584, %v2582
    %v2611 = vpack.c.b16 %v2585, %v2583
    %v2612 = vpack.c.b16 %v2588, %v2586
    %v2613 = vpack.c.b16 %v2589, %v2587
    %v2614 = vpack.c.b16 %v2592, %v2590
    %v2615 = vpack.c.b16 %v2593, %v2591
    %v2616 = vpack.c.b16 %v2596, %v2594
    %v2617 = vpack.c.b16 %v2597, %v2595
    %v2618 = vpack.c.b16 %v2600, %v2598
    %v2619 = vpack.c.b16 %v2601, %v2599
    %v2620 = vpack.c.b16 %v2604, %v2602
    %v2621 = vpack.c.b16 %v2605, %v2603
    %2638 = vmatprep.subr.bf16.mxu0 %v2621
    %2639 = vmatpush1.bf16.msra.mxu0 %v2620
    %2640 = vmatprep.subr.bf16.mxu0 %v2619
    %2641 = vmatpush1.bf16.msra.mxu0 %v2618
    %2642 = vmatprep.subr.bf16.mxu0 %v2617
    %2643 = vmatpush1.bf16.msra.mxu0 %v2616
    %2644 = vmatprep.subr.bf16.mxu0 %v2615
    %2645 = vmatpush1.bf16.msra.mxu0 %v2614
    %2646 = vmatprep.subr.bf16.mxu0 %v2613
    %2647 = vmatpush1.bf16.msra.mxu0 %v2612
    %2648 = vmatprep.subr.bf16.mxu0 %v2611
    %2649 = vmatpush1.bf16.msra.mxu0 %v2610
    %2650 = vmatprep.subr.bf16.mxu0 %v2609
    %2651 = vmatpush1.bf16.msra.mxu0 %v2608
    %2652 = vmatprep.subr.bf16.mxu0 %v2607
    %2653 = vmatpush1.bf16.msra.mxu0 %v2606
    %2654 = vmatprep.subr.bf16.mxu0 0
    %2655 = vmatpush2.bf16.msra.mxu0 0
    %2656 = vmatprep.subr.bf16.mxu0 0
    %2657 = vmatpush2.bf16.msra.mxu0 0
    %2658 = vmatprep.subr.bf16.mxu0 0
    %2659 = vmatpush2.bf16.msra.mxu0 0
    %2660 = vmatprep.subr.bf16.mxu0 0
    %2661 = vmatpush2.bf16.msra.mxu0 0
    %2662 = vmatprep.subr.bf16.mxu0 0
    %2663 = vmatpush2.bf16.msra.mxu0 0
    %2664 = vmatprep.subr.bf16.mxu0 0
    %2665 = vmatpush2.bf16.msra.mxu0 0
    %2666 = vmatprep.subr.bf16.mxu0 0
    %2667 = vmatpush2.bf16.msra.mxu0 0
    %2668 = vmatprep.subr.bf16.mxu0 0
    %2669 = vmatpush2.bf16.msra.mxu0 0
    %2670 = vmatprep.mubr.bf16.mxu0 0
    %2671 = vmatmul.mubr.bf16.gmra.mxu0 %v2529
    %v2672 = vpop.f32.mrf.mxu0
    %v2673 = vadd.f32 %v2551, %v2672
    %v2674 = vpop.f32.mrf.mxu0
    %v2675 = vadd.f32 %v2555, %v2674
    %v2676 = vpop.f32.mrf.mxu0
    %v2677 = vpop.f32.mrf.mxu0
    %2678 = vdwg.mxu0
    %v2679 = vmul.f32 %v2673, 0.5
    %v2680 = vmul.f32 %v2675, 0.5
    %v2681 = vmul.f32 %v2673, 0.044715
    %v2682 = vmul.f32 %v2675, 0.044715
    %v2683 = vmul.f32 %v2681, %v2673
    %v2684 = vmul.f32 %v2682, %v2675
    %v2685 = vmul.f32 %v2683, %v2673
    %v2686 = vmul.f32 %v2684, %v2675
    %v2687 = vadd.f32 %v2673, %v2685
    %v2688 = vadd.f32 %v2675, %v2686
    %v2689 = vmul.f32 %v2687, 0.7978846
    %v2690 = vmul.f32 %v2688, 0.7978846
    %v2691 = vtanh.pop %v2689
    %v2692 = vtanh.pop %v2690
    %v2693 = vadd.f32 %v2691, 1.0
    %v2694 = vadd.f32 %v2692, 1.0
    %v2695 = vmul.f32 %v2679, %v2693
    %v2696 = vmul.f32 %v2680, %v2694
    %v2697 = vpack.c.bf16 %v2695, %v2695
    %v2698 = vpack.c.bf16 %v2696, %v2696
    %s2699 = scalar_lea.vmem [#allocation7], 128
    %v2700 = vld [vmem:[%s2699] sm:$0xf]
    %v2701 = vld [vmem:[%s2699 + $0x4] sm:$0xf]
    %v2702 = vld [vmem:[%s2699 + $0x8] sm:$0xf]
    %v2703 = vld [vmem:[%s2699 + $0xc] sm:$0xf]
    %v2704 = vld [vmem:[%s2699 + $0x10] sm:$0xf]
    %v2705 = vld [vmem:[%s2699 + $0x14] sm:$0xf]
    %v2706 = vld [vmem:[%s2699 + $0x18] sm:$0xf]
    %v2707 = vld [vmem:[%s2699 + $0x1c] sm:$0xf]
    %v2708 = vld [vmem:[%s2699 + $0x20] sm:$0xf]
    %v2709 = vld [vmem:[%s2699 + $0x24] sm:$0xf]
    %v2710 = vld [vmem:[%s2699 + $0x28] sm:$0xf]
    %v2711 = vld [vmem:[%s2699 + $0x2c] sm:$0xf]
    %v2712 = vld [vmem:[%s2699 + $0x30] sm:$0xf]
    %v2713 = vld [vmem:[%s2699 + $0x34] sm:$0xf]
    %v2714 = vld [vmem:[%s2699 + $0x38] sm:$0xf]
    %v2715 = vld [vmem:[%s2699 + $0x3c] sm:$0xf]
    %v2716 = vld [vmem:[%s2699 + $0x40] sm:$0xf]
    %v2717 = vld [vmem:[%s2699 + $0x44] sm:$0xf]
    %v2718 = vld [vmem:[%s2699 + $0x48] sm:$0xf]
    %v2719 = vld [vmem:[%s2699 + $0x4c] sm:$0xf]
    %v2720 = vld [vmem:[%s2699 + $0x50] sm:$0xf]
    %v2721 = vld [vmem:[%s2699 + $0x54] sm:$0xf]
    %v2722 = vld [vmem:[%s2699 + $0x58] sm:$0xf]
    %v2723 = vld [vmem:[%s2699 + $0x5c] sm:$0xf]
    %v2724 = vld [vmem:[%s2699 + $0x60] sm:$0xf]
    %v2725 = vld [vmem:[%s2699 + $0x64] sm:$0xf]
    %v2726 = vld [vmem:[%s2699 + $0x68] sm:$0xf]
    %v2727 = vld [vmem:[%s2699 + $0x6c] sm:$0xf]
    %v2728 = vld [vmem:[%s2699 + $0x70] sm:$0xf]
    %v2729 = vld [vmem:[%s2699 + $0x74] sm:$0xf]
    %v2730 = vld [vmem:[%s2699 + $0x78] sm:$0xf]
    %v2731 = vld [vmem:[%s2699 + $0x7c] sm:$0xf]
    %v2764 = vunpack.c.l.b16 %v2700
    %v2765 = vunpack.c.l.b16 %v2701
    %v2766 = vunpack.c.l.b16 %v2702
    %v2767 = vunpack.c.l.b16 %v2703
    %v2768 = vunpack.c.l.b16 %v2704
    %v2769 = vunpack.c.l.b16 %v2705
    %v2770 = vunpack.c.l.b16 %v2706
    %v2771 = vunpack.c.l.b16 %v2707
    %v2772 = vunpack.c.l.b16 %v2708
    %v2773 = vunpack.c.l.b16 %v2709
    %v2774 = vunpack.c.l.b16 %v2710
    %v2775 = vunpack.c.l.b16 %v2711
    %v2776 = vunpack.c.l.b16 %v2712
    %v2777 = vunpack.c.l.b16 %v2713
    %v2778 = vunpack.c.l.b16 %v2714
    %v2779 = vunpack.c.l.b16 %v2715
    %v2780 = vunpack.c.l.b16 %v2716
    %v2781 = vunpack.c.l.b16 %v2717
    %v2782 = vunpack.c.l.b16 %v2718
    %v2783 = vunpack.c.l.b16 %v2719
    %v2784 = vunpack.c.l.b16 %v2720
    %v2785 = vunpack.c.l.b16 %v2721
    %v2786 = vunpack.c.l.b16 %v2722
    %v2787 = vunpack.c.l.b16 %v2723
    %v2788 = vunpack.c.l.b16 %v2724
    %v2789 = vunpack.c.l.b16 %v2725
    %v2790 = vunpack.c.l.b16 %v2726
    %v2791 = vunpack.c.l.b16 %v2727
    %v2792 = vunpack.c.l.b16 %v2728
    %v2793 = vunpack.c.l.b16 %v2729
    %v2794 = vunpack.c.l.b16 %v2730
    %v2795 = vunpack.c.l.b16 %v2731
    %v2796 = vpack.c.b16 %v2765, %v2764
    %v2797 = vpack.c.b16 %v2767, %v2766
    %v2798 = vpack.c.b16 %v2769, %v2768
    %v2799 = vpack.c.b16 %v2771, %v2770
    %v2800 = vpack.c.b16 %v2773, %v2772
    %v2801 = vpack.c.b16 %v2775, %v2774
    %v2802 = vpack.c.b16 %v2777, %v2776
    %v2803 = vpack.c.b16 %v2779, %v2778
    %v2804 = vpack.c.b16 %v2781, %v2780
    %v2805 = vpack.c.b16 %v2783, %v2782
    %v2806 = vpack.c.b16 %v2785, %v2784
    %v2807 = vpack.c.b16 %v2787, %v2786
    %v2808 = vpack.c.b16 %v2789, %v2788
    %v2809 = vpack.c.b16 %v2791, %v2790
    %v2810 = vpack.c.b16 %v2793, %v2792
    %v2811 = vpack.c.b16 %v2795, %v2794
    %2828 = vmatprep.subr.bf16.mxu0 0
    %2829 = vmatpush1.bf16.msra.mxu0 %v2803
    %2830 = vmatprep.subr.bf16.mxu0 0
    %2831 = vmatpush1.bf16.msra.mxu0 %v2802
    %2832 = vmatprep.subr.bf16.mxu0 0
    %2833 = vmatpush1.bf16.msra.mxu0 %v2801
    %2834 = vmatprep.subr.bf16.mxu0 0
    %2835 = vmatpush1.bf16.msra.mxu0 %v2800
    %2836 = vmatprep.subr.bf16.mxu0 0
    %2837 = vmatpush1.bf16.msra.mxu0 %v2799
    %2838 = vmatprep.subr.bf16.mxu0 0
    %2839 = vmatpush1.bf16.msra.mxu0 %v2798
    %2840 = vmatprep.subr.bf16.mxu0 0
    %2841 = vmatpush1.bf16.msra.mxu0 %v2797
    %2842 = vmatprep.subr.bf16.mxu0 0
    %2843 = vmatpush1.bf16.msra.mxu0 %v2796
    %2844 = vmatprep.subr.bf16.mxu0 0
    %2845 = vmatpush2.bf16.msra.mxu0 %v2811
    %2846 = vmatprep.subr.bf16.mxu0 0
    %2847 = vmatpush2.bf16.msra.mxu0 %v2810
    %2848 = vmatprep.subr.bf16.mxu0 0
    %2849 = vmatpush2.bf16.msra.mxu0 %v2809
    %2850 = vmatprep.subr.bf16.mxu0 0
    %2851 = vmatpush2.bf16.msra.mxu0 %v2808
    %2852 = vmatprep.subr.bf16.mxu0 0
    %2853 = vmatpush2.bf16.msra.mxu0 %v2807
    %2854 = vmatprep.subr.bf16.mxu0 0
    %2855 = vmatpush2.bf16.msra.mxu0 %v2806
    %2856 = vmatprep.subr.bf16.mxu0 0
    %2857 = vmatpush2.bf16.msra.mxu0 %v2805
    %2858 = vmatprep.subr.bf16.mxu0 0
    %2859 = vmatpush2.bf16.msra.mxu0 %v2804
    %2860 = vmatprep.mubr.bf16.mxu0 %v2698
    %2861 = vmatmul.mubr.bf16.gmra.mxu0 %v2697
    %v2862 = vpop.f32.mrf.mxu0
    %v2863 = vadd.f32 %v1675, %v2862
    %v2864 = vpop.f32.mrf.mxu0
    %v2865 = vpop.f32.mrf.mxu0
    %v2866 = vpop.f32.mrf.mxu0
    %2867 = vdwg.mxu0
    %v2868 = vadd.f32 %v2863, %v2513
    %s2869 = scalar_lea.vmem %s1663, 48
    %v2870 = vld [vmem:[%s2869] ss:$8 sm:$0x3]
    %v2871 = vld [vmem:[%s1663 + $0x31] ss:$0 sm:$0xff]
    %v2872 = vpack.c.bf16 %v2868, %v2868
    %s2873 = scalar_lea.vmem [#allocation8], 128
    %v2874 = vld [vmem:[%s2873] sm:$0xff]
    %v2875 = vld [vmem:[%s2873 + $0x8] sm:$0xff]
    %v2876 = vld [vmem:[%s2873 + $0x10] sm:$0xff]
    %v2877 = vld [vmem:[%s2873 + $0x18] sm:$0xff]
    %v2878 = vld [vmem:[%s2873 + $0x20] sm:$0xff]
    %v2879 = vld [vmem:[%s2873 + $0x28] sm:$0xff]
    %v2880 = vld [vmem:[%s2873 + $0x30] sm:$0xff]
    %v2881 = vld [vmem:[%s2873 + $0x38] sm:$0xff]
    %v2882 = vld [vmem:[%s2873 + $0x40] sm:$0xff]
    %v2883 = vld [vmem:[%s2873 + $0x48] sm:$0xff]
    %v2884 = vld [vmem:[%s2873 + $0x50] sm:$0xff]
    %v2885 = vld [vmem:[%s2873 + $0x58] sm:$0xff]
    %v2886 = vld [vmem:[%s2873 + $0x60] sm:$0xff]
    %v2887 = vld [vmem:[%s2873 + $0x68] sm:$0xff]
    %v2888 = vld [vmem:[%s2873 + $0x70] sm:$0xff]
    %v2889 = vld [vmem:[%s2873 + $0x78] sm:$0xff]
    %v2891 = vlaneseq
    %v2892 = vshrl.u32 %v2891, 7
    %v2893 = vsub.s32 0, %v2892
    %v2894 = vrot.slane %v2870, %v2893
    %v2895 = vlaneseq
    %v2896 = vshrl.u32 %v2895, 7
    %v2897 = vsub.s32 1, %v2896
    %v2898 = vrot.slane %v2870, %v2897
    %v2917 = vunpack.c.l.b16 %v2874
    %v2918 = vunpack.c.h.b16 %v2874
    %v2919 = vunpack.c.l.b16 %v2875
    %v2920 = vunpack.c.h.b16 %v2875
    %v2921 = vunpack.c.l.b16 %v2876
    %v2922 = vunpack.c.h.b16 %v2876
    %v2923 = vunpack.c.l.b16 %v2877
    %v2924 = vunpack.c.h.b16 %v2877
    %v2925 = vunpack.c.l.b16 %v2878
    %v2926 = vunpack.c.h.b16 %v2878
    %v2927 = vunpack.c.l.b16 %v2879
    %v2928 = vunpack.c.h.b16 %v2879
    %v2929 = vunpack.c.l.b16 %v2880
    %v2930 = vunpack.c.h.b16 %v2880
    %v2931 = vunpack.c.l.b16 %v2881
    %v2932 = vunpack.c.h.b16 %v2881
    %v2933 = vunpack.c.l.b16 %v2882
    %v2934 = vunpack.c.h.b16 %v2882
    %v2935 = vunpack.c.l.b16 %v2883
    %v2936 = vunpack.c.h.b16 %v2883
    %v2937 = vunpack.c.l.b16 %v2884
    %v2938 = vunpack.c.h.b16 %v2884
    %v2939 = vunpack.c.l.b16 %v2885
    %v2940 = vunpack.c.h.b16 %v2885
    %v2941 = vunpack.c.l.b16 %v2886
    %v2942 = vunpack.c.h.b16 %v2886
    %v2943 = vunpack.c.l.b16 %v2887
    %v2944 = vunpack.c.h.b16 %v2887
    %v2945 = vunpack.c.l.b16 %v2888
    %v2946 = vunpack.c.h.b16 %v2888
    %v2947 = vunpack.c.l.b16 %v2889
    %v2948 = vunpack.c.h.b16 %v2889
    %v2949 = vpack.c.b16 %v2919, %v2917
    %v2950 = vpack.c.b16 %v2920, %v2918
    %v2951 = vpack.c.b16 %v2923, %v2921
    %v2952 = vpack.c.b16 %v2924, %v2922
    %v2953 = vpack.c.b16 %v2927, %v2925
    %v2954 = vpack.c.b16 %v2928, %v2926
    %v2955 = vpack.c.b16 %v2931, %v2929
    %v2956 = vpack.c.b16 %v2932, %v2930
    %v2957 = vpack.c.b16 %v2935, %v2933
    %v2958 = vpack.c.b16 %v2936, %v2934
    %v2959 = vpack.c.b16 %v2939, %v2937
    %v2960 = vpack.c.b16 %v2940, %v2938
    %v2961 = vpack.c.b16 %v2943, %v2941
    %v2962 = vpack.c.b16 %v2944, %v2942
    %v2963 = vpack.c.b16 %v2947, %v2945
    %v2964 = vpack.c.b16 %v2948, %v2946
    %2981 = vmatprep.subr.bf16.mxu0 %v2964
    %2982 = vmatpush1.bf16.msra.mxu0 %v2963
    %2983 = vmatprep.subr.bf16.mxu0 %v2962
    %2984 = vmatpush1.bf16.msra.mxu0 %v2961
    %2985 = vmatprep.subr.bf16.mxu0 %v2960
    %2986 = vmatpush1.bf16.msra.mxu0 %v2959
    %2987 = vmatprep.subr.bf16.mxu0 %v2958
    %2988 = vmatpush1.bf16.msra.mxu0 %v2957
    %2989 = vmatprep.subr.bf16.mxu0 %v2956
    %2990 = vmatpush1.bf16.msra.mxu0 %v2955
    %2991 = vmatprep.subr.bf16.mxu0 %v2954
    %2992 = vmatpush1.bf16.msra.mxu0 %v2953
    %2993 = vmatprep.subr.bf16.mxu0 %v2952
    %2994 = vmatpush1.bf16.msra.mxu0 %v2951
    %2995 = vmatprep.subr.bf16.mxu0 %v2950
    %2996 = vmatpush1.bf16.msra.mxu0 %v2949
    %2997 = vmatprep.subr.bf16.mxu0 0
    %2998 = vmatpush2.bf16.msra.mxu0 0
    %2999 = vmatprep.subr.bf16.mxu0 0
    %3000 = vmatpush2.bf16.msra.mxu0 0
    %3001 = vmatprep.subr.bf16.mxu0 0
    %3002 = vmatpush2.bf16.msra.mxu0 0
    %3003 = vmatprep.subr.bf16.mxu0 0
    %3004 = vmatpush2.bf16.msra.mxu0 0
    %3005 = vmatprep.subr.bf16.mxu0 0
    %3006 = vmatpush2.bf16.msra.mxu0 0
    %3007 = vmatprep.subr.bf16.mxu0 0
    %3008 = vmatpush2.bf16.msra.mxu0 0
    %3009 = vmatprep.subr.bf16.mxu0 0
    %3010 = vmatpush2.bf16.msra.mxu0 0
    %3011 = vmatprep.subr.bf16.mxu0 0
    %3012 = vmatpush2.bf16.msra.mxu0 0
    %3013 = vmatprep.mubr.bf16.mxu0 0
    %3014 = vmatmul.mubr.bf16.gmra.mxu0 %v2872
    %v3015 = vpop.f32.mrf.mxu0
    %v3016 = vadd.f32 %v2894, %v3015
    %v3017 = vpop.f32.mrf.mxu0
    %v3018 = vadd.f32 %v2898, %v3017
    %v3019 = vpop.f32.mrf.mxu0
    %v3020 = vpop.f32.mrf.mxu0
    %3021 = vdwg.mxu0
    %v3022 = vpack.c.bf16 %v3016, %v3016
    %v3023 = vpack.c.bf16 %v3018, %v3018
    %s3024 = scalar_lea.vmem [#allocation10], 128
    %v3025 = vld [vmem:[%s3024] sm:$0xf]
    %v3026 = vld [vmem:[%s3024 + $0x4] sm:$0xf]
    %v3027 = vld [vmem:[%s3024 + $0x8] sm:$0xf]
    %v3028 = vld [vmem:[%s3024 + $0xc] sm:$0xf]
    %v3029 = vld [vmem:[%s3024 + $0x10] sm:$0xf]
    %v3030 = vld [vmem:[%s3024 + $0x14] sm:$0xf]
    %v3031 = vld [vmem:[%s3024 + $0x18] sm:$0xf]
    %v3032 = vld [vmem:[%s3024 + $0x1c] sm:$0xf]
    %v3033 = vld [vmem:[%s3024 + $0x20] sm:$0xf]
    %v3034 = vld [vmem:[%s3024 + $0x24] sm:$0xf]
    %v3035 = vld [vmem:[%s3024 + $0x28] sm:$0xf]
    %v3036 = vld [vmem:[%s3024 + $0x2c] sm:$0xf]
    %v3037 = vld [vmem:[%s3024 + $0x30] sm:$0xf]
    %v3038 = vld [vmem:[%s3024 + $0x34] sm:$0xf]
    %v3039 = vld [vmem:[%s3024 + $0x38] sm:$0xf]
    %v3040 = vld [vmem:[%s3024 + $0x3c] sm:$0xf]
    %v3041 = vld [vmem:[%s3024 + $0x40] sm:$0xf]
    %v3042 = vld [vmem:[%s3024 + $0x44] sm:$0xf]
    %v3043 = vld [vmem:[%s3024 + $0x48] sm:$0xf]
    %v3044 = vld [vmem:[%s3024 + $0x4c] sm:$0xf]
    %v3045 = vld [vmem:[%s3024 + $0x50] sm:$0xf]
    %v3046 = vld [vmem:[%s3024 + $0x54] sm:$0xf]
    %v3047 = vld [vmem:[%s3024 + $0x58] sm:$0xf]
    %v3048 = vld [vmem:[%s3024 + $0x5c] sm:$0xf]
    %v3049 = vld [vmem:[%s3024 + $0x60] sm:$0xf]
    %v3050 = vld [vmem:[%s3024 + $0x64] sm:$0xf]
    %v3051 = vld [vmem:[%s3024 + $0x68] sm:$0xf]
    %v3052 = vld [vmem:[%s3024 + $0x6c] sm:$0xf]
    %v3053 = vld [vmem:[%s3024 + $0x70] sm:$0xf]
    %v3054 = vld [vmem:[%s3024 + $0x74] sm:$0xf]
    %v3055 = vld [vmem:[%s3024 + $0x78] sm:$0xf]
    %v3056 = vld [vmem:[%s3024 + $0x7c] sm:$0xf]
    %v3089 = vunpack.c.l.b16 %v3025
    %v3090 = vunpack.c.l.b16 %v3026
    %v3091 = vunpack.c.l.b16 %v3027
    %v3092 = vunpack.c.l.b16 %v3028
    %v3093 = vunpack.c.l.b16 %v3029
    %v3094 = vunpack.c.l.b16 %v3030
    %v3095 = vunpack.c.l.b16 %v3031
    %v3096 = vunpack.c.l.b16 %v3032
    %v3097 = vunpack.c.l.b16 %v3033
    %v3098 = vunpack.c.l.b16 %v3034
    %v3099 = vunpack.c.l.b16 %v3035
    %v3100 = vunpack.c.l.b16 %v3036
    %v3101 = vunpack.c.l.b16 %v3037
    %v3102 = vunpack.c.l.b16 %v3038
    %v3103 = vunpack.c.l.b16 %v3039
    %v3104 = vunpack.c.l.b16 %v3040
    %v3105 = vunpack.c.l.b16 %v3041
    %v3106 = vunpack.c.l.b16 %v3042
    %v3107 = vunpack.c.l.b16 %v3043
    %v3108 = vunpack.c.l.b16 %v3044
    %v3109 = vunpack.c.l.b16 %v3045
    %v3110 = vunpack.c.l.b16 %v3046
    %v3111 = vunpack.c.l.b16 %v3047
    %v3112 = vunpack.c.l.b16 %v3048
    %v3113 = vunpack.c.l.b16 %v3049
    %v3114 = vunpack.c.l.b16 %v3050
    %v3115 = vunpack.c.l.b16 %v3051
    %v3116 = vunpack.c.l.b16 %v3052
    %v3117 = vunpack.c.l.b16 %v3053
    %v3118 = vunpack.c.l.b16 %v3054
    %v3119 = vunpack.c.l.b16 %v3055
    %v3120 = vunpack.c.l.b16 %v3056
    %v3121 = vpack.c.b16 %v3090, %v3089
    %v3122 = vpack.c.b16 %v3092, %v3091
    %v3123 = vpack.c.b16 %v3094, %v3093
    %v3124 = vpack.c.b16 %v3096, %v3095
    %v3125 = vpack.c.b16 %v3098, %v3097
    %v3126 = vpack.c.b16 %v3100, %v3099
    %v3127 = vpack.c.b16 %v3102, %v3101
    %v3128 = vpack.c.b16 %v3104, %v3103
    %v3129 = vpack.c.b16 %v3106, %v3105
    %v3130 = vpack.c.b16 %v3108, %v3107
    %v3131 = vpack.c.b16 %v3110, %v3109
    %v3132 = vpack.c.b16 %v3112, %v3111
    %v3133 = vpack.c.b16 %v3114, %v3113
    %v3134 = vpack.c.b16 %v3116, %v3115
    %v3135 = vpack.c.b16 %v3118, %v3117
    %v3136 = vpack.c.b16 %v3120, %v3119
    %3153 = vmatprep.subr.bf16.mxu0 0
    %3154 = vmatpush1.bf16.msra.mxu0 %v3128
    %3155 = vmatprep.subr.bf16.mxu0 0
    %3156 = vmatpush1.bf16.msra.mxu0 %v3127
    %3157 = vmatprep.subr.bf16.mxu0 0
    %3158 = vmatpush1.bf16.msra.mxu0 %v3126
    %3159 = vmatprep.subr.bf16.mxu0 0
    %3160 = vmatpush1.bf16.msra.mxu0 %v3125
    %3161 = vmatprep.subr.bf16.mxu0 0
    %3162 = vmatpush1.bf16.msra.mxu0 %v3124
    %3163 = vmatprep.subr.bf16.mxu0 0
    %3164 = vmatpush1.bf16.msra.mxu0 %v3123
    %3165 = vmatprep.subr.bf16.mxu0 0
    %3166 = vmatpush1.bf16.msra.mxu0 %v3122
    %3167 = vmatprep.subr.bf16.mxu0 0
    %3168 = vmatpush1.bf16.msra.mxu0 %v3121
    %3169 = vmatprep.subr.bf16.mxu0 0
    %3170 = vmatpush2.bf16.msra.mxu0 %v3136
    %3171 = vmatprep.subr.bf16.mxu0 0
    %3172 = vmatpush2.bf16.msra.mxu0 %v3135
    %3173 = vmatprep.subr.bf16.mxu0 0
    %3174 = vmatpush2.bf16.msra.mxu0 %v3134
    %3175 = vmatprep.subr.bf16.mxu0 0
    %3176 = vmatpush2.bf16.msra.mxu0 %v3133
    %3177 = vmatprep.subr.bf16.mxu0 0
    %3178 = vmatpush2.bf16.msra.mxu0 %v3132
    %3179 = vmatprep.subr.bf16.mxu0 0
    %3180 = vmatpush2.bf16.msra.mxu0 %v3131
    %3181 = vmatprep.subr.bf16.mxu0 0
    %3182 = vmatpush2.bf16.msra.mxu0 %v3130
    %3183 = vmatprep.subr.bf16.mxu0 0
    %3184 = vmatpush2.bf16.msra.mxu0 %v3129
    %3185 = vmatprep.mubr.bf16.mxu0 %v3023
    %3186 = vmatmul.mubr.bf16.gmra.mxu0 %v3022
    %v3187 = vpop.f32.mrf.mxu0
    %v3188 = vadd.f32 %v2871, %v3187
    %v3189 = vpop.f32.mrf.mxu0
    %v3190 = vpop.f32.mrf.mxu0
    %v3191 = vpop.f32.mrf.mxu0
    %3192 = vdwg.mxu0
    %v3193 = vadd.f32 %v2868, %v3188
    %v3194 = vadd.f32 %v3193, %v2868
    %v3195 = vsel %vm663, %v3194, %v2868
    %s3196 = scalar_lea.vmem [#allocation11], 4
    %3197 = vst [vmem:[%s3196] sm:$0xf] %v3195
    // Predicated region
    $region54: #{tpu_custom_call.1} parent=1 // pred_check
      _
    $region55: #{tpu_custom_call.1} parent=1 // pred_check_branch
      %3199 = sbr.rel (0) target = $region57
    $region56: #{tpu_custom_call.1} parent=1 // pred_region
      %s3201 = ssub.s32 128, 128
      %3202 = vsyncadd [#allocation4], %s3201
      %s3203 = sshll.u32 [#allocation11], 4
      %s3204 = int_to_ptr.vmem [resolvable:$true] %s3203
      %3209 = dma.vmem_to_hbm [thread:$0]  %s3204, 128, %s8, [#allocation4], 64, 64, 4
    $region57: #{tpu_custom_call.1} parent=1 // pred_fallthru
      _
    // Predicated region
    $region58: #{tpu_custom_call.1} parent=1 // pred_check
      _
    $region59: #{tpu_custom_call.1} parent=1 // pred_check_branch
      %3211 = sbr.rel (0) target = $region61
    $region60: #{tpu_custom_call.1} parent=1 // pred_region
      %3212 = dma.done [#allocation4], 128
    $region61: #{tpu_custom_call.1} parent=1 // pred_fallthru
      _
    %3213 = vsyncpa [#allocation3], 1
    %3214 = vsyncpa [#allocation6], 1
    %3215 = vsyncpa [#allocation9], 1
    %3216 = vsyncpa [#allocation4], 1

</llo_original>
